<compile_context>
chip_gen: v6e
topology: v6e:2x2x1
jax: 0.10.0
libtpu: 0.0.40
codegen_flags: <defaults>
</compile_context>

<pallas_src>
import jax
import jax.numpy as jnp
from jax import lax
from jax.experimental import pallas as pl
from jax.experimental.pallas import tpu as pltpu


# ------------------------------ fused kernel ----------------------------------
def _make_wave_kernel(NL, H, T):
    """Builds the fused wavefront kernel for NL stacked layers, hidden H, seq T."""
    NLH = NL * H

    def kernel(x_ref, wbig_ref, wih0_ref, bias_ref, bns_ref, bnh_ref,
               fcw_ref, fcb_ref, out_ref):
        B = x_ref.shape[0]

        # Hoisted loop-invariant loads / broadcasts.
        wbig = wbig_ref[...]                                    # (NLH, 4*NLH)
        wih0 = wih0_ref[...]                                    # (Din, 4*NLH)
        bias = jnp.broadcast_to(bias_ref[...], (B, 4 * NLH))    # (B, 4*NLH)
        lane = lax.broadcasted_iota(jnp.int32, (B, NLH), 1)     # lane-prefix mask src

        # Concatenated per-layer states: block l = layer l's latest h / c.
        hcat = jnp.zeros((B, NLH), jnp.float32)
        ccat = jnp.zeros((B, NLH), jnp.float32)

        # Wavefront: at wave w, layer l advances timestep (w - l).
        for w in range(T + NL - 1):
            # One MXU push does every layer's h@W_hh AND the next layer's h@W_ih.
            g = jnp.dot(hcat, wbig, preferred_element_type=jnp.float32) + bias
            if w < T:
                # Layer 0's input projection for timestep w (independent tiny matmul).
                g = g + jnp.dot(x_ref[:, w, :], wih0,
                                preferred_element_type=jnp.float32)

            # Gate-major layout: each slice is a full lane-aligned (B, NLH) block.
            i_g = jax.nn.sigmoid(g[:, 0 * NLH:1 * NLH])
            f_g = jax.nn.sigmoid(g[:, 1 * NLH:2 * NLH])
            o_g = jax.nn.sigmoid(g[:, 2 * NLH:3 * NLH])
            g_g = jnp.tanh(g[:, 3 * NLH:4 * NLH])

            c_new = f_g * ccat + i_g * g_g
            h_new = o_g * jnp.tanh(c_new)

            if w < NL - 1:
                # Ramp-up: layers l > w have not started — protect their zero init.
                m = lane < (w + 1) * H
                ccat = jnp.where(m, c_new, ccat)
                hcat = jnp.where(m, h_new, hcat)
            else:
                # Trailing "inactive" layer commits are never read again — no mask.
                ccat, hcat = c_new, h_new

        # Head on h_{NL-1}(T-1): BN(running stats) -> ReLU -> Dropout(eval=id) -> FC.
        # BN scale/shift and FC weight are zero-padded over the other layer blocks,
        # so no lane extraction of the last block is needed.
        xn = hcat * bns_ref[...] + bnh_ref[...]
        xr = jnp.maximum(xn, 0.0)
        out_ref[...] = (jnp.dot(xr, fcw_ref[...],
                                preferred_element_type=jnp.float32)
                        + fcb_ref[...]).astype(out_ref.dtype)

    return kernel


# ------------------------------ parameter setup -------------------------------
def init_lstm_stack(key, input_dim, hidden_dim, num_layers):
    layers = []
    k = 1.0 / (hidden_dim ** 0.5)
    in_d = input_dim
    for _ in range(num_layers):
        key, k1, k2, k3, k4 = jax.random.split(key, 5)
        w_ih = jax.random.uniform(k1, (4 * hidden_dim, in_d), jnp.float32, -k, k)
        w_hh = jax.random.uniform(k2, (4 * hidden_dim, hidden_dim), jnp.float32, -k, k)
        b_ih = jax.random.uniform(k3, (4 * hidden_dim,), jnp.float32, -k, k)
        b_hh = jax.random.uniform(k4, (4 * hidden_dim,), jnp.float32, -k, k)
        layers.append((w_ih, w_hh, b_ih, b_hh))
        in_d = hidden_dim
    return key, layers


def init_params(key, input_dim, hidden_dim, num_layers, output_dim):
    key, lstm1 = init_lstm_stack(key, input_dim, hidden_dim, num_layers)
    key, lstm2 = init_lstm_stack(key, hidden_dim, hidden_dim, num_layers)
    key, kw, kb = jax.random.split(key, 3)
    kf = 1.0 / (hidden_dim ** 0.5)
    fc_w = jax.random.uniform(kw, (output_dim, hidden_dim), jnp.float32, -kf, kf)
    fc_b = jax.random.uniform(kb, (output_dim,), jnp.float32, -kf, kf)
    return {
        "lstm1": lstm1,
        "lstm2": lstm2,
        "bn_gamma": jnp.ones((hidden_dim,), jnp.float32),
        "bn_beta": jnp.zeros((hidden_dim,), jnp.float32),
        "bn_mean": jnp.zeros((hidden_dim,), jnp.float32),
        "bn_var": jnp.ones((hidden_dim,), jnp.float32),
        "fc_w": fc_w,
        "fc_b": fc_b,
    }


# ------------------------- wrapper-side weight packing -------------------------
_PT2GLOBAL = (0, 1, 3, 2)  # PyTorch gate order (i,f,g,o) -> global order (i,f,o,g)


def _scatter_gate_cols(mat_t, layer_slot, NL):
    """(in_d, 4H) PyTorch-gate-ordered matrix -> (in_d, 4*NL*H) global layout.

    Global column index = gate * (NL*H) + layer_slot * H + h, so each gate block is
    contiguous and each layer occupies a fixed lane window within every gate block.
    """
    in_d, four_h = mat_t.shape
    H = four_h // 4
    out = jnp.zeros((in_d, 4, NL, H), jnp.float32)
    for p, gi in enumerate(_PT2GLOBAL):
        out = out.at[:, gi, layer_slot, :].set(mat_t[:, p * H:(p + 1) * H])
    return out.reshape(in_d, 4 * NL * H)


# --------------------------------- forward ------------------------------------
def complex_lstm_forward(x, params):
    """x: (B, T, input_dim), batch_first (PyTorch convention)."""
    layers = params["lstm1"] + params["lstm2"]          # NL stacked LSTM layers
    NL = len(layers)
    H = layers[0][1].shape[1]
    B, T, Din = x.shape
    NLH = NL * H

    # W_big (NLH, 4*NLH): row block l carries W_hh[l] (into layer l's gate columns)
    # and W_ih[l+1] (into layer l+1's gate columns) — the whole wavefront recurrence
    # becomes one [h_0|...|h_{NL-1}] @ W_big matmul per wave.
    wbig = jnp.zeros((NLH, 4 * NLH), jnp.float32)
    for l, (_, w_hh, _, _) in enumerate(layers):
        blk = _scatter_gate_cols(w_hh.T.astype(jnp.float32), l, NL)
        if l + 1 < NL:
            w_ih_next = layers[l + 1][0]
            blk = blk + _scatter_gate_cols(w_ih_next.T.astype(jnp.float32), l + 1, NL)
        wbig = wbig.at[l * H:(l + 1) * H, :].set(blk)

    # Layer 0's input projection weights, scattered into layer-0 column slots.
    wih0 = _scatter_gate_cols(layers[0][0].T.astype(jnp.float32), 0, NL)   # (Din, 4*NLH)

    # Folded (b_ih + b_hh) biases, one copy per layer in the global layout.
    bias = jnp.zeros((1, 4, NL, H), jnp.float32)
    for l, (_, _, b_ih, b_hh) in enumerate(layers):
        b = (b_ih + b_hh).astype(jnp.float32)
        for p, gi in enumerate(_PT2GLOBAL):
            bias = bias.at[0, gi, l, :].set(b[p * H:(p + 1) * H])
    bias = bias.reshape(1, 4 * NLH)

    # BN (running stats) folded to scale/shift, zero-padded to the full 4H lanes.
    inv = jax.lax.rsqrt(params["bn_var"] + 1e-5)
    scale = params["bn_gamma"] * inv
    shift = params["bn_beta"] - params["bn_mean"] * scale
    bns = jnp.zeros((1, NLH), jnp.float32).at[0, (NL - 1) * H:].set(scale)
    bnh = jnp.zeros((1, NLH), jnp.float32).at[0, (NL - 1) * H:].set(shift)

    # FC weight rows padded with zeros for the non-final layer blocks.
    O = params["fc_w"].shape[0]
    fcw = jnp.zeros((NLH, O), jnp.float32).at[(NL - 1) * H:, :].set(params["fc_w"].T)
    fcb = params["fc_b"][None, :].astype(jnp.float32)

    kernel = _make_wave_kernel(NL, H, T)
    vm = pl.BlockSpec(memory_space=pltpu.MemorySpace.VMEM)
    ins = (x.astype(jnp.float32), wbig, wih0, bias, bns, bnh, fcw, fcb)
    return pl.pallas_call(
        kernel,
        out_shape=jax.ShapeDtypeStruct((B, O), x.dtype),
        in_specs=[vm] * len(ins),
        out_specs=vm,
        compiler_params=pltpu.CompilerParams(
            # Well above this config's needs; re-size when H/T scale (v7x: 64 MiB cap).
            vmem_limit_bytes=32 * 1024 * 1024),
    )(*ins)


# ------------------------------ pure-JAX reference ----------------------------
def _ref_lstm_layer(x_tm, w_ih, w_hh, b_ih, b_hh):
    _, B, _ = x_tm.shape
    H = w_hh.shape[1]

    def step(carry, x_t):
        h, c = carry
        gates = x_t @ w_ih.T + b_ih + h @ w_hh.T + b_hh
        i, f, g, o = jnp.split(gates, 4, axis=1)
        c = jax.nn.sigmoid(f) * c + jax.nn.sigmoid(i) * jnp.tanh(g)
        h = jax.nn.sigmoid(o) * jnp.tanh(c)
        return (h, c), h

    init = (jnp.zeros((B, H), jnp.float32), jnp.zeros((B, H), jnp.float32))
    _, ys = jax.lax.scan(step, init, x_tm)
    return ys


def _ref_forward(x, params):
    x_tm = jnp.transpose(x, (1, 0, 2))
    for (w_ih, w_hh, b_ih, b_hh) in params["lstm1"] + params["lstm2"]:
        x_tm = _ref_lstm_layer(x_tm, w_ih, w_hh, b_ih, b_hh)
    last = x_tm[-1]
    xn = ((last - params["bn_mean"]) / jnp.sqrt(params["bn_var"] + 1e-5)
          * params["bn_gamma"] + params["bn_beta"])
    return jnp.maximum(xn, 0.0) @ params["fc_w"].T + params["fc_b"]


# ----------------------------------- main --------------------------------------
if __name__ == "__main__":
    B, T = 8, 8
    input_dim, hidden_dim, num_layers, output_dim = 16, 32, 2, 8

    key = jax.random.PRNGKey(0)
    key, kx = jax.random.split(key)
    x = jax.random.normal(kx, (B, T, input_dim), jnp.float32)
    params = init_params(key, input_dim, hidden_dim, num_layers, output_dim)

    out = complex_lstm_forward(x, params)
    out = jax.block_until_ready(out)

    ref = _ref_forward(x, params)
    assert out.shape == (B, output_dim)
    assert jnp.allclose(out, ref, rtol=1e-4, atol=1e-4), "mismatch vs reference"

    print("KERNEL_OK")
</pallas_src>

<mosaic_0001>
module attributes {stable_mosaic.version = 11 : i64} {
  func.func @kernel(%arg0: memref<8x8x16xf32, #tpu.memory_space<vmem>>, %arg1: memref<128x512xf32, #tpu.memory_space<vmem>>, %arg2: memref<16x512xf32, #tpu.memory_space<vmem>>, %arg3: memref<1x512xf32, #tpu.memory_space<vmem>>, %arg4: memref<1x128xf32, #tpu.memory_space<vmem>>, %arg5: memref<1x128xf32, #tpu.memory_space<vmem>>, %arg6: memref<128x8xf32, #tpu.memory_space<vmem>>, %arg7: memref<1x8xf32, #tpu.memory_space<vmem>>, %arg8: memref<8x8xf32, #tpu.memory_space<vmem>>) attributes {dimension_semantics = [], scalar_prefetch = 0 : i64, scratch_operands = 0 : i64, tpu.core_type = #tpu.core_type<tc>} {
    %c0 = arith.constant 0 : index
    %c0_0 = arith.constant 0 : index
    %0 = vector.load %arg1[%c0, %c0_0] : memref<128x512xf32, #tpu.memory_space<vmem>>, vector<128x512xf32>
    %c0_1 = arith.constant 0 : index
    %c0_2 = arith.constant 0 : index
    %1 = vector.load %arg2[%c0_1, %c0_2] : memref<16x512xf32, #tpu.memory_space<vmem>>, vector<16x512xf32>
    %c0_3 = arith.constant 0 : index
    %c0_4 = arith.constant 0 : index
    %2 = vector.load %arg3[%c0_3, %c0_4] : memref<1x512xf32, #tpu.memory_space<vmem>>, vector<1x512xf32>
    %3 = vector.shape_cast %2 : vector<1x512xf32> to vector<1x512xf32>
    %4 = vector.broadcast %3 : vector<1x512xf32> to vector<8x512xf32>
    %5 = tpu.iota {dimensions = array<i32: 1>} : vector<8x128xi32>
    %cst = arith.constant 0.000000e+00 : f32
    %6 = vector.broadcast %cst : f32 to vector<8x128xf32>
    %cst_5 = arith.constant 0.000000e+00 : f32
    %7 = vector.broadcast %cst_5 : f32 to vector<8x128xf32>
    %cst_6 = arith.constant dense<0.000000e+00> : vector<8x512xf32>
    %8 = tpu.matmul %6, %0, %cst_6 {dimension_numbers = #tpu.dot_dimension_numbers<[1], [0], [0], [1], [0, 0, 1, 1], [], []>} : vector<8x128xf32>, vector<128x512xf32>, vector<8x512xf32> -> vector<8x512xf32>
    %9 = arith.addf %8, %4 : vector<8x512xf32>
    %c0_7 = arith.constant 0 : index
    %c0_8 = arith.constant 0 : index
    %c0_9 = arith.constant 0 : index
    %10 = vector.load %arg0[%c0_7, %c0_8, %c0_9] : memref<8x8x16xf32, #tpu.memory_space<vmem>>, vector<8x1x16xf32>
    %11 = vector.shape_cast %10 : vector<8x1x16xf32> to vector<8x16xf32>
    %cst_10 = arith.constant dense<0.000000e+00> : vector<8x512xf32>
    %12 = tpu.matmul %11, %1, %cst_10 {dimension_numbers = #tpu.dot_dimension_numbers<[1], [0], [0], [1], [0, 0, 1, 1], [], []>} : vector<8x16xf32>, vector<16x512xf32>, vector<8x512xf32> -> vector<8x512xf32>
    %13 = arith.addf %9, %12 : vector<8x512xf32>
    %14 = vector.extract_strided_slice %13 {offsets = [0, 0], sizes = [8, 128], strides = [1, 1]} : vector<8x512xf32> to vector<8x128xf32>
    %15 = arith.negf %14 : vector<8x128xf32>
    %16 = math.exp %15 : vector<8x128xf32>
    %cst_11 = arith.constant 1.000000e+00 : f32
    %17 = vector.broadcast %cst_11 : f32 to vector<8x128xf32>
    %18 = arith.addf %17, %16 : vector<8x128xf32>
    %19 = arith.divf %17, %18 : vector<8x128xf32>
    %20 = vector.extract_strided_slice %13 {offsets = [0, 128], sizes = [8, 128], strides = [1, 1]} : vector<8x512xf32> to vector<8x128xf32>
    %21 = arith.negf %20 : vector<8x128xf32>
    %22 = math.exp %21 : vector<8x128xf32>
    %cst_12 = arith.constant 1.000000e+00 : f32
    %23 = vector.broadcast %cst_12 : f32 to vector<8x128xf32>
    %24 = arith.addf %23, %22 : vector<8x128xf32>
    %25 = arith.divf %23, %24 : vector<8x128xf32>
    %26 = vector.extract_strided_slice %13 {offsets = [0, 256], sizes = [8, 128], strides = [1, 1]} : vector<8x512xf32> to vector<8x128xf32>
    %27 = arith.negf %26 : vector<8x128xf32>
    %28 = math.exp %27 : vector<8x128xf32>
    %cst_13 = arith.constant 1.000000e+00 : f32
    %29 = vector.broadcast %cst_13 : f32 to vector<8x128xf32>
    %30 = arith.addf %29, %28 : vector<8x128xf32>
    %31 = arith.divf %29, %30 : vector<8x128xf32>
    %32 = vector.extract_strided_slice %13 {offsets = [0, 384], sizes = [8, 128], strides = [1, 1]} : vector<8x512xf32> to vector<8x128xf32>
    %33 = math.tanh %32 : vector<8x128xf32>
    %34 = arith.mulf %25, %7 : vector<8x128xf32>
    %35 = arith.mulf %19, %33 : vector<8x128xf32>
    %36 = arith.addf %34, %35 : vector<8x128xf32>
    %37 = math.tanh %36 : vector<8x128xf32>
    %38 = arith.mulf %31, %37 : vector<8x128xf32>
    %c32_i32 = arith.constant 32 : i32
    %39 = vector.broadcast %c32_i32 : i32 to vector<8x128xi32>
    %40 = arith.cmpi slt, %5, %39 : vector<8x128xi32>
    %41 = arith.select %40, %36, %7 : vector<8x128xi1>, vector<8x128xf32>
    %42 = arith.select %40, %38, %6 : vector<8x128xi1>, vector<8x128xf32>
    %cst_14 = arith.constant dense<0.000000e+00> : vector<8x512xf32>
    %43 = tpu.matmul %42, %0, %cst_14 {dimension_numbers = #tpu.dot_dimension_numbers<[1], [0], [0], [1], [0, 0, 1, 1], [], []>} : vector<8x128xf32>, vector<128x512xf32>, vector<8x512xf32> -> vector<8x512xf32>
    %44 = arith.addf %43, %4 : vector<8x512xf32>
    %c0_15 = arith.constant 0 : index
    %c1 = arith.constant 1 : index
    %c0_16 = arith.constant 0 : index
    %45 = vector.load %arg0[%c0_15, %c1, %c0_16] : memref<8x8x16xf32, #tpu.memory_space<vmem>>, vector<8x1x16xf32>
    %46 = vector.shape_cast %45 : vector<8x1x16xf32> to vector<8x16xf32>
    %cst_17 = arith.constant dense<0.000000e+00> : vector<8x512xf32>
    %47 = tpu.matmul %46, %1, %cst_17 {dimension_numbers = #tpu.dot_dimension_numbers<[1], [0], [0], [1], [0, 0, 1, 1], [], []>} : vector<8x16xf32>, vector<16x512xf32>, vector<8x512xf32> -> vector<8x512xf32>
    %48 = arith.addf %44, %47 : vector<8x512xf32>
    %49 = vector.extract_strided_slice %48 {offsets = [0, 0], sizes = [8, 128], strides = [1, 1]} : vector<8x512xf32> to vector<8x128xf32>
    %50 = arith.negf %49 : vector<8x128xf32>
    %51 = math.exp %50 : vector<8x128xf32>
    %cst_18 = arith.constant 1.000000e+00 : f32
    %52 = vector.broadcast %cst_18 : f32 to vector<8x128xf32>
    %53 = arith.addf %52, %51 : vector<8x128xf32>
    %54 = arith.divf %52, %53 : vector<8x128xf32>
    %55 = vector.extract_strided_slice %48 {offsets = [0, 128], sizes = [8, 128], strides = [1, 1]} : vector<8x512xf32> to vector<8x128xf32>
    %56 = arith.negf %55 : vector<8x128xf32>
    %57 = math.exp %56 : vector<8x128xf32>
    %cst_19 = arith.constant 1.000000e+00 : f32
    %58 = vector.broadcast %cst_19 : f32 to vector<8x128xf32>
    %59 = arith.addf %58, %57 : vector<8x128xf32>
    %60 = arith.divf %58, %59 : vector<8x128xf32>
    %61 = vector.extract_strided_slice %48 {offsets = [0, 256], sizes = [8, 128], strides = [1, 1]} : vector<8x512xf32> to vector<8x128xf32>
    %62 = arith.negf %61 : vector<8x128xf32>
    %63 = math.exp %62 : vector<8x128xf32>
    %cst_20 = arith.constant 1.000000e+00 : f32
    %64 = vector.broadcast %cst_20 : f32 to vector<8x128xf32>
    %65 = arith.addf %64, %63 : vector<8x128xf32>
    %66 = arith.divf %64, %65 : vector<8x128xf32>
    %67 = vector.extract_strided_slice %48 {offsets = [0, 384], sizes = [8, 128], strides = [1, 1]} : vector<8x512xf32> to vector<8x128xf32>
    %68 = math.tanh %67 : vector<8x128xf32>
    %69 = arith.mulf %60, %41 : vector<8x128xf32>
    %70 = arith.mulf %54, %68 : vector<8x128xf32>
    %71 = arith.addf %69, %70 : vector<8x128xf32>
    %72 = math.tanh %71 : vector<8x128xf32>
    %73 = arith.mulf %66, %72 : vector<8x128xf32>
    %c64_i32 = arith.constant 64 : i32
    %74 = vector.broadcast %c64_i32 : i32 to vector<8x128xi32>
    %75 = arith.cmpi slt, %5, %74 : vector<8x128xi32>
    %76 = arith.select %75, %71, %41 : vector<8x128xi1>, vector<8x128xf32>
    %77 = arith.select %75, %73, %42 : vector<8x128xi1>, vector<8x128xf32>
    %cst_21 = arith.constant dense<0.000000e+00> : vector<8x512xf32>
    %78 = tpu.matmul %77, %0, %cst_21 {dimension_numbers = #tpu.dot_dimension_numbers<[1], [0], [0], [1], [0, 0, 1, 1], [], []>} : vector<8x128xf32>, vector<128x512xf32>, vector<8x512xf32> -> vector<8x512xf32>
    %79 = arith.addf %78, %4 : vector<8x512xf32>
    %c0_22 = arith.constant 0 : index
    %c2 = arith.constant 2 : index
    %c0_23 = arith.constant 0 : index
    %80 = vector.load %arg0[%c0_22, %c2, %c0_23] : memref<8x8x16xf32, #tpu.memory_space<vmem>>, vector<8x1x16xf32>
    %81 = vector.shape_cast %80 : vector<8x1x16xf32> to vector<8x16xf32>
    %cst_24 = arith.constant dense<0.000000e+00> : vector<8x512xf32>
    %82 = tpu.matmul %81, %1, %cst_24 {dimension_numbers = #tpu.dot_dimension_numbers<[1], [0], [0], [1], [0, 0, 1, 1], [], []>} : vector<8x16xf32>, vector<16x512xf32>, vector<8x512xf32> -> vector<8x512xf32>
    %83 = arith.addf %79, %82 : vector<8x512xf32>
    %84 = vector.extract_strided_slice %83 {offsets = [0, 0], sizes = [8, 128], strides = [1, 1]} : vector<8x512xf32> to vector<8x128xf32>
    %85 = arith.negf %84 : vector<8x128xf32>
    %86 = math.exp %85 : vector<8x128xf32>
    %cst_25 = arith.constant 1.000000e+00 : f32
    %87 = vector.broadcast %cst_25 : f32 to vector<8x128xf32>
    %88 = arith.addf %87, %86 : vector<8x128xf32>
    %89 = arith.divf %87, %88 : vector<8x128xf32>
    %90 = vector.extract_strided_slice %83 {offsets = [0, 128], sizes = [8, 128], strides = [1, 1]} : vector<8x512xf32> to vector<8x128xf32>
    %91 = arith.negf %90 : vector<8x128xf32>
    %92 = math.exp %91 : vector<8x128xf32>
    %cst_26 = arith.constant 1.000000e+00 : f32
    %93 = vector.broadcast %cst_26 : f32 to vector<8x128xf32>
    %94 = arith.addf %93, %92 : vector<8x128xf32>
    %95 = arith.divf %93, %94 : vector<8x128xf32>
    %96 = vector.extract_strided_slice %83 {offsets = [0, 256], sizes = [8, 128], strides = [1, 1]} : vector<8x512xf32> to vector<8x128xf32>
    %97 = arith.negf %96 : vector<8x128xf32>
    %98 = math.exp %97 : vector<8x128xf32>
    %cst_27 = arith.constant 1.000000e+00 : f32
    %99 = vector.broadcast %cst_27 : f32 to vector<8x128xf32>
    %100 = arith.addf %99, %98 : vector<8x128xf32>
    %101 = arith.divf %99, %100 : vector<8x128xf32>
    %102 = vector.extract_strided_slice %83 {offsets = [0, 384], sizes = [8, 128], strides = [1, 1]} : vector<8x512xf32> to vector<8x128xf32>
    %103 = math.tanh %102 : vector<8x128xf32>
    %104 = arith.mulf %95, %76 : vector<8x128xf32>
    %105 = arith.mulf %89, %103 : vector<8x128xf32>
    %106 = arith.addf %104, %105 : vector<8x128xf32>
    %107 = math.tanh %106 : vector<8x128xf32>
    %108 = arith.mulf %101, %107 : vector<8x128xf32>
    %c96_i32 = arith.constant 96 : i32
    %109 = vector.broadcast %c96_i32 : i32 to vector<8x128xi32>
    %110 = arith.cmpi slt, %5, %109 : vector<8x128xi32>
    %111 = arith.select %110, %106, %76 : vector<8x128xi1>, vector<8x128xf32>
    %112 = arith.select %110, %108, %77 : vector<8x128xi1>, vector<8x128xf32>
    %cst_28 = arith.constant dense<0.000000e+00> : vector<8x512xf32>
    %113 = tpu.matmul %112, %0, %cst_28 {dimension_numbers = #tpu.dot_dimension_numbers<[1], [0], [0], [1], [0, 0, 1, 1], [], []>} : vector<8x128xf32>, vector<128x512xf32>, vector<8x512xf32> -> vector<8x512xf32>
    %114 = arith.addf %113, %4 : vector<8x512xf32>
    %c0_29 = arith.constant 0 : index
    %c3 = arith.constant 3 : index
    %c0_30 = arith.constant 0 : index
    %115 = vector.load %arg0[%c0_29, %c3, %c0_30] : memref<8x8x16xf32, #tpu.memory_space<vmem>>, vector<8x1x16xf32>
    %116 = vector.shape_cast %115 : vector<8x1x16xf32> to vector<8x16xf32>
    %cst_31 = arith.constant dense<0.000000e+00> : vector<8x512xf32>
    %117 = tpu.matmul %116, %1, %cst_31 {dimension_numbers = #tpu.dot_dimension_numbers<[1], [0], [0], [1], [0, 0, 1, 1], [], []>} : vector<8x16xf32>, vector<16x512xf32>, vector<8x512xf32> -> vector<8x512xf32>
    %118 = arith.addf %114, %117 : vector<8x512xf32>
    %119 = vector.extract_strided_slice %118 {offsets = [0, 0], sizes = [8, 128], strides = [1, 1]} : vector<8x512xf32> to vector<8x128xf32>
    %120 = arith.negf %119 : vector<8x128xf32>
    %121 = math.exp %120 : vector<8x128xf32>
    %cst_32 = arith.constant 1.000000e+00 : f32
    %122 = vector.broadcast %cst_32 : f32 to vector<8x128xf32>
    %123 = arith.addf %122, %121 : vector<8x128xf32>
    %124 = arith.divf %122, %123 : vector<8x128xf32>
    %125 = vector.extract_strided_slice %118 {offsets = [0, 128], sizes = [8, 128], strides = [1, 1]} : vector<8x512xf32> to vector<8x128xf32>
    %126 = arith.negf %125 : vector<8x128xf32>
    %127 = math.exp %126 : vector<8x128xf32>
    %cst_33 = arith.constant 1.000000e+00 : f32
    %128 = vector.broadcast %cst_33 : f32 to vector<8x128xf32>
    %129 = arith.addf %128, %127 : vector<8x128xf32>
    %130 = arith.divf %128, %129 : vector<8x128xf32>
    %131 = vector.extract_strided_slice %118 {offsets = [0, 256], sizes = [8, 128], strides = [1, 1]} : vector<8x512xf32> to vector<8x128xf32>
    %132 = arith.negf %131 : vector<8x128xf32>
    %133 = math.exp %132 : vector<8x128xf32>
    %cst_34 = arith.constant 1.000000e+00 : f32
    %134 = vector.broadcast %cst_34 : f32 to vector<8x128xf32>
    %135 = arith.addf %134, %133 : vector<8x128xf32>
    %136 = arith.divf %134, %135 : vector<8x128xf32>
    %137 = vector.extract_strided_slice %118 {offsets = [0, 384], sizes = [8, 128], strides = [1, 1]} : vector<8x512xf32> to vector<8x128xf32>
    %138 = math.tanh %137 : vector<8x128xf32>
    %139 = arith.mulf %130, %111 : vector<8x128xf32>
    %140 = arith.mulf %124, %138 : vector<8x128xf32>
    %141 = arith.addf %139, %140 : vector<8x128xf32>
    %142 = math.tanh %141 : vector<8x128xf32>
    %143 = arith.mulf %136, %142 : vector<8x128xf32>
    %cst_35 = arith.constant dense<0.000000e+00> : vector<8x512xf32>
    %144 = tpu.matmul %143, %0, %cst_35 {dimension_numbers = #tpu.dot_dimension_numbers<[1], [0], [0], [1], [0, 0, 1, 1], [], []>} : vector<8x128xf32>, vector<128x512xf32>, vector<8x512xf32> -> vector<8x512xf32>
    %145 = arith.addf %144, %4 : vector<8x512xf32>
    %c0_36 = arith.constant 0 : index
    %c4 = arith.constant 4 : index
    %c0_37 = arith.constant 0 : index
    %146 = vector.load %arg0[%c0_36, %c4, %c0_37] : memref<8x8x16xf32, #tpu.memory_space<vmem>>, vector<8x1x16xf32>
    %147 = vector.shape_cast %146 : vector<8x1x16xf32> to vector<8x16xf32>
    %cst_38 = arith.constant dense<0.000000e+00> : vector<8x512xf32>
    %148 = tpu.matmul %147, %1, %cst_38 {dimension_numbers = #tpu.dot_dimension_numbers<[1], [0], [0], [1], [0, 0, 1, 1], [], []>} : vector<8x16xf32>, vector<16x512xf32>, vector<8x512xf32> -> vector<8x512xf32>
    %149 = arith.addf %145, %148 : vector<8x512xf32>
    %150 = vector.extract_strided_slice %149 {offsets = [0, 0], sizes = [8, 128], strides = [1, 1]} : vector<8x512xf32> to vector<8x128xf32>
    %151 = arith.negf %150 : vector<8x128xf32>
    %152 = math.exp %151 : vector<8x128xf32>
    %cst_39 = arith.constant 1.000000e+00 : f32
    %153 = vector.broadcast %cst_39 : f32 to vector<8x128xf32>
    %154 = arith.addf %153, %152 : vector<8x128xf32>
    %155 = arith.divf %153, %154 : vector<8x128xf32>
    %156 = vector.extract_strided_slice %149 {offsets = [0, 128], sizes = [8, 128], strides = [1, 1]} : vector<8x512xf32> to vector<8x128xf32>
    %157 = arith.negf %156 : vector<8x128xf32>
    %158 = math.exp %157 : vector<8x128xf32>
    %cst_40 = arith.constant 1.000000e+00 : f32
    %159 = vector.broadcast %cst_40 : f32 to vector<8x128xf32>
    %160 = arith.addf %159, %158 : vector<8x128xf32>
    %161 = arith.divf %159, %160 : vector<8x128xf32>
    %162 = vector.extract_strided_slice %149 {offsets = [0, 256], sizes = [8, 128], strides = [1, 1]} : vector<8x512xf32> to vector<8x128xf32>
    %163 = arith.negf %162 : vector<8x128xf32>
    %164 = math.exp %163 : vector<8x128xf32>
    %cst_41 = arith.constant 1.000000e+00 : f32
    %165 = vector.broadcast %cst_41 : f32 to vector<8x128xf32>
    %166 = arith.addf %165, %164 : vector<8x128xf32>
    %167 = arith.divf %165, %166 : vector<8x128xf32>
    %168 = vector.extract_strided_slice %149 {offsets = [0, 384], sizes = [8, 128], strides = [1, 1]} : vector<8x512xf32> to vector<8x128xf32>
    %169 = math.tanh %168 : vector<8x128xf32>
    %170 = arith.mulf %161, %141 : vector<8x128xf32>
    %171 = arith.mulf %155, %169 : vector<8x128xf32>
    %172 = arith.addf %170, %171 : vector<8x128xf32>
    %173 = math.tanh %172 : vector<8x128xf32>
    %174 = arith.mulf %167, %173 : vector<8x128xf32>
    %cst_42 = arith.constant dense<0.000000e+00> : vector<8x512xf32>
    %175 = tpu.matmul %174, %0, %cst_42 {dimension_numbers = #tpu.dot_dimension_numbers<[1], [0], [0], [1], [0, 0, 1, 1], [], []>} : vector<8x128xf32>, vector<128x512xf32>, vector<8x512xf32> -> vector<8x512xf32>
    %176 = arith.addf %175, %4 : vector<8x512xf32>
    %c0_43 = arith.constant 0 : index
    %c5 = arith.constant 5 : index
    %c0_44 = arith.constant 0 : index
    %177 = vector.load %arg0[%c0_43, %c5, %c0_44] : memref<8x8x16xf32, #tpu.memory_space<vmem>>, vector<8x1x16xf32>
    %178 = vector.shape_cast %177 : vector<8x1x16xf32> to vector<8x16xf32>
    %cst_45 = arith.constant dense<0.000000e+00> : vector<8x512xf32>
    %179 = tpu.matmul %178, %1, %cst_45 {dimension_numbers = #tpu.dot_dimension_numbers<[1], [0], [0], [1], [0, 0, 1, 1], [], []>} : vector<8x16xf32>, vector<16x512xf32>, vector<8x512xf32> -> vector<8x512xf32>
    %180 = arith.addf %176, %179 : vector<8x512xf32>
    %181 = vector.extract_strided_slice %180 {offsets = [0, 0], sizes = [8, 128], strides = [1, 1]} : vector<8x512xf32> to vector<8x128xf32>
    %182 = arith.negf %181 : vector<8x128xf32>
    %183 = math.exp %182 : vector<8x128xf32>
    %cst_46 = arith.constant 1.000000e+00 : f32
    %184 = vector.broadcast %cst_46 : f32 to vector<8x128xf32>
    %185 = arith.addf %184, %183 : vector<8x128xf32>
    %186 = arith.divf %184, %185 : vector<8x128xf32>
    %187 = vector.extract_strided_slice %180 {offsets = [0, 128], sizes = [8, 128], strides = [1, 1]} : vector<8x512xf32> to vector<8x128xf32>
    %188 = arith.negf %187 : vector<8x128xf32>
    %189 = math.exp %188 : vector<8x128xf32>
    %cst_47 = arith.constant 1.000000e+00 : f32
    %190 = vector.broadcast %cst_47 : f32 to vector<8x128xf32>
    %191 = arith.addf %190, %189 : vector<8x128xf32>
    %192 = arith.divf %190, %191 : vector<8x128xf32>
    %193 = vector.extract_strided_slice %180 {offsets = [0, 256], sizes = [8, 128], strides = [1, 1]} : vector<8x512xf32> to vector<8x128xf32>
    %194 = arith.negf %193 : vector<8x128xf32>
    %195 = math.exp %194 : vector<8x128xf32>
    %cst_48 = arith.constant 1.000000e+00 : f32
    %196 = vector.broadcast %cst_48 : f32 to vector<8x128xf32>
    %197 = arith.addf %196, %195 : vector<8x128xf32>
    %198 = arith.divf %196, %197 : vector<8x128xf32>
    %199 = vector.extract_strided_slice %180 {offsets = [0, 384], sizes = [8, 128], strides = [1, 1]} : vector<8x512xf32> to vector<8x128xf32>
    %200 = math.tanh %199 : vector<8x128xf32>
    %201 = arith.mulf %192, %172 : vector<8x128xf32>
    %202 = arith.mulf %186, %200 : vector<8x128xf32>
    %203 = arith.addf %201, %202 : vector<8x128xf32>
    %204 = math.tanh %203 : vector<8x128xf32>
    %205 = arith.mulf %198, %204 : vector<8x128xf32>
    %cst_49 = arith.constant dense<0.000000e+00> : vector<8x512xf32>
    %206 = tpu.matmul %205, %0, %cst_49 {dimension_numbers = #tpu.dot_dimension_numbers<[1], [0], [0], [1], [0, 0, 1, 1], [], []>} : vector<8x128xf32>, vector<128x512xf32>, vector<8x512xf32> -> vector<8x512xf32>
    %207 = arith.addf %206, %4 : vector<8x512xf32>
    %c0_50 = arith.constant 0 : index
    %c6 = arith.constant 6 : index
    %c0_51 = arith.constant 0 : index
    %208 = vector.load %arg0[%c0_50, %c6, %c0_51] : memref<8x8x16xf32, #tpu.memory_space<vmem>>, vector<8x1x16xf32>
    %209 = vector.shape_cast %208 : vector<8x1x16xf32> to vector<8x16xf32>
    %cst_52 = arith.constant dense<0.000000e+00> : vector<8x512xf32>
    %210 = tpu.matmul %209, %1, %cst_52 {dimension_numbers = #tpu.dot_dimension_numbers<[1], [0], [0], [1], [0, 0, 1, 1], [], []>} : vector<8x16xf32>, vector<16x512xf32>, vector<8x512xf32> -> vector<8x512xf32>
    %211 = arith.addf %207, %210 : vector<8x512xf32>
    %212 = vector.extract_strided_slice %211 {offsets = [0, 0], sizes = [8, 128], strides = [1, 1]} : vector<8x512xf32> to vector<8x128xf32>
    %213 = arith.negf %212 : vector<8x128xf32>
    %214 = math.exp %213 : vector<8x128xf32>
    %cst_53 = arith.constant 1.000000e+00 : f32
    %215 = vector.broadcast %cst_53 : f32 to vector<8x128xf32>
    %216 = arith.addf %215, %214 : vector<8x128xf32>
    %217 = arith.divf %215, %216 : vector<8x128xf32>
    %218 = vector.extract_strided_slice %211 {offsets = [0, 128], sizes = [8, 128], strides = [1, 1]} : vector<8x512xf32> to vector<8x128xf32>
    %219 = arith.negf %218 : vector<8x128xf32>
    %220 = math.exp %219 : vector<8x128xf32>
    %cst_54 = arith.constant 1.000000e+00 : f32
    %221 = vector.broadcast %cst_54 : f32 to vector<8x128xf32>
    %222 = arith.addf %221, %220 : vector<8x128xf32>
    %223 = arith.divf %221, %222 : vector<8x128xf32>
    %224 = vector.extract_strided_slice %211 {offsets = [0, 256], sizes = [8, 128], strides = [1, 1]} : vector<8x512xf32> to vector<8x128xf32>
    %225 = arith.negf %224 : vector<8x128xf32>
    %226 = math.exp %225 : vector<8x128xf32>
    %cst_55 = arith.constant 1.000000e+00 : f32
    %227 = vector.broadcast %cst_55 : f32 to vector<8x128xf32>
    %228 = arith.addf %227, %226 : vector<8x128xf32>
    %229 = arith.divf %227, %228 : vector<8x128xf32>
    %230 = vector.extract_strided_slice %211 {offsets = [0, 384], sizes = [8, 128], strides = [1, 1]} : vector<8x512xf32> to vector<8x128xf32>
    %231 = math.tanh %230 : vector<8x128xf32>
    %232 = arith.mulf %223, %203 : vector<8x128xf32>
    %233 = arith.mulf %217, %231 : vector<8x128xf32>
    %234 = arith.addf %232, %233 : vector<8x128xf32>
    %235 = math.tanh %234 : vector<8x128xf32>
    %236 = arith.mulf %229, %235 : vector<8x128xf32>
    %cst_56 = arith.constant dense<0.000000e+00> : vector<8x512xf32>
    %237 = tpu.matmul %236, %0, %cst_56 {dimension_numbers = #tpu.dot_dimension_numbers<[1], [0], [0], [1], [0, 0, 1, 1], [], []>} : vector<8x128xf32>, vector<128x512xf32>, vector<8x512xf32> -> vector<8x512xf32>
    %238 = arith.addf %237, %4 : vector<8x512xf32>
    %c0_57 = arith.constant 0 : index
    %c7 = arith.constant 7 : index
    %c0_58 = arith.constant 0 : index
    %239 = vector.load %arg0[%c0_57, %c7, %c0_58] : memref<8x8x16xf32, #tpu.memory_space<vmem>>, vector<8x1x16xf32>
    %240 = vector.shape_cast %239 : vector<8x1x16xf32> to vector<8x16xf32>
    %cst_59 = arith.constant dense<0.000000e+00> : vector<8x512xf32>
    %241 = tpu.matmul %240, %1, %cst_59 {dimension_numbers = #tpu.dot_dimension_numbers<[1], [0], [0], [1], [0, 0, 1, 1], [], []>} : vector<8x16xf32>, vector<16x512xf32>, vector<8x512xf32> -> vector<8x512xf32>
    %242 = arith.addf %238, %241 : vector<8x512xf32>
    %243 = vector.extract_strided_slice %242 {offsets = [0, 0], sizes = [8, 128], strides = [1, 1]} : vector<8x512xf32> to vector<8x128xf32>
    %244 = arith.negf %243 : vector<8x128xf32>
    %245 = math.exp %244 : vector<8x128xf32>
    %cst_60 = arith.constant 1.000000e+00 : f32
    %246 = vector.broadcast %cst_60 : f32 to vector<8x128xf32>
    %247 = arith.addf %246, %245 : vector<8x128xf32>
    %248 = arith.divf %246, %247 : vector<8x128xf32>
    %249 = vector.extract_strided_slice %242 {offsets = [0, 128], sizes = [8, 128], strides = [1, 1]} : vector<8x512xf32> to vector<8x128xf32>
    %250 = arith.negf %249 : vector<8x128xf32>
    %251 = math.exp %250 : vector<8x128xf32>
    %cst_61 = arith.constant 1.000000e+00 : f32
    %252 = vector.broadcast %cst_61 : f32 to vector<8x128xf32>
    %253 = arith.addf %252, %251 : vector<8x128xf32>
    %254 = arith.divf %252, %253 : vector<8x128xf32>
    %255 = vector.extract_strided_slice %242 {offsets = [0, 256], sizes = [8, 128], strides = [1, 1]} : vector<8x512xf32> to vector<8x128xf32>
    %256 = arith.negf %255 : vector<8x128xf32>
    %257 = math.exp %256 : vector<8x128xf32>
    %cst_62 = arith.constant 1.000000e+00 : f32
    %258 = vector.broadcast %cst_62 : f32 to vector<8x128xf32>
    %259 = arith.addf %258, %257 : vector<8x128xf32>
    %260 = arith.divf %258, %259 : vector<8x128xf32>
    %261 = vector.extract_strided_slice %242 {offsets = [0, 384], sizes = [8, 128], strides = [1, 1]} : vector<8x512xf32> to vector<8x128xf32>
    %262 = math.tanh %261 : vector<8x128xf32>
    %263 = arith.mulf %254, %234 : vector<8x128xf32>
    %264 = arith.mulf %248, %262 : vector<8x128xf32>
    %265 = arith.addf %263, %264 : vector<8x128xf32>
    %266 = math.tanh %265 : vector<8x128xf32>
    %267 = arith.mulf %260, %266 : vector<8x128xf32>
    %cst_63 = arith.constant dense<0.000000e+00> : vector<8x512xf32>
    %268 = tpu.matmul %267, %0, %cst_63 {dimension_numbers = #tpu.dot_dimension_numbers<[1], [0], [0], [1], [0, 0, 1, 1], [], []>} : vector<8x128xf32>, vector<128x512xf32>, vector<8x512xf32> -> vector<8x512xf32>
    %269 = arith.addf %268, %4 : vector<8x512xf32>
    %270 = vector.extract_strided_slice %269 {offsets = [0, 0], sizes = [8, 128], strides = [1, 1]} : vector<8x512xf32> to vector<8x128xf32>
    %271 = arith.negf %270 : vector<8x128xf32>
    %272 = math.exp %271 : vector<8x128xf32>
    %cst_64 = arith.constant 1.000000e+00 : f32
    %273 = vector.broadcast %cst_64 : f32 to vector<8x128xf32>
    %274 = arith.addf %273, %272 : vector<8x128xf32>
    %275 = arith.divf %273, %274 : vector<8x128xf32>
    %276 = vector.extract_strided_slice %269 {offsets = [0, 128], sizes = [8, 128], strides = [1, 1]} : vector<8x512xf32> to vector<8x128xf32>
    %277 = arith.negf %276 : vector<8x128xf32>
    %278 = math.exp %277 : vector<8x128xf32>
    %cst_65 = arith.constant 1.000000e+00 : f32
    %279 = vector.broadcast %cst_65 : f32 to vector<8x128xf32>
    %280 = arith.addf %279, %278 : vector<8x128xf32>
    %281 = arith.divf %279, %280 : vector<8x128xf32>
    %282 = vector.extract_strided_slice %269 {offsets = [0, 256], sizes = [8, 128], strides = [1, 1]} : vector<8x512xf32> to vector<8x128xf32>
    %283 = arith.negf %282 : vector<8x128xf32>
    %284 = math.exp %283 : vector<8x128xf32>
    %cst_66 = arith.constant 1.000000e+00 : f32
    %285 = vector.broadcast %cst_66 : f32 to vector<8x128xf32>
    %286 = arith.addf %285, %284 : vector<8x128xf32>
    %287 = arith.divf %285, %286 : vector<8x128xf32>
    %288 = vector.extract_strided_slice %269 {offsets = [0, 384], sizes = [8, 128], strides = [1, 1]} : vector<8x512xf32> to vector<8x128xf32>
    %289 = math.tanh %288 : vector<8x128xf32>
    %290 = arith.mulf %281, %265 : vector<8x128xf32>
    %291 = arith.mulf %275, %289 : vector<8x128xf32>
    %292 = arith.addf %290, %291 : vector<8x128xf32>
    %293 = math.tanh %292 : vector<8x128xf32>
    %294 = arith.mulf %287, %293 : vector<8x128xf32>
    %cst_67 = arith.constant dense<0.000000e+00> : vector<8x512xf32>
    %295 = tpu.matmul %294, %0, %cst_67 {dimension_numbers = #tpu.dot_dimension_numbers<[1], [0], [0], [1], [0, 0, 1, 1], [], []>} : vector<8x128xf32>, vector<128x512xf32>, vector<8x512xf32> -> vector<8x512xf32>
    %296 = arith.addf %295, %4 : vector<8x512xf32>
    %297 = vector.extract_strided_slice %296 {offsets = [0, 0], sizes = [8, 128], strides = [1, 1]} : vector<8x512xf32> to vector<8x128xf32>
    %298 = arith.negf %297 : vector<8x128xf32>
    %299 = math.exp %298 : vector<8x128xf32>
    %cst_68 = arith.constant 1.000000e+00 : f32
    %300 = vector.broadcast %cst_68 : f32 to vector<8x128xf32>
    %301 = arith.addf %300, %299 : vector<8x128xf32>
    %302 = arith.divf %300, %301 : vector<8x128xf32>
    %303 = vector.extract_strided_slice %296 {offsets = [0, 128], sizes = [8, 128], strides = [1, 1]} : vector<8x512xf32> to vector<8x128xf32>
    %304 = arith.negf %303 : vector<8x128xf32>
    %305 = math.exp %304 : vector<8x128xf32>
    %cst_69 = arith.constant 1.000000e+00 : f32
    %306 = vector.broadcast %cst_69 : f32 to vector<8x128xf32>
    %307 = arith.addf %306, %305 : vector<8x128xf32>
    %308 = arith.divf %306, %307 : vector<8x128xf32>
    %309 = vector.extract_strided_slice %296 {offsets = [0, 256], sizes = [8, 128], strides = [1, 1]} : vector<8x512xf32> to vector<8x128xf32>
    %310 = arith.negf %309 : vector<8x128xf32>
    %311 = math.exp %310 : vector<8x128xf32>
    %cst_70 = arith.constant 1.000000e+00 : f32
    %312 = vector.broadcast %cst_70 : f32 to vector<8x128xf32>
    %313 = arith.addf %312, %311 : vector<8x128xf32>
    %314 = arith.divf %312, %313 : vector<8x128xf32>
    %315 = vector.extract_strided_slice %296 {offsets = [0, 384], sizes = [8, 128], strides = [1, 1]} : vector<8x512xf32> to vector<8x128xf32>
    %316 = math.tanh %315 : vector<8x128xf32>
    %317 = arith.mulf %308, %292 : vector<8x128xf32>
    %318 = arith.mulf %302, %316 : vector<8x128xf32>
    %319 = arith.addf %317, %318 : vector<8x128xf32>
    %320 = math.tanh %319 : vector<8x128xf32>
    %321 = arith.mulf %314, %320 : vector<8x128xf32>
    %cst_71 = arith.constant dense<0.000000e+00> : vector<8x512xf32>
    %322 = tpu.matmul %321, %0, %cst_71 {dimension_numbers = #tpu.dot_dimension_numbers<[1], [0], [0], [1], [0, 0, 1, 1], [], []>} : vector<8x128xf32>, vector<128x512xf32>, vector<8x512xf32> -> vector<8x512xf32>
    %323 = arith.addf %322, %4 : vector<8x512xf32>
    %324 = vector.extract_strided_slice %323 {offsets = [0, 0], sizes = [8, 128], strides = [1, 1]} : vector<8x512xf32> to vector<8x128xf32>
    %325 = arith.negf %324 : vector<8x128xf32>
    %326 = math.exp %325 : vector<8x128xf32>
    %cst_72 = arith.constant 1.000000e+00 : f32
    %327 = vector.broadcast %cst_72 : f32 to vector<8x128xf32>
    %328 = arith.addf %327, %326 : vector<8x128xf32>
    %329 = arith.divf %327, %328 : vector<8x128xf32>
    %330 = vector.extract_strided_slice %323 {offsets = [0, 128], sizes = [8, 128], strides = [1, 1]} : vector<8x512xf32> to vector<8x128xf32>
    %331 = arith.negf %330 : vector<8x128xf32>
    %332 = math.exp %331 : vector<8x128xf32>
    %cst_73 = arith.constant 1.000000e+00 : f32
    %333 = vector.broadcast %cst_73 : f32 to vector<8x128xf32>
    %334 = arith.addf %333, %332 : vector<8x128xf32>
    %335 = arith.divf %333, %334 : vector<8x128xf32>
    %336 = vector.extract_strided_slice %323 {offsets = [0, 256], sizes = [8, 128], strides = [1, 1]} : vector<8x512xf32> to vector<8x128xf32>
    %337 = arith.negf %336 : vector<8x128xf32>
    %338 = math.exp %337 : vector<8x128xf32>
    %cst_74 = arith.constant 1.000000e+00 : f32
    %339 = vector.broadcast %cst_74 : f32 to vector<8x128xf32>
    %340 = arith.addf %339, %338 : vector<8x128xf32>
    %341 = arith.divf %339, %340 : vector<8x128xf32>
    %342 = vector.extract_strided_slice %323 {offsets = [0, 384], sizes = [8, 128], strides = [1, 1]} : vector<8x512xf32> to vector<8x128xf32>
    %343 = math.tanh %342 : vector<8x128xf32>
    %344 = arith.mulf %335, %319 : vector<8x128xf32>
    %345 = arith.mulf %329, %343 : vector<8x128xf32>
    %346 = arith.addf %344, %345 : vector<8x128xf32>
    %347 = math.tanh %346 : vector<8x128xf32>
    %348 = arith.mulf %341, %347 : vector<8x128xf32>
    %c0_75 = arith.constant 0 : index
    %c0_76 = arith.constant 0 : index
    %349 = vector.load %arg4[%c0_75, %c0_76] : memref<1x128xf32, #tpu.memory_space<vmem>>, vector<1x128xf32>
    %350 = vector.broadcast %349 : vector<1x128xf32> to vector<8x128xf32>
    %351 = arith.mulf %348, %350 : vector<8x128xf32>
    %c0_77 = arith.constant 0 : index
    %c0_78 = arith.constant 0 : index
    %352 = vector.load %arg5[%c0_77, %c0_78] : memref<1x128xf32, #tpu.memory_space<vmem>>, vector<1x128xf32>
    %353 = vector.broadcast %352 : vector<1x128xf32> to vector<8x128xf32>
    %354 = arith.addf %351, %353 : vector<8x128xf32>
    %cst_79 = arith.constant 0.000000e+00 : f32
    %355 = vector.broadcast %cst_79 : f32 to vector<8x128xf32>
    %356 = arith.maximumf %354, %355 : vector<8x128xf32>
    %c0_80 = arith.constant 0 : index
    %c0_81 = arith.constant 0 : index
    %357 = vector.load %arg6[%c0_80, %c0_81] : memref<128x8xf32, #tpu.memory_space<vmem>>, vector<128x8xf32>
    %cst_82 = arith.constant dense<0.000000e+00> : vector<8x8xf32>
    %358 = tpu.matmul %356, %357, %cst_82 {dimension_numbers = #tpu.dot_dimension_numbers<[1], [0], [0], [1], [0, 0, 1, 1], [], []>} : vector<8x128xf32>, vector<128x8xf32>, vector<8x8xf32> -> vector<8x8xf32>
    %c0_83 = arith.constant 0 : index
    %c0_84 = arith.constant 0 : index
    %359 = vector.load %arg7[%c0_83, %c0_84] : memref<1x8xf32, #tpu.memory_space<vmem>>, vector<1x8xf32>
    %360 = vector.broadcast %359 : vector<1x8xf32> to vector<8x8xf32>
    %361 = arith.addf %358, %360 : vector<8x8xf32>
    %c0_85 = arith.constant 0 : index
    %c0_86 = arith.constant 0 : index
    %362 = vector.load %arg8[%c0_85, %c0_86] : memref<8x8xf32, #tpu.memory_space<vmem>>, vector<8x8xf32>
    tpu.vector_store %arg8[%c0_85, %c0_86], %361 {strides = array<i32>} : memref<8x8xf32, #tpu.memory_space<vmem>>, vector<8x8xf32>,
    return
  }
}

</mosaic_0001>

<llo_original>
// kernel: tpu_custom_call.1
$region0: #{tpu_custom_call.1}
  #allocation0 [shape = 'u32[]', space=smem, size = 0x4, offset = 0x4, fixed_abs, tag = 'smem constant byte address 0x4 - core index']
  #allocation1 [shape = 'u32[144,128]{1,0:T(1,128)}', space=vmem, size = 0x12000, scoped, tag = 'internal scratch']
  %s0 = inlined_call_operand.vmem [shape: f32[8,8,16], index: 0, kind: input, shape index: {}]
  %s1 = inlined_call_operand.hbm [shape: f32[128,512], index: 1, kind: input, shape index: {}]
  %s2 = inlined_call_operand.vmem [shape: f32[16,512], index: 2, kind: input, shape index: {}]
  %s3 = inlined_call_operand.vmem [shape: f32[1,512], index: 3, kind: input, shape index: {}]
  %s4 = inlined_call_operand.vmem [shape: f32[1,128], index: 4, kind: input, shape index: {}]
  %s5 = inlined_call_operand.vmem [shape: f32[1,128], index: 5, kind: input, shape index: {}]
  %s6 = inlined_call_operand.vmem [shape: f32[128,8], index: 6, kind: input, shape index: {}]
  %s7 = inlined_call_operand.vmem [shape: f32[1,8], index: 7, kind: input, shape index: {}]
  %s8 = inlined_call_operand.hbm [shape: f32[8,8], index: 8, kind: output, shape index: {}]
  %s9 = sld [smem:[#allocation0]]
  $region46: #{tpu_custom_call.1} parent=0
    _
  %s11 = ssub.s32 1, %s9
  %s12 = scalar_select 0, %s11, %s9
  $region1: #{tpu_custom_call.1} parent=0
    #allocation2 [shape = 'u8[262144]{0}', space=vmem, size = 0x40000, scoped, tag = 'input window, operand 1, single buffered']
    #allocation3 [shape = 's32[1]{0}', space=sflag, size = 0x4, scoped, tag = 'scoped memory for tpu_custom_call.1']
    #allocation4 [shape = 's32[1]{0}', space=sflag, size = 0x4, scoped, tag = 'scoped memory for tpu_custom_call.1']
    #allocation5 [shape = 'u8[4096]{0}', space=vmem, size = 0x1000, scoped, tag = 'output window, operand 0, single buffered']
    %13 = vsyncpa [#allocation3], 0
    %14 = vsyncpa [#allocation4], 0
    // Predicated region
    $region2: #{tpu_custom_call.1} parent=1 // pred_check
      _
    $region3: #{tpu_custom_call.1} parent=1 // pred_check_branch
      %16 = sbr.rel (0) target = $region5
    $region4: #{tpu_custom_call.1} parent=1 // pred_region
      _
    $region5: #{tpu_custom_call.1} parent=1 // pred_fallthru
      _
    // Predicated region
    $region6: #{tpu_custom_call.1} parent=1 // pred_check
      _
    $region7: #{tpu_custom_call.1} parent=1 // pred_check_branch
      %18 = sbr.rel (0) target = $region9
    $region8: #{tpu_custom_call.1} parent=1 // pred_region
      %s20 = ssub.s32 8192, 8192
      %21 = vsyncadd [#allocation3], %s20
      %s22 = sshll.u32 [#allocation2], 4
      %s23 = int_to_ptr.vmem [resolvable:$true] %s22
      %28 = dma.hbm_to_vmem [thread:$0]  %s1, 8192, %s23, [#allocation3], 512, 512, 32
    $region9: #{tpu_custom_call.1} parent=1 // pred_fallthru
      _
    // Predicated region
    $region10: #{tpu_custom_call.1} parent=1 // pred_check
      _
    $region11: #{tpu_custom_call.1} parent=1 // pred_check_branch
      %30 = sbr.rel (0) target = $region13
    $region12: #{tpu_custom_call.1} parent=1 // pred_region
      _
    $region13: #{tpu_custom_call.1} parent=1 // pred_fallthru
      _
    // Predicated region
    $region14: #{tpu_custom_call.1} parent=1 // pred_check
      _
    $region15: #{tpu_custom_call.1} parent=1 // pred_check_branch
      %32 = sbr.rel (0) target = $region17
    $region16: #{tpu_custom_call.1} parent=1 // pred_region
      _
    $region17: #{tpu_custom_call.1} parent=1 // pred_fallthru
      _
    // Predicated region
    $region18: #{tpu_custom_call.1} parent=1 // pred_check
      _
    $region19: #{tpu_custom_call.1} parent=1 // pred_check_branch
      %34 = sbr.rel (0) target = $region21
    $region20: #{tpu_custom_call.1} parent=1 // pred_region
      _
    $region21: #{tpu_custom_call.1} parent=1 // pred_fallthru
      _
    // Predicated region
    $region22: #{tpu_custom_call.1} parent=1 // pred_check
      _
    $region23: #{tpu_custom_call.1} parent=1 // pred_check_branch
      %36 = sbr.rel (0) target = $region25
    $region24: #{tpu_custom_call.1} parent=1 // pred_region
      _
    $region25: #{tpu_custom_call.1} parent=1 // pred_fallthru
      _
    // Predicated region
    $region26: #{tpu_custom_call.1} parent=1 // pred_check
      _
    $region27: #{tpu_custom_call.1} parent=1 // pred_check_branch
      %38 = sbr.rel (0) target = $region29
    $region28: #{tpu_custom_call.1} parent=1 // pred_region
      _
    $region29: #{tpu_custom_call.1} parent=1 // pred_fallthru
      _
    // Predicated region
    $region30: #{tpu_custom_call.1} parent=1 // pred_check
      _
    $region31: #{tpu_custom_call.1} parent=1 // pred_check_branch
      %40 = sbr.rel (0) target = $region33
    $region32: #{tpu_custom_call.1} parent=1 // pred_region
      _
    $region33: #{tpu_custom_call.1} parent=1 // pred_fallthru
      _
    // Predicated region
    $region34: #{tpu_custom_call.1} parent=1 // pred_check
      _
    $region35: #{tpu_custom_call.1} parent=1 // pred_check_branch
      %42 = sbr.rel (0) target = $region37
    $region36: #{tpu_custom_call.1} parent=1 // pred_region
      %43 = dma.done [#allocation3], 8192
    $region37: #{tpu_custom_call.1} parent=1 // pred_fallthru
      _
    %v44 = vld [vmem:[#allocation2] sm:$0xff]
    %v45 = vld [vmem:[#allocation2 + $0x8] sm:$0xff]
    %v46 = vld [vmem:[#allocation2 + $0x10] sm:$0xff]
    %v47 = vld [vmem:[#allocation2 + $0x18] sm:$0xff]
    %v48 = vld [vmem:[#allocation2 + $0x20] sm:$0xff]
    %v49 = vld [vmem:[#allocation2 + $0x28] sm:$0xff]
    %v50 = vld [vmem:[#allocation2 + $0x30] sm:$0xff]
    %v51 = vld [vmem:[#allocation2 + $0x38] sm:$0xff]
    %v52 = vld [vmem:[#allocation2 + $0x40] sm:$0xff]
    %v53 = vld [vmem:[#allocation2 + $0x48] sm:$0xff]
    %v54 = vld [vmem:[#allocation2 + $0x50] sm:$0xff]
    %v55 = vld [vmem:[#allocation2 + $0x58] sm:$0xff]
    %v56 = vld [vmem:[#allocation2 + $0x60] sm:$0xff]
    %v57 = vld [vmem:[#allocation2 + $0x68] sm:$0xff]
    %v58 = vld [vmem:[#allocation2 + $0x70] sm:$0xff]
    %v59 = vld [vmem:[#allocation2 + $0x78] sm:$0xff]
    %v60 = vld [vmem:[#allocation2 + $0x80] sm:$0xff]
    %v61 = vld [vmem:[#allocation2 + $0x88] sm:$0xff]
    %v62 = vld [vmem:[#allocation2 + $0x90] sm:$0xff]
    %v63 = vld [vmem:[#allocation2 + $0x98] sm:$0xff]
    %v64 = vld [vmem:[#allocation2 + $0xa0] sm:$0xff]
    %v65 = vld [vmem:[#allocation2 + $0xa8] sm:$0xff]
    %v66 = vld [vmem:[#allocation2 + $0xb0] sm:$0xff]
    %v67 = vld [vmem:[#allocation2 + $0xb8] sm:$0xff]
    %v68 = vld [vmem:[#allocation2 + $0xc0] sm:$0xff]
    %v69 = vld [vmem:[#allocation2 + $0xc8] sm:$0xff]
    %v70 = vld [vmem:[#allocation2 + $0xd0] sm:$0xff]
    %v71 = vld [vmem:[#allocation2 + $0xd8] sm:$0xff]
    %v72 = vld [vmem:[#allocation2 + $0xe0] sm:$0xff]
    %v73 = vld [vmem:[#allocation2 + $0xe8] sm:$0xff]
    %v74 = vld [vmem:[#allocation2 + $0xf0] sm:$0xff]
    %v75 = vld [vmem:[#allocation2 + $0xf8] sm:$0xff]
    %v76 = vld [vmem:[#allocation2 + $0x100] sm:$0xff]
    %v77 = vld [vmem:[#allocation2 + $0x108] sm:$0xff]
    %v78 = vld [vmem:[#allocation2 + $0x110] sm:$0xff]
    %v79 = vld [vmem:[#allocation2 + $0x118] sm:$0xff]
    %v80 = vld [vmem:[#allocation2 + $0x120] sm:$0xff]
    %v81 = vld [vmem:[#allocation2 + $0x128] sm:$0xff]
    %v82 = vld [vmem:[#allocation2 + $0x130] sm:$0xff]
    %v83 = vld [vmem:[#allocation2 + $0x138] sm:$0xff]
    %v84 = vld [vmem:[#allocation2 + $0x140] sm:$0xff]
    %v85 = vld [vmem:[#allocation2 + $0x148] sm:$0xff]
    %v86 = vld [vmem:[#allocation2 + $0x150] sm:$0xff]
    %v87 = vld [vmem:[#allocation2 + $0x158] sm:$0xff]
    %v88 = vld [vmem:[#allocation2 + $0x160] sm:$0xff]
    %v89 = vld [vmem:[#allocation2 + $0x168] sm:$0xff]
    %v90 = vld [vmem:[#allocation2 + $0x170] sm:$0xff]
    %v91 = vld [vmem:[#allocation2 + $0x178] sm:$0xff]
    %v92 = vld [vmem:[#allocation2 + $0x180] sm:$0xff]
    %v93 = vld [vmem:[#allocation2 + $0x188] sm:$0xff]
    %v94 = vld [vmem:[#allocation2 + $0x190] sm:$0xff]
    %v95 = vld [vmem:[#allocation2 + $0x198] sm:$0xff]
    %v96 = vld [vmem:[#allocation2 + $0x1a0] sm:$0xff]
    %v97 = vld [vmem:[#allocation2 + $0x1a8] sm:$0xff]
    %v98 = vld [vmem:[#allocation2 + $0x1b0] sm:$0xff]
    %v99 = vld [vmem:[#allocation2 + $0x1b8] sm:$0xff]
    %v100 = vld [vmem:[#allocation2 + $0x1c0] sm:$0xff]
    %v101 = vld [vmem:[#allocation2 + $0x1c8] sm:$0xff]
    %v102 = vld [vmem:[#allocation2 + $0x1d0] sm:$0xff]
    %v103 = vld [vmem:[#allocation2 + $0x1d8] sm:$0xff]
    %v104 = vld [vmem:[#allocation2 + $0x1e0] sm:$0xff]
    %v105 = vld [vmem:[#allocation2 + $0x1e8] sm:$0xff]
    %v106 = vld [vmem:[#allocation2 + $0x1f0] sm:$0xff]
    %v107 = vld [vmem:[#allocation2 + $0x1f8] sm:$0xff]
    %v108 = vld [vmem:[%s2] sm:$0xff]
    %v109 = vld [vmem:[%s2 + $0x8] sm:$0xff]
    %v110 = vld [vmem:[%s2 + $0x10] sm:$0xff]
    %v111 = vld [vmem:[%s2 + $0x18] sm:$0xff]
    %v112 = vld [vmem:[%s2 + $0x20] sm:$0xff]
    %v113 = vld [vmem:[%s2 + $0x28] sm:$0xff]
    %v114 = vld [vmem:[%s2 + $0x30] sm:$0xff]
    %v115 = vld [vmem:[%s2 + $0x38] sm:$0xff]
    %v116 = vld [vmem:[%s3] sm:$0xf]
    %v118 = vlaneseq
    %v119 = vshrl.u32 %v118, 7
    %v120 = vsub.s32 0, %v119
    %v121 = vrot.slane %v116, %v120
    %v122 = vlaneseq
    %v123 = vshrl.u32 %v122, 7
    %v124 = vsub.s32 1, %v123
    %v125 = vrot.slane %v116, %v124
    %v126 = vlaneseq
    %v127 = vshrl.u32 %v126, 7
    %v128 = vsub.s32 2, %v127
    %v129 = vrot.slane %v116, %v128
    %v130 = vlaneseq
    %v131 = vshrl.u32 %v130, 7
    %v132 = vsub.s32 3, %v131
    %v133 = vrot.slane %v116, %v132
    %v138 = vlaneseq
    %v139 = vand.u32 %v138, 127
    %140 = vmatprep.subr.mxu0 %v105
    %141 = vmatpush1.msra.mxu0 %v104
    %142 = vmatprep.subr.mxu0 %v101
    %143 = vmatpush1.msra.mxu0 %v100
    %144 = vmatprep.subr.mxu0 %v97
    %145 = vmatpush1.msra.mxu0 %v96
    %146 = vmatprep.subr.mxu0 %v93
    %147 = vmatpush1.msra.mxu0 %v92
    %148 = vmatprep.subr.mxu0 %v89
    %149 = vmatpush1.msra.mxu0 %v88
    %150 = vmatprep.subr.mxu0 %v85
    %151 = vmatpush1.msra.mxu0 %v84
    %152 = vmatprep.subr.mxu0 %v81
    %153 = vmatpush1.msra.mxu0 %v80
    %154 = vmatprep.subr.mxu0 %v77
    %155 = vmatpush1.msra.mxu0 %v76
    %156 = vmatprep.subr.mxu0 %v73
    %157 = vmatpush1.msra.mxu0 %v72
    %158 = vmatprep.subr.mxu0 %v69
    %159 = vmatpush1.msra.mxu0 %v68
    %160 = vmatprep.subr.mxu0 %v65
    %161 = vmatpush1.msra.mxu0 %v64
    %162 = vmatprep.subr.mxu0 %v61
    %163 = vmatpush1.msra.mxu0 %v60
    %164 = vmatprep.subr.mxu0 %v57
    %165 = vmatpush1.msra.mxu0 %v56
    %166 = vmatprep.subr.mxu0 %v53
    %167 = vmatpush1.msra.mxu0 %v52
    %168 = vmatprep.subr.mxu0 %v49
    %169 = vmatpush1.msra.mxu0 %v48
    %170 = vmatprep.subr.mxu0 %v45
    %171 = vmatpush1.msra.mxu0 %v44
    %172 = vmatprep.subr.mxu0 0.0
    %173 = vmatpush2.msra.mxu0 0.0
    %174 = vmatprep.subr.mxu0 0.0
    %175 = vmatpush2.msra.mxu0 0.0
    %176 = vmatprep.subr.mxu0 0.0
    %177 = vmatpush2.msra.mxu0 0.0
    %178 = vmatprep.subr.mxu0 0.0
    %179 = vmatpush2.msra.mxu0 0.0
    %180 = vmatprep.subr.mxu0 0.0
    %181 = vmatpush2.msra.mxu0 0.0
    %182 = vmatprep.subr.mxu0 0.0
    %183 = vmatpush2.msra.mxu0 0.0
    %184 = vmatprep.subr.mxu0 0.0
    %185 = vmatpush2.msra.mxu0 0.0
    %186 = vmatprep.subr.mxu0 0.0
    %187 = vmatpush2.msra.mxu0 0.0
    %188 = vmatprep.subr.mxu0 0.0
    %189 = vmatpush2.msra.mxu0 0.0
    %190 = vmatprep.subr.mxu0 0.0
    %191 = vmatpush2.msra.mxu0 0.0
    %192 = vmatprep.subr.mxu0 0.0
    %193 = vmatpush2.msra.mxu0 0.0
    %194 = vmatprep.subr.mxu0 0.0
    %195 = vmatpush2.msra.mxu0 0.0
    %196 = vmatprep.subr.mxu0 0.0
    %197 = vmatpush2.msra.mxu0 0.0
    %198 = vmatprep.subr.mxu0 0.0
    %199 = vmatpush2.msra.mxu0 0.0
    %200 = vmatprep.subr.mxu0 0.0
    %201 = vmatpush2.msra.mxu0 0.0
    %202 = vmatprep.subr.mxu0 0.0
    %203 = vmatpush2.msra.mxu0 0.0
    %204 = vmatprep.mubr.f32.mxu0 0.0
    %205 = vmatmul.mubr.f32.gmra.mxu0 0.0
    %v206 = vpop.f32.mrf.mxu0
    %v207 = vadd.f32 %v121, %v206
    %v208 = vpop.f32.mrf.mxu0
    %v209 = vadd.f32 %v125, %v208
    %210 = vdwg.mxu0
    %211 = vmatprep.subr.mxu0 %v107
    %212 = vmatpush1.msra.mxu0 %v106
    %213 = vmatprep.subr.mxu0 %v103
    %214 = vmatpush1.msra.mxu0 %v102
    %215 = vmatprep.subr.mxu0 %v99
    %216 = vmatpush1.msra.mxu0 %v98
    %217 = vmatprep.subr.mxu0 %v95
    %218 = vmatpush1.msra.mxu0 %v94
    %219 = vmatprep.subr.mxu0 %v91
    %220 = vmatpush1.msra.mxu0 %v90
    %221 = vmatprep.subr.mxu0 %v87
    %222 = vmatpush1.msra.mxu0 %v86
    %223 = vmatprep.subr.mxu0 %v83
    %224 = vmatpush1.msra.mxu0 %v82
    %225 = vmatprep.subr.mxu0 %v79
    %226 = vmatpush1.msra.mxu0 %v78
    %227 = vmatprep.subr.mxu0 %v75
    %228 = vmatpush1.msra.mxu0 %v74
    %229 = vmatprep.subr.mxu0 %v71
    %230 = vmatpush1.msra.mxu0 %v70
    %231 = vmatprep.subr.mxu0 %v67
    %232 = vmatpush1.msra.mxu0 %v66
    %233 = vmatprep.subr.mxu0 %v63
    %234 = vmatpush1.msra.mxu0 %v62
    %235 = vmatprep.subr.mxu0 %v59
    %236 = vmatpush1.msra.mxu0 %v58
    %237 = vmatprep.subr.mxu0 %v55
    %238 = vmatpush1.msra.mxu0 %v54
    %239 = vmatprep.subr.mxu0 %v51
    %240 = vmatpush1.msra.mxu0 %v50
    %241 = vmatprep.subr.mxu0 %v47
    %242 = vmatpush1.msra.mxu0 %v46
    %243 = vmatprep.subr.mxu0 0.0
    %244 = vmatpush2.msra.mxu0 0.0
    %245 = vmatprep.subr.mxu0 0.0
    %246 = vmatpush2.msra.mxu0 0.0
    %247 = vmatprep.subr.mxu0 0.0
    %248 = vmatpush2.msra.mxu0 0.0
    %249 = vmatprep.subr.mxu0 0.0
    %250 = vmatpush2.msra.mxu0 0.0
    %251 = vmatprep.subr.mxu0 0.0
    %252 = vmatpush2.msra.mxu0 0.0
    %253 = vmatprep.subr.mxu0 0.0
    %254 = vmatpush2.msra.mxu0 0.0
    %255 = vmatprep.subr.mxu0 0.0
    %256 = vmatpush2.msra.mxu0 0.0
    %257 = vmatprep.subr.mxu0 0.0
    %258 = vmatpush2.msra.mxu0 0.0
    %259 = vmatprep.subr.mxu0 0.0
    %260 = vmatpush2.msra.mxu0 0.0
    %261 = vmatprep.subr.mxu0 0.0
    %262 = vmatpush2.msra.mxu0 0.0
    %263 = vmatprep.subr.mxu0 0.0
    %264 = vmatpush2.msra.mxu0 0.0
    %265 = vmatprep.subr.mxu0 0.0
    %266 = vmatpush2.msra.mxu0 0.0
    %267 = vmatprep.subr.mxu0 0.0
    %268 = vmatpush2.msra.mxu0 0.0
    %269 = vmatprep.subr.mxu0 0.0
    %270 = vmatpush2.msra.mxu0 0.0
    %271 = vmatprep.subr.mxu0 0.0
    %272 = vmatpush2.msra.mxu0 0.0
    %273 = vmatprep.subr.mxu0 0.0
    %274 = vmatpush2.msra.mxu0 0.0
    %275 = vmatprep.mubr.f32.mxu0 0.0
    %276 = vmatmul.mubr.f32.gmra.mxu0 0.0
    %v277 = vpop.f32.mrf.mxu0
    %v278 = vadd.f32 %v129, %v277
    %v279 = vpop.f32.mrf.mxu0
    %v280 = vadd.f32 %v133, %v279
    %281 = vdwg.mxu0
    %v282 = vld [vmem:[%s0] sm:$0x1]
    %v283 = vld [vmem:[%s0 + $0x8] sm:$0x1]
    %v284 = vld [vmem:[%s0 + $0x10] sm:$0x1]
    %v285 = vld [vmem:[%s0 + $0x18] sm:$0x1]
    %v286 = vld [vmem:[%s0 + $0x20] sm:$0x1]
    %v287 = vld [vmem:[%s0 + $0x28] sm:$0x1]
    %v288 = vld [vmem:[%s0 + $0x30] sm:$0x1]
    %v289 = vld [vmem:[%s0 + $0x38] sm:$0x1]
    %v298 = vrot.slane %v283, 7
    %vm299 = vcmask 1041409
    %v300 = vsel %vm299, %v298, %v282
    %v301 = vrot.slane %v284, 6
    %vm302 = vcmask 1042434
    %v303 = vsel %vm302, %v301, %v300
    %v304 = vrot.slane %v285, 5
    %vm305 = vcmask 1043459
    %v306 = vsel %vm305, %v304, %v303
    %v307 = vrot.slane %v286, 4
    %vm308 = vcmask 1044484
    %v309 = vsel %vm308, %v307, %v306
    %v310 = vrot.slane %v287, 3
    %vm311 = vcmask 1045509
    %v312 = vsel %vm311, %v310, %v309
    %v313 = vrot.slane %v288, 2
    %vm314 = vcmask 1046534
    %v315 = vsel %vm314, %v313, %v312
    %v316 = vrot.slane %v289, 1
    %vm317 = vcmask 1047559
    %v318 = vsel %vm317, %v316, %v315
    %vm319 = vcmask 130048
    %v320 = vsel %vm319, %v318, 0
    %322 = vmatprep.subr.mxu0 0.0
    %323 = vmatpush1.msra.mxu0 0.0
    %324 = vmatprep.subr.mxu0 0.0
    %325 = vmatpush1.msra.mxu0 0.0
    %326 = vmatprep.subr.mxu0 0.0
    %327 = vmatpush1.msra.mxu0 0.0
    %328 = vmatprep.subr.mxu0 0.0
    %329 = vmatpush1.msra.mxu0 0.0
    %330 = vmatprep.subr.mxu0 0.0
    %331 = vmatpush1.msra.mxu0 0.0
    %332 = vmatprep.subr.mxu0 0.0
    %333 = vmatpush1.msra.mxu0 0.0
    %334 = vmatprep.subr.mxu0 0.0
    %335 = vmatpush1.msra.mxu0 0.0
    %336 = vmatprep.subr.mxu0 0.0
    %337 = vmatpush1.msra.mxu0 0.0
    %338 = vmatprep.subr.mxu0 0.0
    %339 = vmatpush1.msra.mxu0 0.0
    %340 = vmatprep.subr.mxu0 0.0
    %341 = vmatpush1.msra.mxu0 0.0
    %342 = vmatprep.subr.mxu0 0.0
    %343 = vmatpush1.msra.mxu0 0.0
    %344 = vmatprep.subr.mxu0 0.0
    %345 = vmatpush1.msra.mxu0 0.0
    %346 = vmatprep.subr.mxu0 0.0
    %347 = vmatpush1.msra.mxu0 0.0
    %348 = vmatprep.subr.mxu0 0.0
    %349 = vmatpush1.msra.mxu0 0.0
    %350 = vmatprep.subr.mxu0 %v113
    %351 = vmatpush1.msra.mxu0 %v112
    %352 = vmatprep.subr.mxu0 %v109
    %353 = vmatpush1.msra.mxu0 %v108
    %354 = vmatprep.subr.mxu0 0.0
    %355 = vmatpush2.msra.mxu0 0.0
    %356 = vmatprep.subr.mxu0 0.0
    %357 = vmatpush2.msra.mxu0 0.0
    %358 = vmatprep.subr.mxu0 0.0
    %359 = vmatpush2.msra.mxu0 0.0
    %360 = vmatprep.subr.mxu0 0.0
    %361 = vmatpush2.msra.mxu0 0.0
    %362 = vmatprep.subr.mxu0 0.0
    %363 = vmatpush2.msra.mxu0 0.0
    %364 = vmatprep.subr.mxu0 0.0
    %365 = vmatpush2.msra.mxu0 0.0
    %366 = vmatprep.subr.mxu0 0.0
    %367 = vmatpush2.msra.mxu0 0.0
    %368 = vmatprep.subr.mxu0 0.0
    %369 = vmatpush2.msra.mxu0 0.0
    %370 = vmatprep.subr.mxu0 0.0
    %371 = vmatpush2.msra.mxu0 0.0
    %372 = vmatprep.subr.mxu0 0.0
    %373 = vmatpush2.msra.mxu0 0.0
    %374 = vmatprep.subr.mxu0 0.0
    %375 = vmatpush2.msra.mxu0 0.0
    %376 = vmatprep.subr.mxu0 0.0
    %377 = vmatpush2.msra.mxu0 0.0
    %378 = vmatprep.subr.mxu0 0.0
    %379 = vmatpush2.msra.mxu0 0.0
    %380 = vmatprep.subr.mxu0 0.0
    %381 = vmatpush2.msra.mxu0 0.0
    %382 = vmatprep.subr.mxu0 0.0
    %383 = vmatpush2.msra.mxu0 0.0
    %384 = vmatprep.subr.mxu0 0.0
    %385 = vmatpush2.msra.mxu0 0.0
    %386 = vmatprep.mubr.f32.mxu0 0.0
    %387 = vmatmul.mubr.f32.gmra.mxu0 %v320
    %v388 = vpop.f32.mrf.mxu0
    %v389 = vadd.f32 0.0, %v388
    %v390 = vpop.f32.mrf.mxu0
    %v391 = vadd.f32 0.0, %v390
    %392 = vdwg.mxu0
    %393 = vmatprep.subr.mxu0 0.0
    %394 = vmatpush1.msra.mxu0 0.0
    %395 = vmatprep.subr.mxu0 0.0
    %396 = vmatpush1.msra.mxu0 0.0
    %397 = vmatprep.subr.mxu0 0.0
    %398 = vmatpush1.msra.mxu0 0.0
    %399 = vmatprep.subr.mxu0 0.0
    %400 = vmatpush1.msra.mxu0 0.0
    %401 = vmatprep.subr.mxu0 0.0
    %402 = vmatpush1.msra.mxu0 0.0
    %403 = vmatprep.subr.mxu0 0.0
    %404 = vmatpush1.msra.mxu0 0.0
    %405 = vmatprep.subr.mxu0 0.0
    %406 = vmatpush1.msra.mxu0 0.0
    %407 = vmatprep.subr.mxu0 0.0
    %408 = vmatpush1.msra.mxu0 0.0
    %409 = vmatprep.subr.mxu0 0.0
    %410 = vmatpush1.msra.mxu0 0.0
    %411 = vmatprep.subr.mxu0 0.0
    %412 = vmatpush1.msra.mxu0 0.0
    %413 = vmatprep.subr.mxu0 0.0
    %414 = vmatpush1.msra.mxu0 0.0
    %415 = vmatprep.subr.mxu0 0.0
    %416 = vmatpush1.msra.mxu0 0.0
    %417 = vmatprep.subr.mxu0 0.0
    %418 = vmatpush1.msra.mxu0 0.0
    %419 = vmatprep.subr.mxu0 0.0
    %420 = vmatpush1.msra.mxu0 0.0
    %421 = vmatprep.subr.mxu0 %v115
    %422 = vmatpush1.msra.mxu0 %v114
    %423 = vmatprep.subr.mxu0 %v111
    %424 = vmatpush1.msra.mxu0 %v110
    %425 = vmatprep.subr.mxu0 0.0
    %426 = vmatpush2.msra.mxu0 0.0
    %427 = vmatprep.subr.mxu0 0.0
    %428 = vmatpush2.msra.mxu0 0.0
    %429 = vmatprep.subr.mxu0 0.0
    %430 = vmatpush2.msra.mxu0 0.0
    %431 = vmatprep.subr.mxu0 0.0
    %432 = vmatpush2.msra.mxu0 0.0
    %433 = vmatprep.subr.mxu0 0.0
    %434 = vmatpush2.msra.mxu0 0.0
    %435 = vmatprep.subr.mxu0 0.0
    %436 = vmatpush2.msra.mxu0 0.0
    %437 = vmatprep.subr.mxu0 0.0
    %438 = vmatpush2.msra.mxu0 0.0
    %439 = vmatprep.subr.mxu0 0.0
    %440 = vmatpush2.msra.mxu0 0.0
    %441 = vmatprep.subr.mxu0 0.0
    %442 = vmatpush2.msra.mxu0 0.0
    %443 = vmatprep.subr.mxu0 0.0
    %444 = vmatpush2.msra.mxu0 0.0
    %445 = vmatprep.subr.mxu0 0.0
    %446 = vmatpush2.msra.mxu0 0.0
    %447 = vmatprep.subr.mxu0 0.0
    %448 = vmatpush2.msra.mxu0 0.0
    %449 = vmatprep.subr.mxu0 0.0
    %450 = vmatpush2.msra.mxu0 0.0
    %451 = vmatprep.subr.mxu0 0.0
    %452 = vmatpush2.msra.mxu0 0.0
    %453 = vmatprep.subr.mxu0 0.0
    %454 = vmatpush2.msra.mxu0 0.0
    %455 = vmatprep.subr.mxu0 0.0
    %456 = vmatpush2.msra.mxu0 0.0
    %457 = vmatprep.mubr.f32.mxu0 0.0
    %458 = vmatmul.mubr.f32.gmra.mxu0 %v320
    %v459 = vpop.f32.mrf.mxu0
    %v460 = vadd.f32 0.0, %v459
    %v461 = vpop.f32.mrf.mxu0
    %v462 = vadd.f32 0.0, %v461
    %463 = vdwg.mxu0
    %v464 = vadd.f32 %v207, %v389
    %v465 = vadd.f32 %v209, %v391
    %v466 = vadd.f32 %v278, %v460
    %v467 = vadd.f32 %v280, %v462
    %v468 = vxor.u32 %v464, 2147483648
    %v469 = vmul.f32 %v468, 1.442695
    %v470 = vpow.pop %v469
    %v471 = vadd.f32 %v470, 1.0
    %v472 = vrcp.pop %v471
    %v473 = vmul.f32 1.0, %v472
    %v474 = vxor.u32 %v465, 2147483648
    %v475 = vmul.f32 %v474, 1.442695
    %v476 = vpow.pop %v475
    %v477 = vadd.f32 %v476, 1.0
    %v478 = vrcp.pop %v477
    %v479 = vmul.f32 1.0, %v478
    %v480 = vxor.u32 %v466, 2147483648
    %v481 = vmul.f32 %v480, 1.442695
    %v482 = vpow.pop %v481
    %v483 = vadd.f32 %v482, 1.0
    %v484 = vrcp.pop %v483
    %v485 = vmul.f32 1.0, %v484
    %v486 = vtanh.pop %v467
    %v487 = vmul.f32 %v479, 0.0
    %v488 = vmul.f32 %v473, %v486
    %v489 = vadd.f32 %v487, %v488
    %v490 = vtanh.pop %v489
    %v491 = vmul.f32 %v485, %v490
    %vm492 = vcmp.lt.s32.totalorder %v139, 32
    %v493 = vsel %vm492, %v489, 0.0
    %v494 = vsel %vm492, %v491, 0.0
    %495 = vmatprep.subr.mxu0 %v105
    %496 = vmatpush1.msra.mxu0 %v104
    %497 = vmatprep.subr.mxu0 %v101
    %498 = vmatpush1.msra.mxu0 %v100
    %499 = vmatprep.subr.mxu0 %v97
    %500 = vmatpush1.msra.mxu0 %v96
    %501 = vmatprep.subr.mxu0 %v93
    %502 = vmatpush1.msra.mxu0 %v92
    %503 = vmatprep.subr.mxu0 %v89
    %504 = vmatpush1.msra.mxu0 %v88
    %505 = vmatprep.subr.mxu0 %v85
    %506 = vmatpush1.msra.mxu0 %v84
    %507 = vmatprep.subr.mxu0 %v81
    %508 = vmatpush1.msra.mxu0 %v80
    %509 = vmatprep.subr.mxu0 %v77
    %510 = vmatpush1.msra.mxu0 %v76
    %511 = vmatprep.subr.mxu0 %v73
    %512 = vmatpush1.msra.mxu0 %v72
    %513 = vmatprep.subr.mxu0 %v69
    %514 = vmatpush1.msra.mxu0 %v68
    %515 = vmatprep.subr.mxu0 %v65
    %516 = vmatpush1.msra.mxu0 %v64
    %517 = vmatprep.subr.mxu0 %v61
    %518 = vmatpush1.msra.mxu0 %v60
    %519 = vmatprep.subr.mxu0 %v57
    %520 = vmatpush1.msra.mxu0 %v56
    %521 = vmatprep.subr.mxu0 %v53
    %522 = vmatpush1.msra.mxu0 %v52
    %523 = vmatprep.subr.mxu0 %v49
    %524 = vmatpush1.msra.mxu0 %v48
    %525 = vmatprep.subr.mxu0 %v45
    %526 = vmatpush1.msra.mxu0 %v44
    %527 = vmatprep.subr.mxu0 0.0
    %528 = vmatpush2.msra.mxu0 0.0
    %529 = vmatprep.subr.mxu0 0.0
    %530 = vmatpush2.msra.mxu0 0.0
    %531 = vmatprep.subr.mxu0 0.0
    %532 = vmatpush2.msra.mxu0 0.0
    %533 = vmatprep.subr.mxu0 0.0
    %534 = vmatpush2.msra.mxu0 0.0
    %535 = vmatprep.subr.mxu0 0.0
    %536 = vmatpush2.msra.mxu0 0.0
    %537 = vmatprep.subr.mxu0 0.0
    %538 = vmatpush2.msra.mxu0 0.0
    %539 = vmatprep.subr.mxu0 0.0
    %540 = vmatpush2.msra.mxu0 0.0
    %541 = vmatprep.subr.mxu0 0.0
    %542 = vmatpush2.msra.mxu0 0.0
    %543 = vmatprep.subr.mxu0 0.0
    %544 = vmatpush2.msra.mxu0 0.0
    %545 = vmatprep.subr.mxu0 0.0
    %546 = vmatpush2.msra.mxu0 0.0
    %547 = vmatprep.subr.mxu0 0.0
    %548 = vmatpush2.msra.mxu0 0.0
    %549 = vmatprep.subr.mxu0 0.0
    %550 = vmatpush2.msra.mxu0 0.0
    %551 = vmatprep.subr.mxu0 0.0
    %552 = vmatpush2.msra.mxu0 0.0
    %553 = vmatprep.subr.mxu0 0.0
    %554 = vmatpush2.msra.mxu0 0.0
    %555 = vmatprep.subr.mxu0 0.0
    %556 = vmatpush2.msra.mxu0 0.0
    %557 = vmatprep.subr.mxu0 0.0
    %558 = vmatpush2.msra.mxu0 0.0
    %559 = vmatprep.mubr.f32.mxu0 0.0
    %560 = vmatmul.mubr.f32.gmra.mxu0 %v494
    %v561 = vpop.f32.mrf.mxu0
    %v562 = vadd.f32 %v121, %v561
    %v563 = vpop.f32.mrf.mxu0
    %v564 = vadd.f32 %v125, %v563
    %565 = vdwg.mxu0
    %566 = vmatprep.subr.mxu0 %v107
    %567 = vmatpush1.msra.mxu0 %v106
    %568 = vmatprep.subr.mxu0 %v103
    %569 = vmatpush1.msra.mxu0 %v102
    %570 = vmatprep.subr.mxu0 %v99
    %571 = vmatpush1.msra.mxu0 %v98
    %572 = vmatprep.subr.mxu0 %v95
    %573 = vmatpush1.msra.mxu0 %v94
    %574 = vmatprep.subr.mxu0 %v91
    %575 = vmatpush1.msra.mxu0 %v90
    %576 = vmatprep.subr.mxu0 %v87
    %577 = vmatpush1.msra.mxu0 %v86
    %578 = vmatprep.subr.mxu0 %v83
    %579 = vmatpush1.msra.mxu0 %v82
    %580 = vmatprep.subr.mxu0 %v79
    %581 = vmatpush1.msra.mxu0 %v78
    %582 = vmatprep.subr.mxu0 %v75
    %583 = vmatpush1.msra.mxu0 %v74
    %584 = vmatprep.subr.mxu0 %v71
    %585 = vmatpush1.msra.mxu0 %v70
    %586 = vmatprep.subr.mxu0 %v67
    %587 = vmatpush1.msra.mxu0 %v66
    %588 = vmatprep.subr.mxu0 %v63
    %589 = vmatpush1.msra.mxu0 %v62
    %590 = vmatprep.subr.mxu0 %v59
    %591 = vmatpush1.msra.mxu0 %v58
    %592 = vmatprep.subr.mxu0 %v55
    %593 = vmatpush1.msra.mxu0 %v54
    %594 = vmatprep.subr.mxu0 %v51
    %595 = vmatpush1.msra.mxu0 %v50
    %596 = vmatprep.subr.mxu0 %v47
    %597 = vmatpush1.msra.mxu0 %v46
    %598 = vmatprep.subr.mxu0 0.0
    %599 = vmatpush2.msra.mxu0 0.0
    %600 = vmatprep.subr.mxu0 0.0
    %601 = vmatpush2.msra.mxu0 0.0
    %602 = vmatprep.subr.mxu0 0.0
    %603 = vmatpush2.msra.mxu0 0.0
    %604 = vmatprep.subr.mxu0 0.0
    %605 = vmatpush2.msra.mxu0 0.0
    %606 = vmatprep.subr.mxu0 0.0
    %607 = vmatpush2.msra.mxu0 0.0
    %608 = vmatprep.subr.mxu0 0.0
    %609 = vmatpush2.msra.mxu0 0.0
    %610 = vmatprep.subr.mxu0 0.0
    %611 = vmatpush2.msra.mxu0 0.0
    %612 = vmatprep.subr.mxu0 0.0
    %613 = vmatpush2.msra.mxu0 0.0
    %614 = vmatprep.subr.mxu0 0.0
    %615 = vmatpush2.msra.mxu0 0.0
    %616 = vmatprep.subr.mxu0 0.0
    %617 = vmatpush2.msra.mxu0 0.0
    %618 = vmatprep.subr.mxu0 0.0
    %619 = vmatpush2.msra.mxu0 0.0
    %620 = vmatprep.subr.mxu0 0.0
    %621 = vmatpush2.msra.mxu0 0.0
    %622 = vmatprep.subr.mxu0 0.0
    %623 = vmatpush2.msra.mxu0 0.0
    %624 = vmatprep.subr.mxu0 0.0
    %625 = vmatpush2.msra.mxu0 0.0
    %626 = vmatprep.subr.mxu0 0.0
    %627 = vmatpush2.msra.mxu0 0.0
    %628 = vmatprep.subr.mxu0 0.0
    %629 = vmatpush2.msra.mxu0 0.0
    %630 = vmatprep.mubr.f32.mxu0 0.0
    %631 = vmatmul.mubr.f32.gmra.mxu0 %v494
    %v632 = vpop.f32.mrf.mxu0
    %v633 = vadd.f32 %v129, %v632
    %v634 = vpop.f32.mrf.mxu0
    %v635 = vadd.f32 %v133, %v634
    %636 = vdwg.mxu0
    %v637 = vld [vmem:[%s0 + $0x1] sm:$0x1]
    %v638 = vld [vmem:[%s0 + $0x9] sm:$0x1]
    %v639 = vld [vmem:[%s0 + $0x11] sm:$0x1]
    %v640 = vld [vmem:[%s0 + $0x19] sm:$0x1]
    %v641 = vld [vmem:[%s0 + $0x21] sm:$0x1]
    %v642 = vld [vmem:[%s0 + $0x29] sm:$0x1]
    %v643 = vld [vmem:[%s0 + $0x31] sm:$0x1]
    %v644 = vld [vmem:[%s0 + $0x39] sm:$0x1]
    %v653 = vrot.slane %v638, 7
    %v654 = vsel %vm299, %v653, %v637
    %v655 = vrot.slane %v639, 6
    %v656 = vsel %vm302, %v655, %v654
    %v657 = vrot.slane %v640, 5
    %v658 = vsel %vm305, %v657, %v656
    %v659 = vrot.slane %v641, 4
    %v660 = vsel %vm308, %v659, %v658
    %v661 = vrot.slane %v642, 3
    %v662 = vsel %vm311, %v661, %v660
    %v663 = vrot.slane %v643, 2
    %v664 = vsel %vm314, %v663, %v662
    %v665 = vrot.slane %v644, 1
    %v666 = vsel %vm317, %v665, %v664
    %v667 = vsel %vm319, %v666, 0
    %669 = vmatprep.subr.mxu0 0.0
    %670 = vmatpush1.msra.mxu0 0.0
    %671 = vmatprep.subr.mxu0 0.0
    %672 = vmatpush1.msra.mxu0 0.0
    %673 = vmatprep.subr.mxu0 0.0
    %674 = vmatpush1.msra.mxu0 0.0
    %675 = vmatprep.subr.mxu0 0.0
    %676 = vmatpush1.msra.mxu0 0.0
    %677 = vmatprep.subr.mxu0 0.0
    %678 = vmatpush1.msra.mxu0 0.0
    %679 = vmatprep.subr.mxu0 0.0
    %680 = vmatpush1.msra.mxu0 0.0
    %681 = vmatprep.subr.mxu0 0.0
    %682 = vmatpush1.msra.mxu0 0.0
    %683 = vmatprep.subr.mxu0 0.0
    %684 = vmatpush1.msra.mxu0 0.0
    %685 = vmatprep.subr.mxu0 0.0
    %686 = vmatpush1.msra.mxu0 0.0
    %687 = vmatprep.subr.mxu0 0.0
    %688 = vmatpush1.msra.mxu0 0.0
    %689 = vmatprep.subr.mxu0 0.0
    %690 = vmatpush1.msra.mxu0 0.0
    %691 = vmatprep.subr.mxu0 0.0
    %692 = vmatpush1.msra.mxu0 0.0
    %693 = vmatprep.subr.mxu0 0.0
    %694 = vmatpush1.msra.mxu0 0.0
    %695 = vmatprep.subr.mxu0 0.0
    %696 = vmatpush1.msra.mxu0 0.0
    %697 = vmatprep.subr.mxu0 %v113
    %698 = vmatpush1.msra.mxu0 %v112
    %699 = vmatprep.subr.mxu0 %v109
    %700 = vmatpush1.msra.mxu0 %v108
    %701 = vmatprep.subr.mxu0 0.0
    %702 = vmatpush2.msra.mxu0 0.0
    %703 = vmatprep.subr.mxu0 0.0
    %704 = vmatpush2.msra.mxu0 0.0
    %705 = vmatprep.subr.mxu0 0.0
    %706 = vmatpush2.msra.mxu0 0.0
    %707 = vmatprep.subr.mxu0 0.0
    %708 = vmatpush2.msra.mxu0 0.0
    %709 = vmatprep.subr.mxu0 0.0
    %710 = vmatpush2.msra.mxu0 0.0
    %711 = vmatprep.subr.mxu0 0.0
    %712 = vmatpush2.msra.mxu0 0.0
    %713 = vmatprep.subr.mxu0 0.0
    %714 = vmatpush2.msra.mxu0 0.0
    %715 = vmatprep.subr.mxu0 0.0
    %716 = vmatpush2.msra.mxu0 0.0
    %717 = vmatprep.subr.mxu0 0.0
    %718 = vmatpush2.msra.mxu0 0.0
    %719 = vmatprep.subr.mxu0 0.0
    %720 = vmatpush2.msra.mxu0 0.0
    %721 = vmatprep.subr.mxu0 0.0
    %722 = vmatpush2.msra.mxu0 0.0
    %723 = vmatprep.subr.mxu0 0.0
    %724 = vmatpush2.msra.mxu0 0.0
    %725 = vmatprep.subr.mxu0 0.0
    %726 = vmatpush2.msra.mxu0 0.0
    %727 = vmatprep.subr.mxu0 0.0
    %728 = vmatpush2.msra.mxu0 0.0
    %729 = vmatprep.subr.mxu0 0.0
    %730 = vmatpush2.msra.mxu0 0.0
    %731 = vmatprep.subr.mxu0 0.0
    %732 = vmatpush2.msra.mxu0 0.0
    %733 = vmatprep.mubr.f32.mxu0 0.0
    %734 = vmatmul.mubr.f32.gmra.mxu0 %v667
    %v735 = vpop.f32.mrf.mxu0
    %v736 = vadd.f32 0.0, %v735
    %v737 = vpop.f32.mrf.mxu0
    %v738 = vadd.f32 0.0, %v737
    %739 = vdwg.mxu0
    %740 = vmatprep.subr.mxu0 0.0
    %741 = vmatpush1.msra.mxu0 0.0
    %742 = vmatprep.subr.mxu0 0.0
    %743 = vmatpush1.msra.mxu0 0.0
    %744 = vmatprep.subr.mxu0 0.0
    %745 = vmatpush1.msra.mxu0 0.0
    %746 = vmatprep.subr.mxu0 0.0
    %747 = vmatpush1.msra.mxu0 0.0
    %748 = vmatprep.subr.mxu0 0.0
    %749 = vmatpush1.msra.mxu0 0.0
    %750 = vmatprep.subr.mxu0 0.0
    %751 = vmatpush1.msra.mxu0 0.0
    %752 = vmatprep.subr.mxu0 0.0
    %753 = vmatpush1.msra.mxu0 0.0
    %754 = vmatprep.subr.mxu0 0.0
    %755 = vmatpush1.msra.mxu0 0.0
    %756 = vmatprep.subr.mxu0 0.0
    %757 = vmatpush1.msra.mxu0 0.0
    %758 = vmatprep.subr.mxu0 0.0
    %759 = vmatpush1.msra.mxu0 0.0
    %760 = vmatprep.subr.mxu0 0.0
    %761 = vmatpush1.msra.mxu0 0.0
    %762 = vmatprep.subr.mxu0 0.0
    %763 = vmatpush1.msra.mxu0 0.0
    %764 = vmatprep.subr.mxu0 0.0
    %765 = vmatpush1.msra.mxu0 0.0
    %766 = vmatprep.subr.mxu0 0.0
    %767 = vmatpush1.msra.mxu0 0.0
    %768 = vmatprep.subr.mxu0 %v115
    %769 = vmatpush1.msra.mxu0 %v114
    %770 = vmatprep.subr.mxu0 %v111
    %771 = vmatpush1.msra.mxu0 %v110
    %772 = vmatprep.subr.mxu0 0.0
    %773 = vmatpush2.msra.mxu0 0.0
    %774 = vmatprep.subr.mxu0 0.0
    %775 = vmatpush2.msra.mxu0 0.0
    %776 = vmatprep.subr.mxu0 0.0
    %777 = vmatpush2.msra.mxu0 0.0
    %778 = vmatprep.subr.mxu0 0.0
    %779 = vmatpush2.msra.mxu0 0.0
    %780 = vmatprep.subr.mxu0 0.0
    %781 = vmatpush2.msra.mxu0 0.0
    %782 = vmatprep.subr.mxu0 0.0
    %783 = vmatpush2.msra.mxu0 0.0
    %784 = vmatprep.subr.mxu0 0.0
    %785 = vmatpush2.msra.mxu0 0.0
    %786 = vmatprep.subr.mxu0 0.0
    %787 = vmatpush2.msra.mxu0 0.0
    %788 = vmatprep.subr.mxu0 0.0
    %789 = vmatpush2.msra.mxu0 0.0
    %790 = vmatprep.subr.mxu0 0.0
    %791 = vmatpush2.msra.mxu0 0.0
    %792 = vmatprep.subr.mxu0 0.0
    %793 = vmatpush2.msra.mxu0 0.0
    %794 = vmatprep.subr.mxu0 0.0
    %795 = vmatpush2.msra.mxu0 0.0
    %796 = vmatprep.subr.mxu0 0.0
    %797 = vmatpush2.msra.mxu0 0.0
    %798 = vmatprep.subr.mxu0 0.0
    %799 = vmatpush2.msra.mxu0 0.0
    %800 = vmatprep.subr.mxu0 0.0
    %801 = vmatpush2.msra.mxu0 0.0
    %802 = vmatprep.subr.mxu0 0.0
    %803 = vmatpush2.msra.mxu0 0.0
    %804 = vmatprep.mubr.f32.mxu0 0.0
    %805 = vmatmul.mubr.f32.gmra.mxu0 %v667
    %v806 = vpop.f32.mrf.mxu0
    %v807 = vadd.f32 0.0, %v806
    %v808 = vpop.f32.mrf.mxu0
    %v809 = vadd.f32 0.0, %v808
    %810 = vdwg.mxu0
    %v811 = vadd.f32 %v562, %v736
    %v812 = vadd.f32 %v564, %v738
    %v813 = vadd.f32 %v633, %v807
    %v814 = vadd.f32 %v635, %v809
    %v815 = vxor.u32 %v811, 2147483648
    %v816 = vmul.f32 %v815, 1.442695
    %v817 = vpow.pop %v816
    %v818 = vadd.f32 %v817, 1.0
    %v819 = vrcp.pop %v818
    %v820 = vmul.f32 1.0, %v819
    %v821 = vxor.u32 %v812, 2147483648
    %v822 = vmul.f32 %v821, 1.442695
    %v823 = vpow.pop %v822
    %v824 = vadd.f32 %v823, 1.0
    %v825 = vrcp.pop %v824
    %v826 = vmul.f32 1.0, %v825
    %v827 = vxor.u32 %v813, 2147483648
    %v828 = vmul.f32 %v827, 1.442695
    %v829 = vpow.pop %v828
    %v830 = vadd.f32 %v829, 1.0
    %v831 = vrcp.pop %v830
    %v832 = vmul.f32 1.0, %v831
    %v833 = vtanh.pop %v814
    %v834 = vmul.f32 %v826, %v493
    %v835 = vmul.f32 %v820, %v833
    %v836 = vadd.f32 %v834, %v835
    %v837 = vtanh.pop %v836
    %v838 = vmul.f32 %v832, %v837
    %vm839 = vcmp.lt.s32.totalorder %v139, 64
    %v840 = vsel %vm839, %v836, %v493
    %v841 = vsel %vm839, %v838, %v494
    %842 = vmatprep.subr.mxu0 %v105
    %843 = vmatpush1.msra.mxu0 %v104
    %844 = vmatprep.subr.mxu0 %v101
    %845 = vmatpush1.msra.mxu0 %v100
    %846 = vmatprep.subr.mxu0 %v97
    %847 = vmatpush1.msra.mxu0 %v96
    %848 = vmatprep.subr.mxu0 %v93
    %849 = vmatpush1.msra.mxu0 %v92
    %850 = vmatprep.subr.mxu0 %v89
    %851 = vmatpush1.msra.mxu0 %v88
    %852 = vmatprep.subr.mxu0 %v85
    %853 = vmatpush1.msra.mxu0 %v84
    %854 = vmatprep.subr.mxu0 %v81
    %855 = vmatpush1.msra.mxu0 %v80
    %856 = vmatprep.subr.mxu0 %v77
    %857 = vmatpush1.msra.mxu0 %v76
    %858 = vmatprep.subr.mxu0 %v73
    %859 = vmatpush1.msra.mxu0 %v72
    %860 = vmatprep.subr.mxu0 %v69
    %861 = vmatpush1.msra.mxu0 %v68
    %862 = vmatprep.subr.mxu0 %v65
    %863 = vmatpush1.msra.mxu0 %v64
    %864 = vmatprep.subr.mxu0 %v61
    %865 = vmatpush1.msra.mxu0 %v60
    %866 = vmatprep.subr.mxu0 %v57
    %867 = vmatpush1.msra.mxu0 %v56
    %868 = vmatprep.subr.mxu0 %v53
    %869 = vmatpush1.msra.mxu0 %v52
    %870 = vmatprep.subr.mxu0 %v49
    %871 = vmatpush1.msra.mxu0 %v48
    %872 = vmatprep.subr.mxu0 %v45
    %873 = vmatpush1.msra.mxu0 %v44
    %874 = vmatprep.subr.mxu0 0.0
    %875 = vmatpush2.msra.mxu0 0.0
    %876 = vmatprep.subr.mxu0 0.0
    %877 = vmatpush2.msra.mxu0 0.0
    %878 = vmatprep.subr.mxu0 0.0
    %879 = vmatpush2.msra.mxu0 0.0
    %880 = vmatprep.subr.mxu0 0.0
    %881 = vmatpush2.msra.mxu0 0.0
    %882 = vmatprep.subr.mxu0 0.0
    %883 = vmatpush2.msra.mxu0 0.0
    %884 = vmatprep.subr.mxu0 0.0
    %885 = vmatpush2.msra.mxu0 0.0
    %886 = vmatprep.subr.mxu0 0.0
    %887 = vmatpush2.msra.mxu0 0.0
    %888 = vmatprep.subr.mxu0 0.0
    %889 = vmatpush2.msra.mxu0 0.0
    %890 = vmatprep.subr.mxu0 0.0
    %891 = vmatpush2.msra.mxu0 0.0
    %892 = vmatprep.subr.mxu0 0.0
    %893 = vmatpush2.msra.mxu0 0.0
    %894 = vmatprep.subr.mxu0 0.0
    %895 = vmatpush2.msra.mxu0 0.0
    %896 = vmatprep.subr.mxu0 0.0
    %897 = vmatpush2.msra.mxu0 0.0
    %898 = vmatprep.subr.mxu0 0.0
    %899 = vmatpush2.msra.mxu0 0.0
    %900 = vmatprep.subr.mxu0 0.0
    %901 = vmatpush2.msra.mxu0 0.0
    %902 = vmatprep.subr.mxu0 0.0
    %903 = vmatpush2.msra.mxu0 0.0
    %904 = vmatprep.subr.mxu0 0.0
    %905 = vmatpush2.msra.mxu0 0.0
    %906 = vmatprep.mubr.f32.mxu0 0.0
    %907 = vmatmul.mubr.f32.gmra.mxu0 %v841
    %v908 = vpop.f32.mrf.mxu0
    %v909 = vadd.f32 %v121, %v908
    %v910 = vpop.f32.mrf.mxu0
    %v911 = vadd.f32 %v125, %v910
    %912 = vdwg.mxu0
    %913 = vmatprep.subr.mxu0 %v107
    %914 = vmatpush1.msra.mxu0 %v106
    %915 = vmatprep.subr.mxu0 %v103
    %916 = vmatpush1.msra.mxu0 %v102
    %917 = vmatprep.subr.mxu0 %v99
    %918 = vmatpush1.msra.mxu0 %v98
    %919 = vmatprep.subr.mxu0 %v95
    %920 = vmatpush1.msra.mxu0 %v94
    %921 = vmatprep.subr.mxu0 %v91
    %922 = vmatpush1.msra.mxu0 %v90
    %923 = vmatprep.subr.mxu0 %v87
    %924 = vmatpush1.msra.mxu0 %v86
    %925 = vmatprep.subr.mxu0 %v83
    %926 = vmatpush1.msra.mxu0 %v82
    %927 = vmatprep.subr.mxu0 %v79
    %928 = vmatpush1.msra.mxu0 %v78
    %929 = vmatprep.subr.mxu0 %v75
    %930 = vmatpush1.msra.mxu0 %v74
    %931 = vmatprep.subr.mxu0 %v71
    %932 = vmatpush1.msra.mxu0 %v70
    %933 = vmatprep.subr.mxu0 %v67
    %934 = vmatpush1.msra.mxu0 %v66
    %935 = vmatprep.subr.mxu0 %v63
    %936 = vmatpush1.msra.mxu0 %v62
    %937 = vmatprep.subr.mxu0 %v59
    %938 = vmatpush1.msra.mxu0 %v58
    %939 = vmatprep.subr.mxu0 %v55
    %940 = vmatpush1.msra.mxu0 %v54
    %941 = vmatprep.subr.mxu0 %v51
    %942 = vmatpush1.msra.mxu0 %v50
    %943 = vmatprep.subr.mxu0 %v47
    %944 = vmatpush1.msra.mxu0 %v46
    %945 = vmatprep.subr.mxu0 0.0
    %946 = vmatpush2.msra.mxu0 0.0
    %947 = vmatprep.subr.mxu0 0.0
    %948 = vmatpush2.msra.mxu0 0.0
    %949 = vmatprep.subr.mxu0 0.0
    %950 = vmatpush2.msra.mxu0 0.0
    %951 = vmatprep.subr.mxu0 0.0
    %952 = vmatpush2.msra.mxu0 0.0
    %953 = vmatprep.subr.mxu0 0.0
    %954 = vmatpush2.msra.mxu0 0.0
    %955 = vmatprep.subr.mxu0 0.0
    %956 = vmatpush2.msra.mxu0 0.0
    %957 = vmatprep.subr.mxu0 0.0
    %958 = vmatpush2.msra.mxu0 0.0
    %959 = vmatprep.subr.mxu0 0.0
    %960 = vmatpush2.msra.mxu0 0.0
    %961 = vmatprep.subr.mxu0 0.0
    %962 = vmatpush2.msra.mxu0 0.0
    %963 = vmatprep.subr.mxu0 0.0
    %964 = vmatpush2.msra.mxu0 0.0
    %965 = vmatprep.subr.mxu0 0.0
    %966 = vmatpush2.msra.mxu0 0.0
    %967 = vmatprep.subr.mxu0 0.0
    %968 = vmatpush2.msra.mxu0 0.0
    %969 = vmatprep.subr.mxu0 0.0
    %970 = vmatpush2.msra.mxu0 0.0
    %971 = vmatprep.subr.mxu0 0.0
    %972 = vmatpush2.msra.mxu0 0.0
    %973 = vmatprep.subr.mxu0 0.0
    %974 = vmatpush2.msra.mxu0 0.0
    %975 = vmatprep.subr.mxu0 0.0
    %976 = vmatpush2.msra.mxu0 0.0
    %977 = vmatprep.mubr.f32.mxu0 0.0
    %978 = vmatmul.mubr.f32.gmra.mxu0 %v841
    %v979 = vpop.f32.mrf.mxu0
    %v980 = vadd.f32 %v129, %v979
    %v981 = vpop.f32.mrf.mxu0
    %v982 = vadd.f32 %v133, %v981
    %983 = vdwg.mxu0
    %v984 = vld [vmem:[%s0 + $0x2] sm:$0x1]
    %v985 = vld [vmem:[%s0 + $0xa] sm:$0x1]
    %v986 = vld [vmem:[%s0 + $0x12] sm:$0x1]
    %v987 = vld [vmem:[%s0 + $0x1a] sm:$0x1]
    %v988 = vld [vmem:[%s0 + $0x22] sm:$0x1]
    %v989 = vld [vmem:[%s0 + $0x2a] sm:$0x1]
    %v990 = vld [vmem:[%s0 + $0x32] sm:$0x1]
    %v991 = vld [vmem:[%s0 + $0x3a] sm:$0x1]
    %v1000 = vrot.slane %v985, 7
    %v1001 = vsel %vm299, %v1000, %v984
    %v1002 = vrot.slane %v986, 6
    %v1003 = vsel %vm302, %v1002, %v1001
    %v1004 = vrot.slane %v987, 5
    %v1005 = vsel %vm305, %v1004, %v1003
    %v1006 = vrot.slane %v988, 4
    %v1007 = vsel %vm308, %v1006, %v1005
    %v1008 = vrot.slane %v989, 3
    %v1009 = vsel %vm311, %v1008, %v1007
    %v1010 = vrot.slane %v990, 2
    %v1011 = vsel %vm314, %v1010, %v1009
    %v1012 = vrot.slane %v991, 1
    %v1013 = vsel %vm317, %v1012, %v1011
    %v1014 = vsel %vm319, %v1013, 0
    %1016 = vmatprep.subr.mxu0 0.0
    %1017 = vmatpush1.msra.mxu0 0.0
    %1018 = vmatprep.subr.mxu0 0.0
    %1019 = vmatpush1.msra.mxu0 0.0
    %1020 = vmatprep.subr.mxu0 0.0
    %1021 = vmatpush1.msra.mxu0 0.0
    %1022 = vmatprep.subr.mxu0 0.0
    %1023 = vmatpush1.msra.mxu0 0.0
    %1024 = vmatprep.subr.mxu0 0.0
    %1025 = vmatpush1.msra.mxu0 0.0
    %1026 = vmatprep.subr.mxu0 0.0
    %1027 = vmatpush1.msra.mxu0 0.0
    %1028 = vmatprep.subr.mxu0 0.0
    %1029 = vmatpush1.msra.mxu0 0.0
    %1030 = vmatprep.subr.mxu0 0.0
    %1031 = vmatpush1.msra.mxu0 0.0
    %1032 = vmatprep.subr.mxu0 0.0
    %1033 = vmatpush1.msra.mxu0 0.0
    %1034 = vmatprep.subr.mxu0 0.0
    %1035 = vmatpush1.msra.mxu0 0.0
    %1036 = vmatprep.subr.mxu0 0.0
    %1037 = vmatpush1.msra.mxu0 0.0
    %1038 = vmatprep.subr.mxu0 0.0
    %1039 = vmatpush1.msra.mxu0 0.0
    %1040 = vmatprep.subr.mxu0 0.0
    %1041 = vmatpush1.msra.mxu0 0.0
    %1042 = vmatprep.subr.mxu0 0.0
    %1043 = vmatpush1.msra.mxu0 0.0
    %1044 = vmatprep.subr.mxu0 %v113
    %1045 = vmatpush1.msra.mxu0 %v112
    %1046 = vmatprep.subr.mxu0 %v109
    %1047 = vmatpush1.msra.mxu0 %v108
    %1048 = vmatprep.subr.mxu0 0.0
    %1049 = vmatpush2.msra.mxu0 0.0
    %1050 = vmatprep.subr.mxu0 0.0
    %1051 = vmatpush2.msra.mxu0 0.0
    %1052 = vmatprep.subr.mxu0 0.0
    %1053 = vmatpush2.msra.mxu0 0.0
    %1054 = vmatprep.subr.mxu0 0.0
    %1055 = vmatpush2.msra.mxu0 0.0
    %1056 = vmatprep.subr.mxu0 0.0
    %1057 = vmatpush2.msra.mxu0 0.0
    %1058 = vmatprep.subr.mxu0 0.0
    %1059 = vmatpush2.msra.mxu0 0.0
    %1060 = vmatprep.subr.mxu0 0.0
    %1061 = vmatpush2.msra.mxu0 0.0
    %1062 = vmatprep.subr.mxu0 0.0
    %1063 = vmatpush2.msra.mxu0 0.0
    %1064 = vmatprep.subr.mxu0 0.0
    %1065 = vmatpush2.msra.mxu0 0.0
    %1066 = vmatprep.subr.mxu0 0.0
    %1067 = vmatpush2.msra.mxu0 0.0
    %1068 = vmatprep.subr.mxu0 0.0
    %1069 = vmatpush2.msra.mxu0 0.0
    %1070 = vmatprep.subr.mxu0 0.0
    %1071 = vmatpush2.msra.mxu0 0.0
    %1072 = vmatprep.subr.mxu0 0.0
    %1073 = vmatpush2.msra.mxu0 0.0
    %1074 = vmatprep.subr.mxu0 0.0
    %1075 = vmatpush2.msra.mxu0 0.0
    %1076 = vmatprep.subr.mxu0 0.0
    %1077 = vmatpush2.msra.mxu0 0.0
    %1078 = vmatprep.subr.mxu0 0.0
    %1079 = vmatpush2.msra.mxu0 0.0
    %1080 = vmatprep.mubr.f32.mxu0 0.0
    %1081 = vmatmul.mubr.f32.gmra.mxu0 %v1014
    %v1082 = vpop.f32.mrf.mxu0
    %v1083 = vadd.f32 0.0, %v1082
    %v1084 = vpop.f32.mrf.mxu0
    %v1085 = vadd.f32 0.0, %v1084
    %1086 = vdwg.mxu0
    %1087 = vmatprep.subr.mxu0 0.0
    %1088 = vmatpush1.msra.mxu0 0.0
    %1089 = vmatprep.subr.mxu0 0.0
    %1090 = vmatpush1.msra.mxu0 0.0
    %1091 = vmatprep.subr.mxu0 0.0
    %1092 = vmatpush1.msra.mxu0 0.0
    %1093 = vmatprep.subr.mxu0 0.0
    %1094 = vmatpush1.msra.mxu0 0.0
    %1095 = vmatprep.subr.mxu0 0.0
    %1096 = vmatpush1.msra.mxu0 0.0
    %1097 = vmatprep.subr.mxu0 0.0
    %1098 = vmatpush1.msra.mxu0 0.0
    %1099 = vmatprep.subr.mxu0 0.0
    %1100 = vmatpush1.msra.mxu0 0.0
    %1101 = vmatprep.subr.mxu0 0.0
    %1102 = vmatpush1.msra.mxu0 0.0
    %1103 = vmatprep.subr.mxu0 0.0
    %1104 = vmatpush1.msra.mxu0 0.0
    %1105 = vmatprep.subr.mxu0 0.0
    %1106 = vmatpush1.msra.mxu0 0.0
    %1107 = vmatprep.subr.mxu0 0.0
    %1108 = vmatpush1.msra.mxu0 0.0
    %1109 = vmatprep.subr.mxu0 0.0
    %1110 = vmatpush1.msra.mxu0 0.0
    %1111 = vmatprep.subr.mxu0 0.0
    %1112 = vmatpush1.msra.mxu0 0.0
    %1113 = vmatprep.subr.mxu0 0.0
    %1114 = vmatpush1.msra.mxu0 0.0
    %1115 = vmatprep.subr.mxu0 %v115
    %1116 = vmatpush1.msra.mxu0 %v114
    %1117 = vmatprep.subr.mxu0 %v111
    %1118 = vmatpush1.msra.mxu0 %v110
    %1119 = vmatprep.subr.mxu0 0.0
    %1120 = vmatpush2.msra.mxu0 0.0
    %1121 = vmatprep.subr.mxu0 0.0
    %1122 = vmatpush2.msra.mxu0 0.0
    %1123 = vmatprep.subr.mxu0 0.0
    %1124 = vmatpush2.msra.mxu0 0.0
    %1125 = vmatprep.subr.mxu0 0.0
    %1126 = vmatpush2.msra.mxu0 0.0
    %1127 = vmatprep.subr.mxu0 0.0
    %1128 = vmatpush2.msra.mxu0 0.0
    %1129 = vmatprep.subr.mxu0 0.0
    %1130 = vmatpush2.msra.mxu0 0.0
    %1131 = vmatprep.subr.mxu0 0.0
    %1132 = vmatpush2.msra.mxu0 0.0
    %1133 = vmatprep.subr.mxu0 0.0
    %1134 = vmatpush2.msra.mxu0 0.0
    %1135 = vmatprep.subr.mxu0 0.0
    %1136 = vmatpush2.msra.mxu0 0.0
    %1137 = vmatprep.subr.mxu0 0.0
    %1138 = vmatpush2.msra.mxu0 0.0
    %1139 = vmatprep.subr.mxu0 0.0
    %1140 = vmatpush2.msra.mxu0 0.0
    %1141 = vmatprep.subr.mxu0 0.0
    %1142 = vmatpush2.msra.mxu0 0.0
    %1143 = vmatprep.subr.mxu0 0.0
    %1144 = vmatpush2.msra.mxu0 0.0
    %1145 = vmatprep.subr.mxu0 0.0
    %1146 = vmatpush2.msra.mxu0 0.0
    %1147 = vmatprep.subr.mxu0 0.0
    %1148 = vmatpush2.msra.mxu0 0.0
    %1149 = vmatprep.subr.mxu0 0.0
    %1150 = vmatpush2.msra.mxu0 0.0
    %1151 = vmatprep.mubr.f32.mxu0 0.0
    %1152 = vmatmul.mubr.f32.gmra.mxu0 %v1014
    %v1153 = vpop.f32.mrf.mxu0
    %v1154 = vadd.f32 0.0, %v1153
    %v1155 = vpop.f32.mrf.mxu0
    %v1156 = vadd.f32 0.0, %v1155
    %1157 = vdwg.mxu0
    %v1158 = vadd.f32 %v909, %v1083
    %v1159 = vadd.f32 %v911, %v1085
    %v1160 = vadd.f32 %v980, %v1154
    %v1161 = vadd.f32 %v982, %v1156
    %v1162 = vxor.u32 %v1158, 2147483648
    %v1163 = vmul.f32 %v1162, 1.442695
    %v1164 = vpow.pop %v1163
    %v1165 = vadd.f32 %v1164, 1.0
    %v1166 = vrcp.pop %v1165
    %v1167 = vmul.f32 1.0, %v1166
    %v1168 = vxor.u32 %v1159, 2147483648
    %v1169 = vmul.f32 %v1168, 1.442695
    %v1170 = vpow.pop %v1169
    %v1171 = vadd.f32 %v1170, 1.0
    %v1172 = vrcp.pop %v1171
    %v1173 = vmul.f32 1.0, %v1172
    %v1174 = vxor.u32 %v1160, 2147483648
    %v1175 = vmul.f32 %v1174, 1.442695
    %v1176 = vpow.pop %v1175
    %v1177 = vadd.f32 %v1176, 1.0
    %v1178 = vrcp.pop %v1177
    %v1179 = vmul.f32 1.0, %v1178
    %v1180 = vtanh.pop %v1161
    %v1181 = vmul.f32 %v1173, %v840
    %v1182 = vmul.f32 %v1167, %v1180
    %v1183 = vadd.f32 %v1181, %v1182
    %v1184 = vtanh.pop %v1183
    %v1185 = vmul.f32 %v1179, %v1184
    %vm1186 = vcmp.lt.s32.totalorder %v139, 96
    %v1187 = vsel %vm1186, %v1183, %v840
    %v1188 = vsel %vm1186, %v1185, %v841
    %1189 = vmatprep.subr.mxu0 %v105
    %1190 = vmatpush1.msra.mxu0 %v104
    %1191 = vmatprep.subr.mxu0 %v101
    %1192 = vmatpush1.msra.mxu0 %v100
    %1193 = vmatprep.subr.mxu0 %v97
    %1194 = vmatpush1.msra.mxu0 %v96
    %1195 = vmatprep.subr.mxu0 %v93
    %1196 = vmatpush1.msra.mxu0 %v92
    %1197 = vmatprep.subr.mxu0 %v89
    %1198 = vmatpush1.msra.mxu0 %v88
    %1199 = vmatprep.subr.mxu0 %v85
    %1200 = vmatpush1.msra.mxu0 %v84
    %1201 = vmatprep.subr.mxu0 %v81
    %1202 = vmatpush1.msra.mxu0 %v80
    %1203 = vmatprep.subr.mxu0 %v77
    %1204 = vmatpush1.msra.mxu0 %v76
    %1205 = vmatprep.subr.mxu0 %v73
    %1206 = vmatpush1.msra.mxu0 %v72
    %1207 = vmatprep.subr.mxu0 %v69
    %1208 = vmatpush1.msra.mxu0 %v68
    %1209 = vmatprep.subr.mxu0 %v65
    %1210 = vmatpush1.msra.mxu0 %v64
    %1211 = vmatprep.subr.mxu0 %v61
    %1212 = vmatpush1.msra.mxu0 %v60
    %1213 = vmatprep.subr.mxu0 %v57
    %1214 = vmatpush1.msra.mxu0 %v56
    %1215 = vmatprep.subr.mxu0 %v53
    %1216 = vmatpush1.msra.mxu0 %v52
    %1217 = vmatprep.subr.mxu0 %v49
    %1218 = vmatpush1.msra.mxu0 %v48
    %1219 = vmatprep.subr.mxu0 %v45
    %1220 = vmatpush1.msra.mxu0 %v44
    %1221 = vmatprep.subr.mxu0 0.0
    %1222 = vmatpush2.msra.mxu0 0.0
    %1223 = vmatprep.subr.mxu0 0.0
    %1224 = vmatpush2.msra.mxu0 0.0
    %1225 = vmatprep.subr.mxu0 0.0
    %1226 = vmatpush2.msra.mxu0 0.0
    %1227 = vmatprep.subr.mxu0 0.0
    %1228 = vmatpush2.msra.mxu0 0.0
    %1229 = vmatprep.subr.mxu0 0.0
    %1230 = vmatpush2.msra.mxu0 0.0
    %1231 = vmatprep.subr.mxu0 0.0
    %1232 = vmatpush2.msra.mxu0 0.0
    %1233 = vmatprep.subr.mxu0 0.0
    %1234 = vmatpush2.msra.mxu0 0.0
    %1235 = vmatprep.subr.mxu0 0.0
    %1236 = vmatpush2.msra.mxu0 0.0
    %1237 = vmatprep.subr.mxu0 0.0
    %1238 = vmatpush2.msra.mxu0 0.0
    %1239 = vmatprep.subr.mxu0 0.0
    %1240 = vmatpush2.msra.mxu0 0.0
    %1241 = vmatprep.subr.mxu0 0.0
    %1242 = vmatpush2.msra.mxu0 0.0
    %1243 = vmatprep.subr.mxu0 0.0
    %1244 = vmatpush2.msra.mxu0 0.0
    %1245 = vmatprep.subr.mxu0 0.0
    %1246 = vmatpush2.msra.mxu0 0.0
    %1247 = vmatprep.subr.mxu0 0.0
    %1248 = vmatpush2.msra.mxu0 0.0
    %1249 = vmatprep.subr.mxu0 0.0
    %1250 = vmatpush2.msra.mxu0 0.0
    %1251 = vmatprep.subr.mxu0 0.0
    %1252 = vmatpush2.msra.mxu0 0.0
    %1253 = vmatprep.mubr.f32.mxu0 0.0
    %1254 = vmatmul.mubr.f32.gmra.mxu0 %v1188
    %v1255 = vpop.f32.mrf.mxu0
    %v1256 = vadd.f32 %v121, %v1255
    %v1257 = vpop.f32.mrf.mxu0
    %v1258 = vadd.f32 %v125, %v1257
    %1259 = vdwg.mxu0
    %1260 = vmatprep.subr.mxu0 %v107
    %1261 = vmatpush1.msra.mxu0 %v106
    %1262 = vmatprep.subr.mxu0 %v103
    %1263 = vmatpush1.msra.mxu0 %v102
    %1264 = vmatprep.subr.mxu0 %v99
    %1265 = vmatpush1.msra.mxu0 %v98
    %1266 = vmatprep.subr.mxu0 %v95
    %1267 = vmatpush1.msra.mxu0 %v94
    %1268 = vmatprep.subr.mxu0 %v91
    %1269 = vmatpush1.msra.mxu0 %v90
    %1270 = vmatprep.subr.mxu0 %v87
    %1271 = vmatpush1.msra.mxu0 %v86
    %1272 = vmatprep.subr.mxu0 %v83
    %1273 = vmatpush1.msra.mxu0 %v82
    %1274 = vmatprep.subr.mxu0 %v79
    %1275 = vmatpush1.msra.mxu0 %v78
    %1276 = vmatprep.subr.mxu0 %v75
    %1277 = vmatpush1.msra.mxu0 %v74
    %1278 = vmatprep.subr.mxu0 %v71
    %1279 = vmatpush1.msra.mxu0 %v70
    %1280 = vmatprep.subr.mxu0 %v67
    %1281 = vmatpush1.msra.mxu0 %v66
    %1282 = vmatprep.subr.mxu0 %v63
    %1283 = vmatpush1.msra.mxu0 %v62
    %1284 = vmatprep.subr.mxu0 %v59
    %1285 = vmatpush1.msra.mxu0 %v58
    %1286 = vmatprep.subr.mxu0 %v55
    %1287 = vmatpush1.msra.mxu0 %v54
    %1288 = vmatprep.subr.mxu0 %v51
    %1289 = vmatpush1.msra.mxu0 %v50
    %1290 = vmatprep.subr.mxu0 %v47
    %1291 = vmatpush1.msra.mxu0 %v46
    %1292 = vmatprep.subr.mxu0 0.0
    %1293 = vmatpush2.msra.mxu0 0.0
    %1294 = vmatprep.subr.mxu0 0.0
    %1295 = vmatpush2.msra.mxu0 0.0
    %1296 = vmatprep.subr.mxu0 0.0
    %1297 = vmatpush2.msra.mxu0 0.0
    %1298 = vmatprep.subr.mxu0 0.0
    %1299 = vmatpush2.msra.mxu0 0.0
    %1300 = vmatprep.subr.mxu0 0.0
    %1301 = vmatpush2.msra.mxu0 0.0
    %1302 = vmatprep.subr.mxu0 0.0
    %1303 = vmatpush2.msra.mxu0 0.0
    %1304 = vmatprep.subr.mxu0 0.0
    %1305 = vmatpush2.msra.mxu0 0.0
    %1306 = vmatprep.subr.mxu0 0.0
    %1307 = vmatpush2.msra.mxu0 0.0
    %1308 = vmatprep.subr.mxu0 0.0
    %1309 = vmatpush2.msra.mxu0 0.0
    %1310 = vmatprep.subr.mxu0 0.0
    %1311 = vmatpush2.msra.mxu0 0.0
    %1312 = vmatprep.subr.mxu0 0.0
    %1313 = vmatpush2.msra.mxu0 0.0
    %1314 = vmatprep.subr.mxu0 0.0
    %1315 = vmatpush2.msra.mxu0 0.0
    %1316 = vmatprep.subr.mxu0 0.0
    %1317 = vmatpush2.msra.mxu0 0.0
    %1318 = vmatprep.subr.mxu0 0.0
    %1319 = vmatpush2.msra.mxu0 0.0
    %1320 = vmatprep.subr.mxu0 0.0
    %1321 = vmatpush2.msra.mxu0 0.0
    %1322 = vmatprep.subr.mxu0 0.0
    %1323 = vmatpush2.msra.mxu0 0.0
    %1324 = vmatprep.mubr.f32.mxu0 0.0
    %1325 = vmatmul.mubr.f32.gmra.mxu0 %v1188
    %v1326 = vpop.f32.mrf.mxu0
    %v1327 = vadd.f32 %v129, %v1326
    %v1328 = vpop.f32.mrf.mxu0
    %v1329 = vadd.f32 %v133, %v1328
    %1330 = vdwg.mxu0
    %v1331 = vld [vmem:[%s0 + $0x3] sm:$0x1]
    %v1332 = vld [vmem:[%s0 + $0xb] sm:$0x1]
    %v1333 = vld [vmem:[%s0 + $0x13] sm:$0x1]
    %v1334 = vld [vmem:[%s0 + $0x1b] sm:$0x1]
    %v1335 = vld [vmem:[%s0 + $0x23] sm:$0x1]
    %v1336 = vld [vmem:[%s0 + $0x2b] sm:$0x1]
    %v1337 = vld [vmem:[%s0 + $0x33] sm:$0x1]
    %v1338 = vld [vmem:[%s0 + $0x3b] sm:$0x1]
    %v1347 = vrot.slane %v1332, 7
    %v1348 = vsel %vm299, %v1347, %v1331
    %v1349 = vrot.slane %v1333, 6
    %v1350 = vsel %vm302, %v1349, %v1348
    %v1351 = vrot.slane %v1334, 5
    %v1352 = vsel %vm305, %v1351, %v1350
    %v1353 = vrot.slane %v1335, 4
    %v1354 = vsel %vm308, %v1353, %v1352
    %v1355 = vrot.slane %v1336, 3
    %v1356 = vsel %vm311, %v1355, %v1354
    %v1357 = vrot.slane %v1337, 2
    %v1358 = vsel %vm314, %v1357, %v1356
    %v1359 = vrot.slane %v1338, 1
    %v1360 = vsel %vm317, %v1359, %v1358
    %v1361 = vsel %vm319, %v1360, 0
    %1363 = vmatprep.subr.mxu0 0.0
    %1364 = vmatpush1.msra.mxu0 0.0
    %1365 = vmatprep.subr.mxu0 0.0
    %1366 = vmatpush1.msra.mxu0 0.0
    %1367 = vmatprep.subr.mxu0 0.0
    %1368 = vmatpush1.msra.mxu0 0.0
    %1369 = vmatprep.subr.mxu0 0.0
    %1370 = vmatpush1.msra.mxu0 0.0
    %1371 = vmatprep.subr.mxu0 0.0
    %1372 = vmatpush1.msra.mxu0 0.0
    %1373 = vmatprep.subr.mxu0 0.0
    %1374 = vmatpush1.msra.mxu0 0.0
    %1375 = vmatprep.subr.mxu0 0.0
    %1376 = vmatpush1.msra.mxu0 0.0
    %1377 = vmatprep.subr.mxu0 0.0
    %1378 = vmatpush1.msra.mxu0 0.0
    %1379 = vmatprep.subr.mxu0 0.0
    %1380 = vmatpush1.msra.mxu0 0.0
    %1381 = vmatprep.subr.mxu0 0.0
    %1382 = vmatpush1.msra.mxu0 0.0
    %1383 = vmatprep.subr.mxu0 0.0
    %1384 = vmatpush1.msra.mxu0 0.0
    %1385 = vmatprep.subr.mxu0 0.0
    %1386 = vmatpush1.msra.mxu0 0.0
    %1387 = vmatprep.subr.mxu0 0.0
    %1388 = vmatpush1.msra.mxu0 0.0
    %1389 = vmatprep.subr.mxu0 0.0
    %1390 = vmatpush1.msra.mxu0 0.0
    %1391 = vmatprep.subr.mxu0 %v113
    %1392 = vmatpush1.msra.mxu0 %v112
    %1393 = vmatprep.subr.mxu0 %v109
    %1394 = vmatpush1.msra.mxu0 %v108
    %1395 = vmatprep.subr.mxu0 0.0
    %1396 = vmatpush2.msra.mxu0 0.0
    %1397 = vmatprep.subr.mxu0 0.0
    %1398 = vmatpush2.msra.mxu0 0.0
    %1399 = vmatprep.subr.mxu0 0.0
    %1400 = vmatpush2.msra.mxu0 0.0
    %1401 = vmatprep.subr.mxu0 0.0
    %1402 = vmatpush2.msra.mxu0 0.0
    %1403 = vmatprep.subr.mxu0 0.0
    %1404 = vmatpush2.msra.mxu0 0.0
    %1405 = vmatprep.subr.mxu0 0.0
    %1406 = vmatpush2.msra.mxu0 0.0
    %1407 = vmatprep.subr.mxu0 0.0
    %1408 = vmatpush2.msra.mxu0 0.0
    %1409 = vmatprep.subr.mxu0 0.0
    %1410 = vmatpush2.msra.mxu0 0.0
    %1411 = vmatprep.subr.mxu0 0.0
    %1412 = vmatpush2.msra.mxu0 0.0
    %1413 = vmatprep.subr.mxu0 0.0
    %1414 = vmatpush2.msra.mxu0 0.0
    %1415 = vmatprep.subr.mxu0 0.0
    %1416 = vmatpush2.msra.mxu0 0.0
    %1417 = vmatprep.subr.mxu0 0.0
    %1418 = vmatpush2.msra.mxu0 0.0
    %1419 = vmatprep.subr.mxu0 0.0
    %1420 = vmatpush2.msra.mxu0 0.0
    %1421 = vmatprep.subr.mxu0 0.0
    %1422 = vmatpush2.msra.mxu0 0.0
    %1423 = vmatprep.subr.mxu0 0.0
    %1424 = vmatpush2.msra.mxu0 0.0
    %1425 = vmatprep.subr.mxu0 0.0
    %1426 = vmatpush2.msra.mxu0 0.0
    %1427 = vmatprep.mubr.f32.mxu0 0.0
    %1428 = vmatmul.mubr.f32.gmra.mxu0 %v1361
    %v1429 = vpop.f32.mrf.mxu0
    %v1430 = vadd.f32 0.0, %v1429
    %v1431 = vpop.f32.mrf.mxu0
    %v1432 = vadd.f32 0.0, %v1431
    %1433 = vdwg.mxu0
    %1434 = vmatprep.subr.mxu0 0.0
    %1435 = vmatpush1.msra.mxu0 0.0
    %1436 = vmatprep.subr.mxu0 0.0
    %1437 = vmatpush1.msra.mxu0 0.0
    %1438 = vmatprep.subr.mxu0 0.0
    %1439 = vmatpush1.msra.mxu0 0.0
    %1440 = vmatprep.subr.mxu0 0.0
    %1441 = vmatpush1.msra.mxu0 0.0
    %1442 = vmatprep.subr.mxu0 0.0
    %1443 = vmatpush1.msra.mxu0 0.0
    %1444 = vmatprep.subr.mxu0 0.0
    %1445 = vmatpush1.msra.mxu0 0.0
    %1446 = vmatprep.subr.mxu0 0.0
    %1447 = vmatpush1.msra.mxu0 0.0
    %1448 = vmatprep.subr.mxu0 0.0
    %1449 = vmatpush1.msra.mxu0 0.0
    %1450 = vmatprep.subr.mxu0 0.0
    %1451 = vmatpush1.msra.mxu0 0.0
    %1452 = vmatprep.subr.mxu0 0.0
    %1453 = vmatpush1.msra.mxu0 0.0
    %1454 = vmatprep.subr.mxu0 0.0
    %1455 = vmatpush1.msra.mxu0 0.0
    %1456 = vmatprep.subr.mxu0 0.0
    %1457 = vmatpush1.msra.mxu0 0.0
    %1458 = vmatprep.subr.mxu0 0.0
    %1459 = vmatpush1.msra.mxu0 0.0
    %1460 = vmatprep.subr.mxu0 0.0
    %1461 = vmatpush1.msra.mxu0 0.0
    %1462 = vmatprep.subr.mxu0 %v115
    %1463 = vmatpush1.msra.mxu0 %v114
    %1464 = vmatprep.subr.mxu0 %v111
    %1465 = vmatpush1.msra.mxu0 %v110
    %1466 = vmatprep.subr.mxu0 0.0
    %1467 = vmatpush2.msra.mxu0 0.0
    %1468 = vmatprep.subr.mxu0 0.0
    %1469 = vmatpush2.msra.mxu0 0.0
    %1470 = vmatprep.subr.mxu0 0.0
    %1471 = vmatpush2.msra.mxu0 0.0
    %1472 = vmatprep.subr.mxu0 0.0
    %1473 = vmatpush2.msra.mxu0 0.0
    %1474 = vmatprep.subr.mxu0 0.0
    %1475 = vmatpush2.msra.mxu0 0.0
    %1476 = vmatprep.subr.mxu0 0.0
    %1477 = vmatpush2.msra.mxu0 0.0
    %1478 = vmatprep.subr.mxu0 0.0
    %1479 = vmatpush2.msra.mxu0 0.0
    %1480 = vmatprep.subr.mxu0 0.0
    %1481 = vmatpush2.msra.mxu0 0.0
    %1482 = vmatprep.subr.mxu0 0.0
    %1483 = vmatpush2.msra.mxu0 0.0
    %1484 = vmatprep.subr.mxu0 0.0
    %1485 = vmatpush2.msra.mxu0 0.0
    %1486 = vmatprep.subr.mxu0 0.0
    %1487 = vmatpush2.msra.mxu0 0.0
    %1488 = vmatprep.subr.mxu0 0.0
    %1489 = vmatpush2.msra.mxu0 0.0
    %1490 = vmatprep.subr.mxu0 0.0
    %1491 = vmatpush2.msra.mxu0 0.0
    %1492 = vmatprep.subr.mxu0 0.0
    %1493 = vmatpush2.msra.mxu0 0.0
    %1494 = vmatprep.subr.mxu0 0.0
    %1495 = vmatpush2.msra.mxu0 0.0
    %1496 = vmatprep.subr.mxu0 0.0
    %1497 = vmatpush2.msra.mxu0 0.0
    %1498 = vmatprep.mubr.f32.mxu0 0.0
    %1499 = vmatmul.mubr.f32.gmra.mxu0 %v1361
    %v1500 = vpop.f32.mrf.mxu0
    %v1501 = vadd.f32 0.0, %v1500
    %v1502 = vpop.f32.mrf.mxu0
    %v1503 = vadd.f32 0.0, %v1502
    %1504 = vdwg.mxu0
    %v1505 = vadd.f32 %v1256, %v1430
    %v1506 = vadd.f32 %v1258, %v1432
    %v1507 = vadd.f32 %v1327, %v1501
    %v1508 = vadd.f32 %v1329, %v1503
    %v1509 = vxor.u32 %v1505, 2147483648
    %v1510 = vmul.f32 %v1509, 1.442695
    %v1511 = vpow.pop %v1510
    %v1512 = vadd.f32 %v1511, 1.0
    %v1513 = vrcp.pop %v1512
    %v1514 = vmul.f32 1.0, %v1513
    %v1515 = vxor.u32 %v1506, 2147483648
    %v1516 = vmul.f32 %v1515, 1.442695
    %v1517 = vpow.pop %v1516
    %v1518 = vadd.f32 %v1517, 1.0
    %v1519 = vrcp.pop %v1518
    %v1520 = vmul.f32 1.0, %v1519
    %v1521 = vxor.u32 %v1507, 2147483648
    %v1522 = vmul.f32 %v1521, 1.442695
    %v1523 = vpow.pop %v1522
    %v1524 = vadd.f32 %v1523, 1.0
    %v1525 = vrcp.pop %v1524
    %v1526 = vmul.f32 1.0, %v1525
    %v1527 = vtanh.pop %v1508
    %v1528 = vmul.f32 %v1520, %v1187
    %v1529 = vmul.f32 %v1514, %v1527
    %v1530 = vadd.f32 %v1528, %v1529
    %v1531 = vtanh.pop %v1530
    %v1532 = vmul.f32 %v1526, %v1531
    %1533 = vmatprep.subr.mxu0 %v105
    %1534 = vmatpush1.msra.mxu0 %v104
    %1535 = vmatprep.subr.mxu0 %v101
    %1536 = vmatpush1.msra.mxu0 %v100
    %1537 = vmatprep.subr.mxu0 %v97
    %1538 = vmatpush1.msra.mxu0 %v96
    %1539 = vmatprep.subr.mxu0 %v93
    %1540 = vmatpush1.msra.mxu0 %v92
    %1541 = vmatprep.subr.mxu0 %v89
    %1542 = vmatpush1.msra.mxu0 %v88
    %1543 = vmatprep.subr.mxu0 %v85
    %1544 = vmatpush1.msra.mxu0 %v84
    %1545 = vmatprep.subr.mxu0 %v81
    %1546 = vmatpush1.msra.mxu0 %v80
    %1547 = vmatprep.subr.mxu0 %v77
    %1548 = vmatpush1.msra.mxu0 %v76
    %1549 = vmatprep.subr.mxu0 %v73
    %1550 = vmatpush1.msra.mxu0 %v72
    %1551 = vmatprep.subr.mxu0 %v69
    %1552 = vmatpush1.msra.mxu0 %v68
    %1553 = vmatprep.subr.mxu0 %v65
    %1554 = vmatpush1.msra.mxu0 %v64
    %1555 = vmatprep.subr.mxu0 %v61
    %1556 = vmatpush1.msra.mxu0 %v60
    %1557 = vmatprep.subr.mxu0 %v57
    %1558 = vmatpush1.msra.mxu0 %v56
    %1559 = vmatprep.subr.mxu0 %v53
    %1560 = vmatpush1.msra.mxu0 %v52
    %1561 = vmatprep.subr.mxu0 %v49
    %1562 = vmatpush1.msra.mxu0 %v48
    %1563 = vmatprep.subr.mxu0 %v45
    %1564 = vmatpush1.msra.mxu0 %v44
    %1565 = vmatprep.subr.mxu0 0.0
    %1566 = vmatpush2.msra.mxu0 0.0
    %1567 = vmatprep.subr.mxu0 0.0
    %1568 = vmatpush2.msra.mxu0 0.0
    %1569 = vmatprep.subr.mxu0 0.0
    %1570 = vmatpush2.msra.mxu0 0.0
    %1571 = vmatprep.subr.mxu0 0.0
    %1572 = vmatpush2.msra.mxu0 0.0
    %1573 = vmatprep.subr.mxu0 0.0
    %1574 = vmatpush2.msra.mxu0 0.0
    %1575 = vmatprep.subr.mxu0 0.0
    %1576 = vmatpush2.msra.mxu0 0.0
    %1577 = vmatprep.subr.mxu0 0.0
    %1578 = vmatpush2.msra.mxu0 0.0
    %1579 = vmatprep.subr.mxu0 0.0
    %1580 = vmatpush2.msra.mxu0 0.0
    %1581 = vmatprep.subr.mxu0 0.0
    %1582 = vmatpush2.msra.mxu0 0.0
    %1583 = vmatprep.subr.mxu0 0.0
    %1584 = vmatpush2.msra.mxu0 0.0
    %1585 = vmatprep.subr.mxu0 0.0
    %1586 = vmatpush2.msra.mxu0 0.0
    %1587 = vmatprep.subr.mxu0 0.0
    %1588 = vmatpush2.msra.mxu0 0.0
    %1589 = vmatprep.subr.mxu0 0.0
    %1590 = vmatpush2.msra.mxu0 0.0
    %1591 = vmatprep.subr.mxu0 0.0
    %1592 = vmatpush2.msra.mxu0 0.0
    %1593 = vmatprep.subr.mxu0 0.0
    %1594 = vmatpush2.msra.mxu0 0.0
    %1595 = vmatprep.subr.mxu0 0.0
    %1596 = vmatpush2.msra.mxu0 0.0
    %1597 = vmatprep.mubr.f32.mxu0 0.0
    %1598 = vmatmul.mubr.f32.gmra.mxu0 %v1532
    %v1599 = vpop.f32.mrf.mxu0
    %v1600 = vadd.f32 %v121, %v1599
    %v1601 = vpop.f32.mrf.mxu0
    %v1602 = vadd.f32 %v125, %v1601
    %1603 = vdwg.mxu0
    %1604 = vmatprep.subr.mxu0 %v107
    %1605 = vmatpush1.msra.mxu0 %v106
    %1606 = vmatprep.subr.mxu0 %v103
    %1607 = vmatpush1.msra.mxu0 %v102
    %1608 = vmatprep.subr.mxu0 %v99
    %1609 = vmatpush1.msra.mxu0 %v98
    %1610 = vmatprep.subr.mxu0 %v95
    %1611 = vmatpush1.msra.mxu0 %v94
    %1612 = vmatprep.subr.mxu0 %v91
    %1613 = vmatpush1.msra.mxu0 %v90
    %1614 = vmatprep.subr.mxu0 %v87
    %1615 = vmatpush1.msra.mxu0 %v86
    %1616 = vmatprep.subr.mxu0 %v83
    %1617 = vmatpush1.msra.mxu0 %v82
    %1618 = vmatprep.subr.mxu0 %v79
    %1619 = vmatpush1.msra.mxu0 %v78
    %1620 = vmatprep.subr.mxu0 %v75
    %1621 = vmatpush1.msra.mxu0 %v74
    %1622 = vmatprep.subr.mxu0 %v71
    %1623 = vmatpush1.msra.mxu0 %v70
    %1624 = vmatprep.subr.mxu0 %v67
    %1625 = vmatpush1.msra.mxu0 %v66
    %1626 = vmatprep.subr.mxu0 %v63
    %1627 = vmatpush1.msra.mxu0 %v62
    %1628 = vmatprep.subr.mxu0 %v59
    %1629 = vmatpush1.msra.mxu0 %v58
    %1630 = vmatprep.subr.mxu0 %v55
    %1631 = vmatpush1.msra.mxu0 %v54
    %1632 = vmatprep.subr.mxu0 %v51
    %1633 = vmatpush1.msra.mxu0 %v50
    %1634 = vmatprep.subr.mxu0 %v47
    %1635 = vmatpush1.msra.mxu0 %v46
    %1636 = vmatprep.subr.mxu0 0.0
    %1637 = vmatpush2.msra.mxu0 0.0
    %1638 = vmatprep.subr.mxu0 0.0
    %1639 = vmatpush2.msra.mxu0 0.0
    %1640 = vmatprep.subr.mxu0 0.0
    %1641 = vmatpush2.msra.mxu0 0.0
    %1642 = vmatprep.subr.mxu0 0.0
    %1643 = vmatpush2.msra.mxu0 0.0
    %1644 = vmatprep.subr.mxu0 0.0
    %1645 = vmatpush2.msra.mxu0 0.0
    %1646 = vmatprep.subr.mxu0 0.0
    %1647 = vmatpush2.msra.mxu0 0.0
    %1648 = vmatprep.subr.mxu0 0.0
    %1649 = vmatpush2.msra.mxu0 0.0
    %1650 = vmatprep.subr.mxu0 0.0
    %1651 = vmatpush2.msra.mxu0 0.0
    %1652 = vmatprep.subr.mxu0 0.0
    %1653 = vmatpush2.msra.mxu0 0.0
    %1654 = vmatprep.subr.mxu0 0.0
    %1655 = vmatpush2.msra.mxu0 0.0
    %1656 = vmatprep.subr.mxu0 0.0
    %1657 = vmatpush2.msra.mxu0 0.0
    %1658 = vmatprep.subr.mxu0 0.0
    %1659 = vmatpush2.msra.mxu0 0.0
    %1660 = vmatprep.subr.mxu0 0.0
    %1661 = vmatpush2.msra.mxu0 0.0
    %1662 = vmatprep.subr.mxu0 0.0
    %1663 = vmatpush2.msra.mxu0 0.0
    %1664 = vmatprep.subr.mxu0 0.0
    %1665 = vmatpush2.msra.mxu0 0.0
    %1666 = vmatprep.subr.mxu0 0.0
    %1667 = vmatpush2.msra.mxu0 0.0
    %1668 = vmatprep.mubr.f32.mxu0 0.0
    %1669 = vmatmul.mubr.f32.gmra.mxu0 %v1532
    %v1670 = vpop.f32.mrf.mxu0
    %v1671 = vadd.f32 %v129, %v1670
    %v1672 = vpop.f32.mrf.mxu0
    %v1673 = vadd.f32 %v133, %v1672
    %1674 = vdwg.mxu0
    %v1675 = vld [vmem:[%s0 + $0x4] sm:$0x1]
    %v1676 = vld [vmem:[%s0 + $0xc] sm:$0x1]
    %v1677 = vld [vmem:[%s0 + $0x14] sm:$0x1]
    %v1678 = vld [vmem:[%s0 + $0x1c] sm:$0x1]
    %v1679 = vld [vmem:[%s0 + $0x24] sm:$0x1]
    %v1680 = vld [vmem:[%s0 + $0x2c] sm:$0x1]
    %v1681 = vld [vmem:[%s0 + $0x34] sm:$0x1]
    %v1682 = vld [vmem:[%s0 + $0x3c] sm:$0x1]
    %v1691 = vrot.slane %v1676, 7
    %v1692 = vsel %vm299, %v1691, %v1675
    %v1693 = vrot.slane %v1677, 6
    %v1694 = vsel %vm302, %v1693, %v1692
    %v1695 = vrot.slane %v1678, 5
    %v1696 = vsel %vm305, %v1695, %v1694
    %v1697 = vrot.slane %v1679, 4
    %v1698 = vsel %vm308, %v1697, %v1696
    %v1699 = vrot.slane %v1680, 3
    %v1700 = vsel %vm311, %v1699, %v1698
    %v1701 = vrot.slane %v1681, 2
    %v1702 = vsel %vm314, %v1701, %v1700
    %v1703 = vrot.slane %v1682, 1
    %v1704 = vsel %vm317, %v1703, %v1702
    %v1705 = vsel %vm319, %v1704, 0
    %1707 = vmatprep.subr.mxu0 0.0
    %1708 = vmatpush1.msra.mxu0 0.0
    %1709 = vmatprep.subr.mxu0 0.0
    %1710 = vmatpush1.msra.mxu0 0.0
    %1711 = vmatprep.subr.mxu0 0.0
    %1712 = vmatpush1.msra.mxu0 0.0
    %1713 = vmatprep.subr.mxu0 0.0
    %1714 = vmatpush1.msra.mxu0 0.0
    %1715 = vmatprep.subr.mxu0 0.0
    %1716 = vmatpush1.msra.mxu0 0.0
    %1717 = vmatprep.subr.mxu0 0.0
    %1718 = vmatpush1.msra.mxu0 0.0
    %1719 = vmatprep.subr.mxu0 0.0
    %1720 = vmatpush1.msra.mxu0 0.0
    %1721 = vmatprep.subr.mxu0 0.0
    %1722 = vmatpush1.msra.mxu0 0.0
    %1723 = vmatprep.subr.mxu0 0.0
    %1724 = vmatpush1.msra.mxu0 0.0
    %1725 = vmatprep.subr.mxu0 0.0
    %1726 = vmatpush1.msra.mxu0 0.0
    %1727 = vmatprep.subr.mxu0 0.0
    %1728 = vmatpush1.msra.mxu0 0.0
    %1729 = vmatprep.subr.mxu0 0.0
    %1730 = vmatpush1.msra.mxu0 0.0
    %1731 = vmatprep.subr.mxu0 0.0
    %1732 = vmatpush1.msra.mxu0 0.0
    %1733 = vmatprep.subr.mxu0 0.0
    %1734 = vmatpush1.msra.mxu0 0.0
    %1735 = vmatprep.subr.mxu0 %v113
    %1736 = vmatpush1.msra.mxu0 %v112
    %1737 = vmatprep.subr.mxu0 %v109
    %1738 = vmatpush1.msra.mxu0 %v108
    %1739 = vmatprep.subr.mxu0 0.0
    %1740 = vmatpush2.msra.mxu0 0.0
    %1741 = vmatprep.subr.mxu0 0.0
    %1742 = vmatpush2.msra.mxu0 0.0
    %1743 = vmatprep.subr.mxu0 0.0
    %1744 = vmatpush2.msra.mxu0 0.0
    %1745 = vmatprep.subr.mxu0 0.0
    %1746 = vmatpush2.msra.mxu0 0.0
    %1747 = vmatprep.subr.mxu0 0.0
    %1748 = vmatpush2.msra.mxu0 0.0
    %1749 = vmatprep.subr.mxu0 0.0
    %1750 = vmatpush2.msra.mxu0 0.0
    %1751 = vmatprep.subr.mxu0 0.0
    %1752 = vmatpush2.msra.mxu0 0.0
    %1753 = vmatprep.subr.mxu0 0.0
    %1754 = vmatpush2.msra.mxu0 0.0
    %1755 = vmatprep.subr.mxu0 0.0
    %1756 = vmatpush2.msra.mxu0 0.0
    %1757 = vmatprep.subr.mxu0 0.0
    %1758 = vmatpush2.msra.mxu0 0.0
    %1759 = vmatprep.subr.mxu0 0.0
    %1760 = vmatpush2.msra.mxu0 0.0
    %1761 = vmatprep.subr.mxu0 0.0
    %1762 = vmatpush2.msra.mxu0 0.0
    %1763 = vmatprep.subr.mxu0 0.0
    %1764 = vmatpush2.msra.mxu0 0.0
    %1765 = vmatprep.subr.mxu0 0.0
    %1766 = vmatpush2.msra.mxu0 0.0
    %1767 = vmatprep.subr.mxu0 0.0
    %1768 = vmatpush2.msra.mxu0 0.0
    %1769 = vmatprep.subr.mxu0 0.0
    %1770 = vmatpush2.msra.mxu0 0.0
    %1771 = vmatprep.mubr.f32.mxu0 0.0
    %1772 = vmatmul.mubr.f32.gmra.mxu0 %v1705
    %v1773 = vpop.f32.mrf.mxu0
    %v1774 = vadd.f32 0.0, %v1773
    %v1775 = vpop.f32.mrf.mxu0
    %v1776 = vadd.f32 0.0, %v1775
    %1777 = vdwg.mxu0
    %1778 = vmatprep.subr.mxu0 0.0
    %1779 = vmatpush1.msra.mxu0 0.0
    %1780 = vmatprep.subr.mxu0 0.0
    %1781 = vmatpush1.msra.mxu0 0.0
    %1782 = vmatprep.subr.mxu0 0.0
    %1783 = vmatpush1.msra.mxu0 0.0
    %1784 = vmatprep.subr.mxu0 0.0
    %1785 = vmatpush1.msra.mxu0 0.0
    %1786 = vmatprep.subr.mxu0 0.0
    %1787 = vmatpush1.msra.mxu0 0.0
    %1788 = vmatprep.subr.mxu0 0.0
    %1789 = vmatpush1.msra.mxu0 0.0
    %1790 = vmatprep.subr.mxu0 0.0
    %1791 = vmatpush1.msra.mxu0 0.0
    %1792 = vmatprep.subr.mxu0 0.0
    %1793 = vmatpush1.msra.mxu0 0.0
    %1794 = vmatprep.subr.mxu0 0.0
    %1795 = vmatpush1.msra.mxu0 0.0
    %1796 = vmatprep.subr.mxu0 0.0
    %1797 = vmatpush1.msra.mxu0 0.0
    %1798 = vmatprep.subr.mxu0 0.0
    %1799 = vmatpush1.msra.mxu0 0.0
    %1800 = vmatprep.subr.mxu0 0.0
    %1801 = vmatpush1.msra.mxu0 0.0
    %1802 = vmatprep.subr.mxu0 0.0
    %1803 = vmatpush1.msra.mxu0 0.0
    %1804 = vmatprep.subr.mxu0 0.0
    %1805 = vmatpush1.msra.mxu0 0.0
    %1806 = vmatprep.subr.mxu0 %v115
    %1807 = vmatpush1.msra.mxu0 %v114
    %1808 = vmatprep.subr.mxu0 %v111
    %1809 = vmatpush1.msra.mxu0 %v110
    %1810 = vmatprep.subr.mxu0 0.0
    %1811 = vmatpush2.msra.mxu0 0.0
    %1812 = vmatprep.subr.mxu0 0.0
    %1813 = vmatpush2.msra.mxu0 0.0
    %1814 = vmatprep.subr.mxu0 0.0
    %1815 = vmatpush2.msra.mxu0 0.0
    %1816 = vmatprep.subr.mxu0 0.0
    %1817 = vmatpush2.msra.mxu0 0.0
    %1818 = vmatprep.subr.mxu0 0.0
    %1819 = vmatpush2.msra.mxu0 0.0
    %1820 = vmatprep.subr.mxu0 0.0
    %1821 = vmatpush2.msra.mxu0 0.0
    %1822 = vmatprep.subr.mxu0 0.0
    %1823 = vmatpush2.msra.mxu0 0.0
    %1824 = vmatprep.subr.mxu0 0.0
    %1825 = vmatpush2.msra.mxu0 0.0
    %1826 = vmatprep.subr.mxu0 0.0
    %1827 = vmatpush2.msra.mxu0 0.0
    %1828 = vmatprep.subr.mxu0 0.0
    %1829 = vmatpush2.msra.mxu0 0.0
    %1830 = vmatprep.subr.mxu0 0.0
    %1831 = vmatpush2.msra.mxu0 0.0
    %1832 = vmatprep.subr.mxu0 0.0
    %1833 = vmatpush2.msra.mxu0 0.0
    %1834 = vmatprep.subr.mxu0 0.0
    %1835 = vmatpush2.msra.mxu0 0.0
    %1836 = vmatprep.subr.mxu0 0.0
    %1837 = vmatpush2.msra.mxu0 0.0
    %1838 = vmatprep.subr.mxu0 0.0
    %1839 = vmatpush2.msra.mxu0 0.0
    %1840 = vmatprep.subr.mxu0 0.0
    %1841 = vmatpush2.msra.mxu0 0.0
    %1842 = vmatprep.mubr.f32.mxu0 0.0
    %1843 = vmatmul.mubr.f32.gmra.mxu0 %v1705
    %v1844 = vpop.f32.mrf.mxu0
    %v1845 = vadd.f32 0.0, %v1844
    %v1846 = vpop.f32.mrf.mxu0
    %v1847 = vadd.f32 0.0, %v1846
    %1848 = vdwg.mxu0
    %v1849 = vadd.f32 %v1600, %v1774
    %v1850 = vadd.f32 %v1602, %v1776
    %v1851 = vadd.f32 %v1671, %v1845
    %v1852 = vadd.f32 %v1673, %v1847
    %v1853 = vxor.u32 %v1849, 2147483648
    %v1854 = vmul.f32 %v1853, 1.442695
    %v1855 = vpow.pop %v1854
    %v1856 = vadd.f32 %v1855, 1.0
    %v1857 = vrcp.pop %v1856
    %v1858 = vmul.f32 1.0, %v1857
    %v1859 = vxor.u32 %v1850, 2147483648
    %v1860 = vmul.f32 %v1859, 1.442695
    %v1861 = vpow.pop %v1860
    %v1862 = vadd.f32 %v1861, 1.0
    %v1863 = vrcp.pop %v1862
    %v1864 = vmul.f32 1.0, %v1863
    %v1865 = vxor.u32 %v1851, 2147483648
    %v1866 = vmul.f32 %v1865, 1.442695
    %v1867 = vpow.pop %v1866
    %v1868 = vadd.f32 %v1867, 1.0
    %v1869 = vrcp.pop %v1868
    %v1870 = vmul.f32 1.0, %v1869
    %v1871 = vtanh.pop %v1852
    %v1872 = vmul.f32 %v1864, %v1530
    %v1873 = vmul.f32 %v1858, %v1871
    %v1874 = vadd.f32 %v1872, %v1873
    %v1875 = vtanh.pop %v1874
    %v1876 = vmul.f32 %v1870, %v1875
    %1877 = vmatprep.subr.mxu0 %v105
    %1878 = vmatpush1.msra.mxu0 %v104
    %1879 = vmatprep.subr.mxu0 %v101
    %1880 = vmatpush1.msra.mxu0 %v100
    %1881 = vmatprep.subr.mxu0 %v97
    %1882 = vmatpush1.msra.mxu0 %v96
    %1883 = vmatprep.subr.mxu0 %v93
    %1884 = vmatpush1.msra.mxu0 %v92
    %1885 = vmatprep.subr.mxu0 %v89
    %1886 = vmatpush1.msra.mxu0 %v88
    %1887 = vmatprep.subr.mxu0 %v85
    %1888 = vmatpush1.msra.mxu0 %v84
    %1889 = vmatprep.subr.mxu0 %v81
    %1890 = vmatpush1.msra.mxu0 %v80
    %1891 = vmatprep.subr.mxu0 %v77
    %1892 = vmatpush1.msra.mxu0 %v76
    %1893 = vmatprep.subr.mxu0 %v73
    %1894 = vmatpush1.msra.mxu0 %v72
    %1895 = vmatprep.subr.mxu0 %v69
    %1896 = vmatpush1.msra.mxu0 %v68
    %1897 = vmatprep.subr.mxu0 %v65
    %1898 = vmatpush1.msra.mxu0 %v64
    %1899 = vmatprep.subr.mxu0 %v61
    %1900 = vmatpush1.msra.mxu0 %v60
    %1901 = vmatprep.subr.mxu0 %v57
    %1902 = vmatpush1.msra.mxu0 %v56
    %1903 = vmatprep.subr.mxu0 %v53
    %1904 = vmatpush1.msra.mxu0 %v52
    %1905 = vmatprep.subr.mxu0 %v49
    %1906 = vmatpush1.msra.mxu0 %v48
    %1907 = vmatprep.subr.mxu0 %v45
    %1908 = vmatpush1.msra.mxu0 %v44
    %1909 = vmatprep.subr.mxu0 0.0
    %1910 = vmatpush2.msra.mxu0 0.0
    %1911 = vmatprep.subr.mxu0 0.0
    %1912 = vmatpush2.msra.mxu0 0.0
    %1913 = vmatprep.subr.mxu0 0.0
    %1914 = vmatpush2.msra.mxu0 0.0
    %1915 = vmatprep.subr.mxu0 0.0
    %1916 = vmatpush2.msra.mxu0 0.0
    %1917 = vmatprep.subr.mxu0 0.0
    %1918 = vmatpush2.msra.mxu0 0.0
    %1919 = vmatprep.subr.mxu0 0.0
    %1920 = vmatpush2.msra.mxu0 0.0
    %1921 = vmatprep.subr.mxu0 0.0
    %1922 = vmatpush2.msra.mxu0 0.0
    %1923 = vmatprep.subr.mxu0 0.0
    %1924 = vmatpush2.msra.mxu0 0.0
    %1925 = vmatprep.subr.mxu0 0.0
    %1926 = vmatpush2.msra.mxu0 0.0
    %1927 = vmatprep.subr.mxu0 0.0
    %1928 = vmatpush2.msra.mxu0 0.0
    %1929 = vmatprep.subr.mxu0 0.0
    %1930 = vmatpush2.msra.mxu0 0.0
    %1931 = vmatprep.subr.mxu0 0.0
    %1932 = vmatpush2.msra.mxu0 0.0
    %1933 = vmatprep.subr.mxu0 0.0
    %1934 = vmatpush2.msra.mxu0 0.0
    %1935 = vmatprep.subr.mxu0 0.0
    %1936 = vmatpush2.msra.mxu0 0.0
    %1937 = vmatprep.subr.mxu0 0.0
    %1938 = vmatpush2.msra.mxu0 0.0
    %1939 = vmatprep.subr.mxu0 0.0
    %1940 = vmatpush2.msra.mxu0 0.0
    %1941 = vmatprep.mubr.f32.mxu0 0.0
    %1942 = vmatmul.mubr.f32.gmra.mxu0 %v1876
    %v1943 = vpop.f32.mrf.mxu0
    %v1944 = vadd.f32 %v121, %v1943
    %v1945 = vpop.f32.mrf.mxu0
    %v1946 = vadd.f32 %v125, %v1945
    %1947 = vdwg.mxu0
    %1948 = vmatprep.subr.mxu0 %v107
    %1949 = vmatpush1.msra.mxu0 %v106
    %1950 = vmatprep.subr.mxu0 %v103
    %1951 = vmatpush1.msra.mxu0 %v102
    %1952 = vmatprep.subr.mxu0 %v99
    %1953 = vmatpush1.msra.mxu0 %v98
    %1954 = vmatprep.subr.mxu0 %v95
    %1955 = vmatpush1.msra.mxu0 %v94
    %1956 = vmatprep.subr.mxu0 %v91
    %1957 = vmatpush1.msra.mxu0 %v90
    %1958 = vmatprep.subr.mxu0 %v87
    %1959 = vmatpush1.msra.mxu0 %v86
    %1960 = vmatprep.subr.mxu0 %v83
    %1961 = vmatpush1.msra.mxu0 %v82
    %1962 = vmatprep.subr.mxu0 %v79
    %1963 = vmatpush1.msra.mxu0 %v78
    %1964 = vmatprep.subr.mxu0 %v75
    %1965 = vmatpush1.msra.mxu0 %v74
    %1966 = vmatprep.subr.mxu0 %v71
    %1967 = vmatpush1.msra.mxu0 %v70
    %1968 = vmatprep.subr.mxu0 %v67
    %1969 = vmatpush1.msra.mxu0 %v66
    %1970 = vmatprep.subr.mxu0 %v63
    %1971 = vmatpush1.msra.mxu0 %v62
    %1972 = vmatprep.subr.mxu0 %v59
    %1973 = vmatpush1.msra.mxu0 %v58
    %1974 = vmatprep.subr.mxu0 %v55
    %1975 = vmatpush1.msra.mxu0 %v54
    %1976 = vmatprep.subr.mxu0 %v51
    %1977 = vmatpush1.msra.mxu0 %v50
    %1978 = vmatprep.subr.mxu0 %v47
    %1979 = vmatpush1.msra.mxu0 %v46
    %1980 = vmatprep.subr.mxu0 0.0
    %1981 = vmatpush2.msra.mxu0 0.0
    %1982 = vmatprep.subr.mxu0 0.0
    %1983 = vmatpush2.msra.mxu0 0.0
    %1984 = vmatprep.subr.mxu0 0.0
    %1985 = vmatpush2.msra.mxu0 0.0
    %1986 = vmatprep.subr.mxu0 0.0
    %1987 = vmatpush2.msra.mxu0 0.0
    %1988 = vmatprep.subr.mxu0 0.0
    %1989 = vmatpush2.msra.mxu0 0.0
    %1990 = vmatprep.subr.mxu0 0.0
    %1991 = vmatpush2.msra.mxu0 0.0
    %1992 = vmatprep.subr.mxu0 0.0
    %1993 = vmatpush2.msra.mxu0 0.0
    %1994 = vmatprep.subr.mxu0 0.0
    %1995 = vmatpush2.msra.mxu0 0.0
    %1996 = vmatprep.subr.mxu0 0.0
    %1997 = vmatpush2.msra.mxu0 0.0
    %1998 = vmatprep.subr.mxu0 0.0
    %1999 = vmatpush2.msra.mxu0 0.0
    %2000 = vmatprep.subr.mxu0 0.0
    %2001 = vmatpush2.msra.mxu0 0.0
    %2002 = vmatprep.subr.mxu0 0.0
    %2003 = vmatpush2.msra.mxu0 0.0
    %2004 = vmatprep.subr.mxu0 0.0
    %2005 = vmatpush2.msra.mxu0 0.0
    %2006 = vmatprep.subr.mxu0 0.0
    %2007 = vmatpush2.msra.mxu0 0.0
    %2008 = vmatprep.subr.mxu0 0.0
    %2009 = vmatpush2.msra.mxu0 0.0
    %2010 = vmatprep.subr.mxu0 0.0
    %2011 = vmatpush2.msra.mxu0 0.0
    %2012 = vmatprep.mubr.f32.mxu0 0.0
    %2013 = vmatmul.mubr.f32.gmra.mxu0 %v1876
    %v2014 = vpop.f32.mrf.mxu0
    %v2015 = vadd.f32 %v129, %v2014
    %v2016 = vpop.f32.mrf.mxu0
    %v2017 = vadd.f32 %v133, %v2016
    %2018 = vdwg.mxu0
    %v2019 = vld [vmem:[%s0 + $0x5] sm:$0x1]
    %v2020 = vld [vmem:[%s0 + $0xd] sm:$0x1]
    %v2021 = vld [vmem:[%s0 + $0x15] sm:$0x1]
    %v2022 = vld [vmem:[%s0 + $0x1d] sm:$0x1]
    %v2023 = vld [vmem:[%s0 + $0x25] sm:$0x1]
    %v2024 = vld [vmem:[%s0 + $0x2d] sm:$0x1]
    %v2025 = vld [vmem:[%s0 + $0x35] sm:$0x1]
    %v2026 = vld [vmem:[%s0 + $0x3d] sm:$0x1]
    %v2035 = vrot.slane %v2020, 7
    %v2036 = vsel %vm299, %v2035, %v2019
    %v2037 = vrot.slane %v2021, 6
    %v2038 = vsel %vm302, %v2037, %v2036
    %v2039 = vrot.slane %v2022, 5
    %v2040 = vsel %vm305, %v2039, %v2038
    %v2041 = vrot.slane %v2023, 4
    %v2042 = vsel %vm308, %v2041, %v2040
    %v2043 = vrot.slane %v2024, 3
    %v2044 = vsel %vm311, %v2043, %v2042
    %v2045 = vrot.slane %v2025, 2
    %v2046 = vsel %vm314, %v2045, %v2044
    %v2047 = vrot.slane %v2026, 1
    %v2048 = vsel %vm317, %v2047, %v2046
    %v2049 = vsel %vm319, %v2048, 0
    %2051 = vmatprep.subr.mxu0 0.0
    %2052 = vmatpush1.msra.mxu0 0.0
    %2053 = vmatprep.subr.mxu0 0.0
    %2054 = vmatpush1.msra.mxu0 0.0
    %2055 = vmatprep.subr.mxu0 0.0
    %2056 = vmatpush1.msra.mxu0 0.0
    %2057 = vmatprep.subr.mxu0 0.0
    %2058 = vmatpush1.msra.mxu0 0.0
    %2059 = vmatprep.subr.mxu0 0.0
    %2060 = vmatpush1.msra.mxu0 0.0
    %2061 = vmatprep.subr.mxu0 0.0
    %2062 = vmatpush1.msra.mxu0 0.0
    %2063 = vmatprep.subr.mxu0 0.0
    %2064 = vmatpush1.msra.mxu0 0.0
    %2065 = vmatprep.subr.mxu0 0.0
    %2066 = vmatpush1.msra.mxu0 0.0
    %2067 = vmatprep.subr.mxu0 0.0
    %2068 = vmatpush1.msra.mxu0 0.0
    %2069 = vmatprep.subr.mxu0 0.0
    %2070 = vmatpush1.msra.mxu0 0.0
    %2071 = vmatprep.subr.mxu0 0.0
    %2072 = vmatpush1.msra.mxu0 0.0
    %2073 = vmatprep.subr.mxu0 0.0
    %2074 = vmatpush1.msra.mxu0 0.0
    %2075 = vmatprep.subr.mxu0 0.0
    %2076 = vmatpush1.msra.mxu0 0.0
    %2077 = vmatprep.subr.mxu0 0.0
    %2078 = vmatpush1.msra.mxu0 0.0
    %2079 = vmatprep.subr.mxu0 %v113
    %2080 = vmatpush1.msra.mxu0 %v112
    %2081 = vmatprep.subr.mxu0 %v109
    %2082 = vmatpush1.msra.mxu0 %v108
    %2083 = vmatprep.subr.mxu0 0.0
    %2084 = vmatpush2.msra.mxu0 0.0
    %2085 = vmatprep.subr.mxu0 0.0
    %2086 = vmatpush2.msra.mxu0 0.0
    %2087 = vmatprep.subr.mxu0 0.0
    %2088 = vmatpush2.msra.mxu0 0.0
    %2089 = vmatprep.subr.mxu0 0.0
    %2090 = vmatpush2.msra.mxu0 0.0
    %2091 = vmatprep.subr.mxu0 0.0
    %2092 = vmatpush2.msra.mxu0 0.0
    %2093 = vmatprep.subr.mxu0 0.0
    %2094 = vmatpush2.msra.mxu0 0.0
    %2095 = vmatprep.subr.mxu0 0.0
    %2096 = vmatpush2.msra.mxu0 0.0
    %2097 = vmatprep.subr.mxu0 0.0
    %2098 = vmatpush2.msra.mxu0 0.0
    %2099 = vmatprep.subr.mxu0 0.0
    %2100 = vmatpush2.msra.mxu0 0.0
    %2101 = vmatprep.subr.mxu0 0.0
    %2102 = vmatpush2.msra.mxu0 0.0
    %2103 = vmatprep.subr.mxu0 0.0
    %2104 = vmatpush2.msra.mxu0 0.0
    %2105 = vmatprep.subr.mxu0 0.0
    %2106 = vmatpush2.msra.mxu0 0.0
    %2107 = vmatprep.subr.mxu0 0.0
    %2108 = vmatpush2.msra.mxu0 0.0
    %2109 = vmatprep.subr.mxu0 0.0
    %2110 = vmatpush2.msra.mxu0 0.0
    %2111 = vmatprep.subr.mxu0 0.0
    %2112 = vmatpush2.msra.mxu0 0.0
    %2113 = vmatprep.subr.mxu0 0.0
    %2114 = vmatpush2.msra.mxu0 0.0
    %2115 = vmatprep.mubr.f32.mxu0 0.0
    %2116 = vmatmul.mubr.f32.gmra.mxu0 %v2049
    %v2117 = vpop.f32.mrf.mxu0
    %v2118 = vadd.f32 0.0, %v2117
    %v2119 = vpop.f32.mrf.mxu0
    %v2120 = vadd.f32 0.0, %v2119
    %2121 = vdwg.mxu0
    %2122 = vmatprep.subr.mxu0 0.0
    %2123 = vmatpush1.msra.mxu0 0.0
    %2124 = vmatprep.subr.mxu0 0.0
    %2125 = vmatpush1.msra.mxu0 0.0
    %2126 = vmatprep.subr.mxu0 0.0
    %2127 = vmatpush1.msra.mxu0 0.0
    %2128 = vmatprep.subr.mxu0 0.0
    %2129 = vmatpush1.msra.mxu0 0.0
    %2130 = vmatprep.subr.mxu0 0.0
    %2131 = vmatpush1.msra.mxu0 0.0
    %2132 = vmatprep.subr.mxu0 0.0
    %2133 = vmatpush1.msra.mxu0 0.0
    %2134 = vmatprep.subr.mxu0 0.0
    %2135 = vmatpush1.msra.mxu0 0.0
    %2136 = vmatprep.subr.mxu0 0.0
    %2137 = vmatpush1.msra.mxu0 0.0
    %2138 = vmatprep.subr.mxu0 0.0
    %2139 = vmatpush1.msra.mxu0 0.0
    %2140 = vmatprep.subr.mxu0 0.0
    %2141 = vmatpush1.msra.mxu0 0.0
    %2142 = vmatprep.subr.mxu0 0.0
    %2143 = vmatpush1.msra.mxu0 0.0
    %2144 = vmatprep.subr.mxu0 0.0
    %2145 = vmatpush1.msra.mxu0 0.0
    %2146 = vmatprep.subr.mxu0 0.0
    %2147 = vmatpush1.msra.mxu0 0.0
    %2148 = vmatprep.subr.mxu0 0.0
    %2149 = vmatpush1.msra.mxu0 0.0
    %2150 = vmatprep.subr.mxu0 %v115
    %2151 = vmatpush1.msra.mxu0 %v114
    %2152 = vmatprep.subr.mxu0 %v111
    %2153 = vmatpush1.msra.mxu0 %v110
    %2154 = vmatprep.subr.mxu0 0.0
    %2155 = vmatpush2.msra.mxu0 0.0
    %2156 = vmatprep.subr.mxu0 0.0
    %2157 = vmatpush2.msra.mxu0 0.0
    %2158 = vmatprep.subr.mxu0 0.0
    %2159 = vmatpush2.msra.mxu0 0.0
    %2160 = vmatprep.subr.mxu0 0.0
    %2161 = vmatpush2.msra.mxu0 0.0
    %2162 = vmatprep.subr.mxu0 0.0
    %2163 = vmatpush2.msra.mxu0 0.0
    %2164 = vmatprep.subr.mxu0 0.0
    %2165 = vmatpush2.msra.mxu0 0.0
    %2166 = vmatprep.subr.mxu0 0.0
    %2167 = vmatpush2.msra.mxu0 0.0
    %2168 = vmatprep.subr.mxu0 0.0
    %2169 = vmatpush2.msra.mxu0 0.0
    %2170 = vmatprep.subr.mxu0 0.0
    %2171 = vmatpush2.msra.mxu0 0.0
    %2172 = vmatprep.subr.mxu0 0.0
    %2173 = vmatpush2.msra.mxu0 0.0
    %2174 = vmatprep.subr.mxu0 0.0
    %2175 = vmatpush2.msra.mxu0 0.0
    %2176 = vmatprep.subr.mxu0 0.0
    %2177 = vmatpush2.msra.mxu0 0.0
    %2178 = vmatprep.subr.mxu0 0.0
    %2179 = vmatpush2.msra.mxu0 0.0
    %2180 = vmatprep.subr.mxu0 0.0
    %2181 = vmatpush2.msra.mxu0 0.0
    %2182 = vmatprep.subr.mxu0 0.0
    %2183 = vmatpush2.msra.mxu0 0.0
    %2184 = vmatprep.subr.mxu0 0.0
    %2185 = vmatpush2.msra.mxu0 0.0
    %2186 = vmatprep.mubr.f32.mxu0 0.0
    %2187 = vmatmul.mubr.f32.gmra.mxu0 %v2049
    %v2188 = vpop.f32.mrf.mxu0
    %v2189 = vadd.f32 0.0, %v2188
    %v2190 = vpop.f32.mrf.mxu0
    %v2191 = vadd.f32 0.0, %v2190
    %2192 = vdwg.mxu0
    %v2193 = vadd.f32 %v1944, %v2118
    %v2194 = vadd.f32 %v1946, %v2120
    %v2195 = vadd.f32 %v2015, %v2189
    %v2196 = vadd.f32 %v2017, %v2191
    %v2197 = vxor.u32 %v2193, 2147483648
    %v2198 = vmul.f32 %v2197, 1.442695
    %v2199 = vpow.pop %v2198
    %v2200 = vadd.f32 %v2199, 1.0
    %v2201 = vrcp.pop %v2200
    %v2202 = vmul.f32 1.0, %v2201
    %v2203 = vxor.u32 %v2194, 2147483648
    %v2204 = vmul.f32 %v2203, 1.442695
    %v2205 = vpow.pop %v2204
    %v2206 = vadd.f32 %v2205, 1.0
    %v2207 = vrcp.pop %v2206
    %v2208 = vmul.f32 1.0, %v2207
    %v2209 = vxor.u32 %v2195, 2147483648
    %v2210 = vmul.f32 %v2209, 1.442695
    %v2211 = vpow.pop %v2210
    %v2212 = vadd.f32 %v2211, 1.0
    %v2213 = vrcp.pop %v2212
    %v2214 = vmul.f32 1.0, %v2213
    %v2215 = vtanh.pop %v2196
    %v2216 = vmul.f32 %v2208, %v1874
    %v2217 = vmul.f32 %v2202, %v2215
    %v2218 = vadd.f32 %v2216, %v2217
    %v2219 = vtanh.pop %v2218
    %v2220 = vmul.f32 %v2214, %v2219
    %2221 = vmatprep.subr.mxu0 %v105
    %2222 = vmatpush1.msra.mxu0 %v104
    %2223 = vmatprep.subr.mxu0 %v101
    %2224 = vmatpush1.msra.mxu0 %v100
    %2225 = vmatprep.subr.mxu0 %v97
    %2226 = vmatpush1.msra.mxu0 %v96
    %2227 = vmatprep.subr.mxu0 %v93
    %2228 = vmatpush1.msra.mxu0 %v92
    %2229 = vmatprep.subr.mxu0 %v89
    %2230 = vmatpush1.msra.mxu0 %v88
    %2231 = vmatprep.subr.mxu0 %v85
    %2232 = vmatpush1.msra.mxu0 %v84
    %2233 = vmatprep.subr.mxu0 %v81
    %2234 = vmatpush1.msra.mxu0 %v80
    %2235 = vmatprep.subr.mxu0 %v77
    %2236 = vmatpush1.msra.mxu0 %v76
    %2237 = vmatprep.subr.mxu0 %v73
    %2238 = vmatpush1.msra.mxu0 %v72
    %2239 = vmatprep.subr.mxu0 %v69
    %2240 = vmatpush1.msra.mxu0 %v68
    %2241 = vmatprep.subr.mxu0 %v65
    %2242 = vmatpush1.msra.mxu0 %v64
    %2243 = vmatprep.subr.mxu0 %v61
    %2244 = vmatpush1.msra.mxu0 %v60
    %2245 = vmatprep.subr.mxu0 %v57
    %2246 = vmatpush1.msra.mxu0 %v56
    %2247 = vmatprep.subr.mxu0 %v53
    %2248 = vmatpush1.msra.mxu0 %v52
    %2249 = vmatprep.subr.mxu0 %v49
    %2250 = vmatpush1.msra.mxu0 %v48
    %2251 = vmatprep.subr.mxu0 %v45
    %2252 = vmatpush1.msra.mxu0 %v44
    %2253 = vmatprep.subr.mxu0 0.0
    %2254 = vmatpush2.msra.mxu0 0.0
    %2255 = vmatprep.subr.mxu0 0.0
    %2256 = vmatpush2.msra.mxu0 0.0
    %2257 = vmatprep.subr.mxu0 0.0
    %2258 = vmatpush2.msra.mxu0 0.0
    %2259 = vmatprep.subr.mxu0 0.0
    %2260 = vmatpush2.msra.mxu0 0.0
    %2261 = vmatprep.subr.mxu0 0.0
    %2262 = vmatpush2.msra.mxu0 0.0
    %2263 = vmatprep.subr.mxu0 0.0
    %2264 = vmatpush2.msra.mxu0 0.0
    %2265 = vmatprep.subr.mxu0 0.0
    %2266 = vmatpush2.msra.mxu0 0.0
    %2267 = vmatprep.subr.mxu0 0.0
    %2268 = vmatpush2.msra.mxu0 0.0
    %2269 = vmatprep.subr.mxu0 0.0
    %2270 = vmatpush2.msra.mxu0 0.0
    %2271 = vmatprep.subr.mxu0 0.0
    %2272 = vmatpush2.msra.mxu0 0.0
    %2273 = vmatprep.subr.mxu0 0.0
    %2274 = vmatpush2.msra.mxu0 0.0
    %2275 = vmatprep.subr.mxu0 0.0
    %2276 = vmatpush2.msra.mxu0 0.0
    %2277 = vmatprep.subr.mxu0 0.0
    %2278 = vmatpush2.msra.mxu0 0.0
    %2279 = vmatprep.subr.mxu0 0.0
    %2280 = vmatpush2.msra.mxu0 0.0
    %2281 = vmatprep.subr.mxu0 0.0
    %2282 = vmatpush2.msra.mxu0 0.0
    %2283 = vmatprep.subr.mxu0 0.0
    %2284 = vmatpush2.msra.mxu0 0.0
    %2285 = vmatprep.mubr.f32.mxu0 0.0
    %2286 = vmatmul.mubr.f32.gmra.mxu0 %v2220
    %v2287 = vpop.f32.mrf.mxu0
    %v2288 = vadd.f32 %v121, %v2287
    %v2289 = vpop.f32.mrf.mxu0
    %v2290 = vadd.f32 %v125, %v2289
    %2291 = vdwg.mxu0
    %2292 = vmatprep.subr.mxu0 %v107
    %2293 = vmatpush1.msra.mxu0 %v106
    %2294 = vmatprep.subr.mxu0 %v103
    %2295 = vmatpush1.msra.mxu0 %v102
    %2296 = vmatprep.subr.mxu0 %v99
    %2297 = vmatpush1.msra.mxu0 %v98
    %2298 = vmatprep.subr.mxu0 %v95
    %2299 = vmatpush1.msra.mxu0 %v94
    %2300 = vmatprep.subr.mxu0 %v91
    %2301 = vmatpush1.msra.mxu0 %v90
    %2302 = vmatprep.subr.mxu0 %v87
    %2303 = vmatpush1.msra.mxu0 %v86
    %2304 = vmatprep.subr.mxu0 %v83
    %2305 = vmatpush1.msra.mxu0 %v82
    %2306 = vmatprep.subr.mxu0 %v79
    %2307 = vmatpush1.msra.mxu0 %v78
    %2308 = vmatprep.subr.mxu0 %v75
    %2309 = vmatpush1.msra.mxu0 %v74
    %2310 = vmatprep.subr.mxu0 %v71
    %2311 = vmatpush1.msra.mxu0 %v70
    %2312 = vmatprep.subr.mxu0 %v67
    %2313 = vmatpush1.msra.mxu0 %v66
    %2314 = vmatprep.subr.mxu0 %v63
    %2315 = vmatpush1.msra.mxu0 %v62
    %2316 = vmatprep.subr.mxu0 %v59
    %2317 = vmatpush1.msra.mxu0 %v58
    %2318 = vmatprep.subr.mxu0 %v55
    %2319 = vmatpush1.msra.mxu0 %v54
    %2320 = vmatprep.subr.mxu0 %v51
    %2321 = vmatpush1.msra.mxu0 %v50
    %2322 = vmatprep.subr.mxu0 %v47
    %2323 = vmatpush1.msra.mxu0 %v46
    %2324 = vmatprep.subr.mxu0 0.0
    %2325 = vmatpush2.msra.mxu0 0.0
    %2326 = vmatprep.subr.mxu0 0.0
    %2327 = vmatpush2.msra.mxu0 0.0
    %2328 = vmatprep.subr.mxu0 0.0
    %2329 = vmatpush2.msra.mxu0 0.0
    %2330 = vmatprep.subr.mxu0 0.0
    %2331 = vmatpush2.msra.mxu0 0.0
    %2332 = vmatprep.subr.mxu0 0.0
    %2333 = vmatpush2.msra.mxu0 0.0
    %2334 = vmatprep.subr.mxu0 0.0
    %2335 = vmatpush2.msra.mxu0 0.0
    %2336 = vmatprep.subr.mxu0 0.0
    %2337 = vmatpush2.msra.mxu0 0.0
    %2338 = vmatprep.subr.mxu0 0.0
    %2339 = vmatpush2.msra.mxu0 0.0
    %2340 = vmatprep.subr.mxu0 0.0
    %2341 = vmatpush2.msra.mxu0 0.0
    %2342 = vmatprep.subr.mxu0 0.0
    %2343 = vmatpush2.msra.mxu0 0.0
    %2344 = vmatprep.subr.mxu0 0.0
    %2345 = vmatpush2.msra.mxu0 0.0
    %2346 = vmatprep.subr.mxu0 0.0
    %2347 = vmatpush2.msra.mxu0 0.0
    %2348 = vmatprep.subr.mxu0 0.0
    %2349 = vmatpush2.msra.mxu0 0.0
    %2350 = vmatprep.subr.mxu0 0.0
    %2351 = vmatpush2.msra.mxu0 0.0
    %2352 = vmatprep.subr.mxu0 0.0
    %2353 = vmatpush2.msra.mxu0 0.0
    %2354 = vmatprep.subr.mxu0 0.0
    %2355 = vmatpush2.msra.mxu0 0.0
    %2356 = vmatprep.mubr.f32.mxu0 0.0
    %2357 = vmatmul.mubr.f32.gmra.mxu0 %v2220
    %v2358 = vpop.f32.mrf.mxu0
    %v2359 = vadd.f32 %v129, %v2358
    %v2360 = vpop.f32.mrf.mxu0
    %v2361 = vadd.f32 %v133, %v2360
    %2362 = vdwg.mxu0
    %v2363 = vld [vmem:[%s0 + $0x6] sm:$0x1]
    %v2364 = vld [vmem:[%s0 + $0xe] sm:$0x1]
    %v2365 = vld [vmem:[%s0 + $0x16] sm:$0x1]
    %v2366 = vld [vmem:[%s0 + $0x1e] sm:$0x1]
    %v2367 = vld [vmem:[%s0 + $0x26] sm:$0x1]
    %v2368 = vld [vmem:[%s0 + $0x2e] sm:$0x1]
    %v2369 = vld [vmem:[%s0 + $0x36] sm:$0x1]
    %v2370 = vld [vmem:[%s0 + $0x3e] sm:$0x1]
    %v2379 = vrot.slane %v2364, 7
    %v2380 = vsel %vm299, %v2379, %v2363
    %v2381 = vrot.slane %v2365, 6
    %v2382 = vsel %vm302, %v2381, %v2380
    %v2383 = vrot.slane %v2366, 5
    %v2384 = vsel %vm305, %v2383, %v2382
    %v2385 = vrot.slane %v2367, 4
    %v2386 = vsel %vm308, %v2385, %v2384
    %v2387 = vrot.slane %v2368, 3
    %v2388 = vsel %vm311, %v2387, %v2386
    %v2389 = vrot.slane %v2369, 2
    %v2390 = vsel %vm314, %v2389, %v2388
    %v2391 = vrot.slane %v2370, 1
    %v2392 = vsel %vm317, %v2391, %v2390
    %v2393 = vsel %vm319, %v2392, 0
    %2395 = vmatprep.subr.mxu0 0.0
    %2396 = vmatpush1.msra.mxu0 0.0
    %2397 = vmatprep.subr.mxu0 0.0
    %2398 = vmatpush1.msra.mxu0 0.0
    %2399 = vmatprep.subr.mxu0 0.0
    %2400 = vmatpush1.msra.mxu0 0.0
    %2401 = vmatprep.subr.mxu0 0.0
    %2402 = vmatpush1.msra.mxu0 0.0
    %2403 = vmatprep.subr.mxu0 0.0
    %2404 = vmatpush1.msra.mxu0 0.0
    %2405 = vmatprep.subr.mxu0 0.0
    %2406 = vmatpush1.msra.mxu0 0.0
    %2407 = vmatprep.subr.mxu0 0.0
    %2408 = vmatpush1.msra.mxu0 0.0
    %2409 = vmatprep.subr.mxu0 0.0
    %2410 = vmatpush1.msra.mxu0 0.0
    %2411 = vmatprep.subr.mxu0 0.0
    %2412 = vmatpush1.msra.mxu0 0.0
    %2413 = vmatprep.subr.mxu0 0.0
    %2414 = vmatpush1.msra.mxu0 0.0
    %2415 = vmatprep.subr.mxu0 0.0
    %2416 = vmatpush1.msra.mxu0 0.0
    %2417 = vmatprep.subr.mxu0 0.0
    %2418 = vmatpush1.msra.mxu0 0.0
    %2419 = vmatprep.subr.mxu0 0.0
    %2420 = vmatpush1.msra.mxu0 0.0
    %2421 = vmatprep.subr.mxu0 0.0
    %2422 = vmatpush1.msra.mxu0 0.0
    %2423 = vmatprep.subr.mxu0 %v113
    %2424 = vmatpush1.msra.mxu0 %v112
    %2425 = vmatprep.subr.mxu0 %v109
    %2426 = vmatpush1.msra.mxu0 %v108
    %2427 = vmatprep.subr.mxu0 0.0
    %2428 = vmatpush2.msra.mxu0 0.0
    %2429 = vmatprep.subr.mxu0 0.0
    %2430 = vmatpush2.msra.mxu0 0.0
    %2431 = vmatprep.subr.mxu0 0.0
    %2432 = vmatpush2.msra.mxu0 0.0
    %2433 = vmatprep.subr.mxu0 0.0
    %2434 = vmatpush2.msra.mxu0 0.0
    %2435 = vmatprep.subr.mxu0 0.0
    %2436 = vmatpush2.msra.mxu0 0.0
    %2437 = vmatprep.subr.mxu0 0.0
    %2438 = vmatpush2.msra.mxu0 0.0
    %2439 = vmatprep.subr.mxu0 0.0
    %2440 = vmatpush2.msra.mxu0 0.0
    %2441 = vmatprep.subr.mxu0 0.0
    %2442 = vmatpush2.msra.mxu0 0.0
    %2443 = vmatprep.subr.mxu0 0.0
    %2444 = vmatpush2.msra.mxu0 0.0
    %2445 = vmatprep.subr.mxu0 0.0
    %2446 = vmatpush2.msra.mxu0 0.0
    %2447 = vmatprep.subr.mxu0 0.0
    %2448 = vmatpush2.msra.mxu0 0.0
    %2449 = vmatprep.subr.mxu0 0.0
    %2450 = vmatpush2.msra.mxu0 0.0
    %2451 = vmatprep.subr.mxu0 0.0
    %2452 = vmatpush2.msra.mxu0 0.0
    %2453 = vmatprep.subr.mxu0 0.0
    %2454 = vmatpush2.msra.mxu0 0.0
    %2455 = vmatprep.subr.mxu0 0.0
    %2456 = vmatpush2.msra.mxu0 0.0
    %2457 = vmatprep.subr.mxu0 0.0
    %2458 = vmatpush2.msra.mxu0 0.0
    %2459 = vmatprep.mubr.f32.mxu0 0.0
    %2460 = vmatmul.mubr.f32.gmra.mxu0 %v2393
    %v2461 = vpop.f32.mrf.mxu0
    %v2462 = vadd.f32 0.0, %v2461
    %v2463 = vpop.f32.mrf.mxu0
    %v2464 = vadd.f32 0.0, %v2463
    %2465 = vdwg.mxu0
    %2466 = vmatprep.subr.mxu0 0.0
    %2467 = vmatpush1.msra.mxu0 0.0
    %2468 = vmatprep.subr.mxu0 0.0
    %2469 = vmatpush1.msra.mxu0 0.0
    %2470 = vmatprep.subr.mxu0 0.0
    %2471 = vmatpush1.msra.mxu0 0.0
    %2472 = vmatprep.subr.mxu0 0.0
    %2473 = vmatpush1.msra.mxu0 0.0
    %2474 = vmatprep.subr.mxu0 0.0
    %2475 = vmatpush1.msra.mxu0 0.0
    %2476 = vmatprep.subr.mxu0 0.0
    %2477 = vmatpush1.msra.mxu0 0.0
    %2478 = vmatprep.subr.mxu0 0.0
    %2479 = vmatpush1.msra.mxu0 0.0
    %2480 = vmatprep.subr.mxu0 0.0
    %2481 = vmatpush1.msra.mxu0 0.0
    %2482 = vmatprep.subr.mxu0 0.0
    %2483 = vmatpush1.msra.mxu0 0.0
    %2484 = vmatprep.subr.mxu0 0.0
    %2485 = vmatpush1.msra.mxu0 0.0
    %2486 = vmatprep.subr.mxu0 0.0
    %2487 = vmatpush1.msra.mxu0 0.0
    %2488 = vmatprep.subr.mxu0 0.0
    %2489 = vmatpush1.msra.mxu0 0.0
    %2490 = vmatprep.subr.mxu0 0.0
    %2491 = vmatpush1.msra.mxu0 0.0
    %2492 = vmatprep.subr.mxu0 0.0
    %2493 = vmatpush1.msra.mxu0 0.0
    %2494 = vmatprep.subr.mxu0 %v115
    %2495 = vmatpush1.msra.mxu0 %v114
    %2496 = vmatprep.subr.mxu0 %v111
    %2497 = vmatpush1.msra.mxu0 %v110
    %2498 = vmatprep.subr.mxu0 0.0
    %2499 = vmatpush2.msra.mxu0 0.0
    %2500 = vmatprep.subr.mxu0 0.0
    %2501 = vmatpush2.msra.mxu0 0.0
    %2502 = vmatprep.subr.mxu0 0.0
    %2503 = vmatpush2.msra.mxu0 0.0
    %2504 = vmatprep.subr.mxu0 0.0
    %2505 = vmatpush2.msra.mxu0 0.0
    %2506 = vmatprep.subr.mxu0 0.0
    %2507 = vmatpush2.msra.mxu0 0.0
    %2508 = vmatprep.subr.mxu0 0.0
    %2509 = vmatpush2.msra.mxu0 0.0
    %2510 = vmatprep.subr.mxu0 0.0
    %2511 = vmatpush2.msra.mxu0 0.0
    %2512 = vmatprep.subr.mxu0 0.0
    %2513 = vmatpush2.msra.mxu0 0.0
    %2514 = vmatprep.subr.mxu0 0.0
    %2515 = vmatpush2.msra.mxu0 0.0
    %2516 = vmatprep.subr.mxu0 0.0
    %2517 = vmatpush2.msra.mxu0 0.0
    %2518 = vmatprep.subr.mxu0 0.0
    %2519 = vmatpush2.msra.mxu0 0.0
    %2520 = vmatprep.subr.mxu0 0.0
    %2521 = vmatpush2.msra.mxu0 0.0
    %2522 = vmatprep.subr.mxu0 0.0
    %2523 = vmatpush2.msra.mxu0 0.0
    %2524 = vmatprep.subr.mxu0 0.0
    %2525 = vmatpush2.msra.mxu0 0.0
    %2526 = vmatprep.subr.mxu0 0.0
    %2527 = vmatpush2.msra.mxu0 0.0
    %2528 = vmatprep.subr.mxu0 0.0
    %2529 = vmatpush2.msra.mxu0 0.0
    %2530 = vmatprep.mubr.f32.mxu0 0.0
    %2531 = vmatmul.mubr.f32.gmra.mxu0 %v2393
    %v2532 = vpop.f32.mrf.mxu0
    %v2533 = vadd.f32 0.0, %v2532
    %v2534 = vpop.f32.mrf.mxu0
    %v2535 = vadd.f32 0.0, %v2534
    %2536 = vdwg.mxu0
    %v2537 = vadd.f32 %v2288, %v2462
    %v2538 = vadd.f32 %v2290, %v2464
    %v2539 = vadd.f32 %v2359, %v2533
    %v2540 = vadd.f32 %v2361, %v2535
    %v2541 = vxor.u32 %v2537, 2147483648
    %v2542 = vmul.f32 %v2541, 1.442695
    %v2543 = vpow.pop %v2542
    %v2544 = vadd.f32 %v2543, 1.0
    %v2545 = vrcp.pop %v2544
    %v2546 = vmul.f32 1.0, %v2545
    %v2547 = vxor.u32 %v2538, 2147483648
    %v2548 = vmul.f32 %v2547, 1.442695
    %v2549 = vpow.pop %v2548
    %v2550 = vadd.f32 %v2549, 1.0
    %v2551 = vrcp.pop %v2550
    %v2552 = vmul.f32 1.0, %v2551
    %v2553 = vxor.u32 %v2539, 2147483648
    %v2554 = vmul.f32 %v2553, 1.442695
    %v2555 = vpow.pop %v2554
    %v2556 = vadd.f32 %v2555, 1.0
    %v2557 = vrcp.pop %v2556
    %v2558 = vmul.f32 1.0, %v2557
    %v2559 = vtanh.pop %v2540
    %v2560 = vmul.f32 %v2552, %v2218
    %v2561 = vmul.f32 %v2546, %v2559
    %v2562 = vadd.f32 %v2560, %v2561
    %v2563 = vtanh.pop %v2562
    %v2564 = vmul.f32 %v2558, %v2563
    %2565 = vmatprep.subr.mxu0 %v105
    %2566 = vmatpush1.msra.mxu0 %v104
    %2567 = vmatprep.subr.mxu0 %v101
    %2568 = vmatpush1.msra.mxu0 %v100
    %2569 = vmatprep.subr.mxu0 %v97
    %2570 = vmatpush1.msra.mxu0 %v96
    %2571 = vmatprep.subr.mxu0 %v93
    %2572 = vmatpush1.msra.mxu0 %v92
    %2573 = vmatprep.subr.mxu0 %v89
    %2574 = vmatpush1.msra.mxu0 %v88
    %2575 = vmatprep.subr.mxu0 %v85
    %2576 = vmatpush1.msra.mxu0 %v84
    %2577 = vmatprep.subr.mxu0 %v81
    %2578 = vmatpush1.msra.mxu0 %v80
    %2579 = vmatprep.subr.mxu0 %v77
    %2580 = vmatpush1.msra.mxu0 %v76
    %2581 = vmatprep.subr.mxu0 %v73
    %2582 = vmatpush1.msra.mxu0 %v72
    %2583 = vmatprep.subr.mxu0 %v69
    %2584 = vmatpush1.msra.mxu0 %v68
    %2585 = vmatprep.subr.mxu0 %v65
    %2586 = vmatpush1.msra.mxu0 %v64
    %2587 = vmatprep.subr.mxu0 %v61
    %2588 = vmatpush1.msra.mxu0 %v60
    %2589 = vmatprep.subr.mxu0 %v57
    %2590 = vmatpush1.msra.mxu0 %v56
    %2591 = vmatprep.subr.mxu0 %v53
    %2592 = vmatpush1.msra.mxu0 %v52
    %2593 = vmatprep.subr.mxu0 %v49
    %2594 = vmatpush1.msra.mxu0 %v48
    %2595 = vmatprep.subr.mxu0 %v45
    %2596 = vmatpush1.msra.mxu0 %v44
    %2597 = vmatprep.subr.mxu0 0.0
    %2598 = vmatpush2.msra.mxu0 0.0
    %2599 = vmatprep.subr.mxu0 0.0
    %2600 = vmatpush2.msra.mxu0 0.0
    %2601 = vmatprep.subr.mxu0 0.0
    %2602 = vmatpush2.msra.mxu0 0.0
    %2603 = vmatprep.subr.mxu0 0.0
    %2604 = vmatpush2.msra.mxu0 0.0
    %2605 = vmatprep.subr.mxu0 0.0
    %2606 = vmatpush2.msra.mxu0 0.0
    %2607 = vmatprep.subr.mxu0 0.0
    %2608 = vmatpush2.msra.mxu0 0.0
    %2609 = vmatprep.subr.mxu0 0.0
    %2610 = vmatpush2.msra.mxu0 0.0
    %2611 = vmatprep.subr.mxu0 0.0
    %2612 = vmatpush2.msra.mxu0 0.0
    %2613 = vmatprep.subr.mxu0 0.0
    %2614 = vmatpush2.msra.mxu0 0.0
    %2615 = vmatprep.subr.mxu0 0.0
    %2616 = vmatpush2.msra.mxu0 0.0
    %2617 = vmatprep.subr.mxu0 0.0
    %2618 = vmatpush2.msra.mxu0 0.0
    %2619 = vmatprep.subr.mxu0 0.0
    %2620 = vmatpush2.msra.mxu0 0.0
    %2621 = vmatprep.subr.mxu0 0.0
    %2622 = vmatpush2.msra.mxu0 0.0
    %2623 = vmatprep.subr.mxu0 0.0
    %2624 = vmatpush2.msra.mxu0 0.0
    %2625 = vmatprep.subr.mxu0 0.0
    %2626 = vmatpush2.msra.mxu0 0.0
    %2627 = vmatprep.subr.mxu0 0.0
    %2628 = vmatpush2.msra.mxu0 0.0
    %2629 = vmatprep.mubr.f32.mxu0 0.0
    %2630 = vmatmul.mubr.f32.gmra.mxu0 %v2564
    %v2631 = vpop.f32.mrf.mxu0
    %v2632 = vadd.f32 %v121, %v2631
    %v2633 = vpop.f32.mrf.mxu0
    %v2634 = vadd.f32 %v125, %v2633
    %2635 = vdwg.mxu0
    %2636 = vmatprep.subr.mxu0 %v107
    %2637 = vmatpush1.msra.mxu0 %v106
    %2638 = vmatprep.subr.mxu0 %v103
    %2639 = vmatpush1.msra.mxu0 %v102
    %2640 = vmatprep.subr.mxu0 %v99
    %2641 = vmatpush1.msra.mxu0 %v98
    %2642 = vmatprep.subr.mxu0 %v95
    %2643 = vmatpush1.msra.mxu0 %v94
    %2644 = vmatprep.subr.mxu0 %v91
    %2645 = vmatpush1.msra.mxu0 %v90
    %2646 = vmatprep.subr.mxu0 %v87
    %2647 = vmatpush1.msra.mxu0 %v86
    %2648 = vmatprep.subr.mxu0 %v83
    %2649 = vmatpush1.msra.mxu0 %v82
    %2650 = vmatprep.subr.mxu0 %v79
    %2651 = vmatpush1.msra.mxu0 %v78
    %2652 = vmatprep.subr.mxu0 %v75
    %2653 = vmatpush1.msra.mxu0 %v74
    %2654 = vmatprep.subr.mxu0 %v71
    %2655 = vmatpush1.msra.mxu0 %v70
    %2656 = vmatprep.subr.mxu0 %v67
    %2657 = vmatpush1.msra.mxu0 %v66
    %2658 = vmatprep.subr.mxu0 %v63
    %2659 = vmatpush1.msra.mxu0 %v62
    %2660 = vmatprep.subr.mxu0 %v59
    %2661 = vmatpush1.msra.mxu0 %v58
    %2662 = vmatprep.subr.mxu0 %v55
    %2663 = vmatpush1.msra.mxu0 %v54
    %2664 = vmatprep.subr.mxu0 %v51
    %2665 = vmatpush1.msra.mxu0 %v50
    %2666 = vmatprep.subr.mxu0 %v47
    %2667 = vmatpush1.msra.mxu0 %v46
    %2668 = vmatprep.subr.mxu0 0.0
    %2669 = vmatpush2.msra.mxu0 0.0
    %2670 = vmatprep.subr.mxu0 0.0
    %2671 = vmatpush2.msra.mxu0 0.0
    %2672 = vmatprep.subr.mxu0 0.0
    %2673 = vmatpush2.msra.mxu0 0.0
    %2674 = vmatprep.subr.mxu0 0.0
    %2675 = vmatpush2.msra.mxu0 0.0
    %2676 = vmatprep.subr.mxu0 0.0
    %2677 = vmatpush2.msra.mxu0 0.0
    %2678 = vmatprep.subr.mxu0 0.0
    %2679 = vmatpush2.msra.mxu0 0.0
    %2680 = vmatprep.subr.mxu0 0.0
    %2681 = vmatpush2.msra.mxu0 0.0
    %2682 = vmatprep.subr.mxu0 0.0
    %2683 = vmatpush2.msra.mxu0 0.0
    %2684 = vmatprep.subr.mxu0 0.0
    %2685 = vmatpush2.msra.mxu0 0.0
    %2686 = vmatprep.subr.mxu0 0.0
    %2687 = vmatpush2.msra.mxu0 0.0
    %2688 = vmatprep.subr.mxu0 0.0
    %2689 = vmatpush2.msra.mxu0 0.0
    %2690 = vmatprep.subr.mxu0 0.0
    %2691 = vmatpush2.msra.mxu0 0.0
    %2692 = vmatprep.subr.mxu0 0.0
    %2693 = vmatpush2.msra.mxu0 0.0
    %2694 = vmatprep.subr.mxu0 0.0
    %2695 = vmatpush2.msra.mxu0 0.0
    %2696 = vmatprep.subr.mxu0 0.0
    %2697 = vmatpush2.msra.mxu0 0.0
    %2698 = vmatprep.subr.mxu0 0.0
    %2699 = vmatpush2.msra.mxu0 0.0
    %2700 = vmatprep.mubr.f32.mxu0 0.0
    %2701 = vmatmul.mubr.f32.gmra.mxu0 %v2564
    %v2702 = vpop.f32.mrf.mxu0
    %v2703 = vadd.f32 %v129, %v2702
    %v2704 = vpop.f32.mrf.mxu0
    %v2705 = vadd.f32 %v133, %v2704
    %2706 = vdwg.mxu0
    %v2707 = vld [vmem:[%s0 + $0x7] sm:$0x1]
    %v2708 = vld [vmem:[%s0 + $0xf] sm:$0x1]
    %v2709 = vld [vmem:[%s0 + $0x17] sm:$0x1]
    %v2710 = vld [vmem:[%s0 + $0x1f] sm:$0x1]
    %v2711 = vld [vmem:[%s0 + $0x27] sm:$0x1]
    %v2712 = vld [vmem:[%s0 + $0x2f] sm:$0x1]
    %v2713 = vld [vmem:[%s0 + $0x37] sm:$0x1]
    %v2714 = vld [vmem:[%s0 + $0x3f] sm:$0x1]
    %v2723 = vrot.slane %v2708, 7
    %v2724 = vsel %vm299, %v2723, %v2707
    %v2725 = vrot.slane %v2709, 6
    %v2726 = vsel %vm302, %v2725, %v2724
    %v2727 = vrot.slane %v2710, 5
    %v2728 = vsel %vm305, %v2727, %v2726
    %v2729 = vrot.slane %v2711, 4
    %v2730 = vsel %vm308, %v2729, %v2728
    %v2731 = vrot.slane %v2712, 3
    %v2732 = vsel %vm311, %v2731, %v2730
    %v2733 = vrot.slane %v2713, 2
    %v2734 = vsel %vm314, %v2733, %v2732
    %v2735 = vrot.slane %v2714, 1
    %v2736 = vsel %vm317, %v2735, %v2734
    %v2737 = vsel %vm319, %v2736, 0
    %2739 = vmatprep.subr.mxu0 0.0
    %2740 = vmatpush1.msra.mxu0 0.0
    %2741 = vmatprep.subr.mxu0 0.0
    %2742 = vmatpush1.msra.mxu0 0.0
    %2743 = vmatprep.subr.mxu0 0.0
    %2744 = vmatpush1.msra.mxu0 0.0
    %2745 = vmatprep.subr.mxu0 0.0
    %2746 = vmatpush1.msra.mxu0 0.0
    %2747 = vmatprep.subr.mxu0 0.0
    %2748 = vmatpush1.msra.mxu0 0.0
    %2749 = vmatprep.subr.mxu0 0.0
    %2750 = vmatpush1.msra.mxu0 0.0
    %2751 = vmatprep.subr.mxu0 0.0
    %2752 = vmatpush1.msra.mxu0 0.0
    %2753 = vmatprep.subr.mxu0 0.0
    %2754 = vmatpush1.msra.mxu0 0.0
    %2755 = vmatprep.subr.mxu0 0.0
    %2756 = vmatpush1.msra.mxu0 0.0
    %2757 = vmatprep.subr.mxu0 0.0
    %2758 = vmatpush1.msra.mxu0 0.0
    %2759 = vmatprep.subr.mxu0 0.0
    %2760 = vmatpush1.msra.mxu0 0.0
    %2761 = vmatprep.subr.mxu0 0.0
    %2762 = vmatpush1.msra.mxu0 0.0
    %2763 = vmatprep.subr.mxu0 0.0
    %2764 = vmatpush1.msra.mxu0 0.0
    %2765 = vmatprep.subr.mxu0 0.0
    %2766 = vmatpush1.msra.mxu0 0.0
    %2767 = vmatprep.subr.mxu0 %v113
    %2768 = vmatpush1.msra.mxu0 %v112
    %2769 = vmatprep.subr.mxu0 %v109
    %2770 = vmatpush1.msra.mxu0 %v108
    %2771 = vmatprep.subr.mxu0 0.0
    %2772 = vmatpush2.msra.mxu0 0.0
    %2773 = vmatprep.subr.mxu0 0.0
    %2774 = vmatpush2.msra.mxu0 0.0
    %2775 = vmatprep.subr.mxu0 0.0
    %2776 = vmatpush2.msra.mxu0 0.0
    %2777 = vmatprep.subr.mxu0 0.0
    %2778 = vmatpush2.msra.mxu0 0.0
    %2779 = vmatprep.subr.mxu0 0.0
    %2780 = vmatpush2.msra.mxu0 0.0
    %2781 = vmatprep.subr.mxu0 0.0
    %2782 = vmatpush2.msra.mxu0 0.0
    %2783 = vmatprep.subr.mxu0 0.0
    %2784 = vmatpush2.msra.mxu0 0.0
    %2785 = vmatprep.subr.mxu0 0.0
    %2786 = vmatpush2.msra.mxu0 0.0
    %2787 = vmatprep.subr.mxu0 0.0
    %2788 = vmatpush2.msra.mxu0 0.0
    %2789 = vmatprep.subr.mxu0 0.0
    %2790 = vmatpush2.msra.mxu0 0.0
    %2791 = vmatprep.subr.mxu0 0.0
    %2792 = vmatpush2.msra.mxu0 0.0
    %2793 = vmatprep.subr.mxu0 0.0
    %2794 = vmatpush2.msra.mxu0 0.0
    %2795 = vmatprep.subr.mxu0 0.0
    %2796 = vmatpush2.msra.mxu0 0.0
    %2797 = vmatprep.subr.mxu0 0.0
    %2798 = vmatpush2.msra.mxu0 0.0
    %2799 = vmatprep.subr.mxu0 0.0
    %2800 = vmatpush2.msra.mxu0 0.0
    %2801 = vmatprep.subr.mxu0 0.0
    %2802 = vmatpush2.msra.mxu0 0.0
    %2803 = vmatprep.mubr.f32.mxu0 0.0
    %2804 = vmatmul.mubr.f32.gmra.mxu0 %v2737
    %v2805 = vpop.f32.mrf.mxu0
    %v2806 = vadd.f32 0.0, %v2805
    %v2807 = vpop.f32.mrf.mxu0
    %v2808 = vadd.f32 0.0, %v2807
    %2809 = vdwg.mxu0
    %2810 = vmatprep.subr.mxu0 0.0
    %2811 = vmatpush1.msra.mxu0 0.0
    %2812 = vmatprep.subr.mxu0 0.0
    %2813 = vmatpush1.msra.mxu0 0.0
    %2814 = vmatprep.subr.mxu0 0.0
    %2815 = vmatpush1.msra.mxu0 0.0
    %2816 = vmatprep.subr.mxu0 0.0
    %2817 = vmatpush1.msra.mxu0 0.0
    %2818 = vmatprep.subr.mxu0 0.0
    %2819 = vmatpush1.msra.mxu0 0.0
    %2820 = vmatprep.subr.mxu0 0.0
    %2821 = vmatpush1.msra.mxu0 0.0
    %2822 = vmatprep.subr.mxu0 0.0
    %2823 = vmatpush1.msra.mxu0 0.0
    %2824 = vmatprep.subr.mxu0 0.0
    %2825 = vmatpush1.msra.mxu0 0.0
    %2826 = vmatprep.subr.mxu0 0.0
    %2827 = vmatpush1.msra.mxu0 0.0
    %2828 = vmatprep.subr.mxu0 0.0
    %2829 = vmatpush1.msra.mxu0 0.0
    %2830 = vmatprep.subr.mxu0 0.0
    %2831 = vmatpush1.msra.mxu0 0.0
    %2832 = vmatprep.subr.mxu0 0.0
    %2833 = vmatpush1.msra.mxu0 0.0
    %2834 = vmatprep.subr.mxu0 0.0
    %2835 = vmatpush1.msra.mxu0 0.0
    %2836 = vmatprep.subr.mxu0 0.0
    %2837 = vmatpush1.msra.mxu0 0.0
    %2838 = vmatprep.subr.mxu0 %v115
    %2839 = vmatpush1.msra.mxu0 %v114
    %2840 = vmatprep.subr.mxu0 %v111
    %2841 = vmatpush1.msra.mxu0 %v110
    %2842 = vmatprep.subr.mxu0 0.0
    %2843 = vmatpush2.msra.mxu0 0.0
    %2844 = vmatprep.subr.mxu0 0.0
    %2845 = vmatpush2.msra.mxu0 0.0
    %2846 = vmatprep.subr.mxu0 0.0
    %2847 = vmatpush2.msra.mxu0 0.0
    %2848 = vmatprep.subr.mxu0 0.0
    %2849 = vmatpush2.msra.mxu0 0.0
    %2850 = vmatprep.subr.mxu0 0.0
    %2851 = vmatpush2.msra.mxu0 0.0
    %2852 = vmatprep.subr.mxu0 0.0
    %2853 = vmatpush2.msra.mxu0 0.0
    %2854 = vmatprep.subr.mxu0 0.0
    %2855 = vmatpush2.msra.mxu0 0.0
    %2856 = vmatprep.subr.mxu0 0.0
    %2857 = vmatpush2.msra.mxu0 0.0
    %2858 = vmatprep.subr.mxu0 0.0
    %2859 = vmatpush2.msra.mxu0 0.0
    %2860 = vmatprep.subr.mxu0 0.0
    %2861 = vmatpush2.msra.mxu0 0.0
    %2862 = vmatprep.subr.mxu0 0.0
    %2863 = vmatpush2.msra.mxu0 0.0
    %2864 = vmatprep.subr.mxu0 0.0
    %2865 = vmatpush2.msra.mxu0 0.0
    %2866 = vmatprep.subr.mxu0 0.0
    %2867 = vmatpush2.msra.mxu0 0.0
    %2868 = vmatprep.subr.mxu0 0.0
    %2869 = vmatpush2.msra.mxu0 0.0
    %2870 = vmatprep.subr.mxu0 0.0
    %2871 = vmatpush2.msra.mxu0 0.0
    %2872 = vmatprep.subr.mxu0 0.0
    %2873 = vmatpush2.msra.mxu0 0.0
    %2874 = vmatprep.mubr.f32.mxu0 0.0
    %2875 = vmatmul.mubr.f32.gmra.mxu0 %v2737
    %v2876 = vpop.f32.mrf.mxu0
    %v2877 = vadd.f32 0.0, %v2876
    %v2878 = vpop.f32.mrf.mxu0
    %v2879 = vadd.f32 0.0, %v2878
    %2880 = vdwg.mxu0
    %v2881 = vadd.f32 %v2632, %v2806
    %v2882 = vadd.f32 %v2634, %v2808
    %v2883 = vadd.f32 %v2703, %v2877
    %v2884 = vadd.f32 %v2705, %v2879
    %v2885 = vxor.u32 %v2881, 2147483648
    %v2886 = vmul.f32 %v2885, 1.442695
    %v2887 = vpow.pop %v2886
    %v2888 = vadd.f32 %v2887, 1.0
    %v2889 = vrcp.pop %v2888
    %v2890 = vmul.f32 1.0, %v2889
    %v2891 = vxor.u32 %v2882, 2147483648
    %v2892 = vmul.f32 %v2891, 1.442695
    %v2893 = vpow.pop %v2892
    %v2894 = vadd.f32 %v2893, 1.0
    %v2895 = vrcp.pop %v2894
    %v2896 = vmul.f32 1.0, %v2895
    %v2897 = vxor.u32 %v2883, 2147483648
    %v2898 = vmul.f32 %v2897, 1.442695
    %v2899 = vpow.pop %v2898
    %v2900 = vadd.f32 %v2899, 1.0
    %v2901 = vrcp.pop %v2900
    %v2902 = vmul.f32 1.0, %v2901
    %v2903 = vtanh.pop %v2884
    %v2904 = vmul.f32 %v2896, %v2562
    %v2905 = vmul.f32 %v2890, %v2903
    %v2906 = vadd.f32 %v2904, %v2905
    %v2907 = vtanh.pop %v2906
    %v2908 = vmul.f32 %v2902, %v2907
    %2909 = vmatprep.subr.mxu0 %v105
    %2910 = vmatpush1.msra.mxu0 %v104
    %2911 = vmatprep.subr.mxu0 %v101
    %2912 = vmatpush1.msra.mxu0 %v100
    %2913 = vmatprep.subr.mxu0 %v97
    %2914 = vmatpush1.msra.mxu0 %v96
    %2915 = vmatprep.subr.mxu0 %v93
    %2916 = vmatpush1.msra.mxu0 %v92
    %2917 = vmatprep.subr.mxu0 %v89
    %2918 = vmatpush1.msra.mxu0 %v88
    %2919 = vmatprep.subr.mxu0 %v85
    %2920 = vmatpush1.msra.mxu0 %v84
    %2921 = vmatprep.subr.mxu0 %v81
    %2922 = vmatpush1.msra.mxu0 %v80
    %2923 = vmatprep.subr.mxu0 %v77
    %2924 = vmatpush1.msra.mxu0 %v76
    %2925 = vmatprep.subr.mxu0 %v73
    %2926 = vmatpush1.msra.mxu0 %v72
    %2927 = vmatprep.subr.mxu0 %v69
    %2928 = vmatpush1.msra.mxu0 %v68
    %2929 = vmatprep.subr.mxu0 %v65
    %2930 = vmatpush1.msra.mxu0 %v64
    %2931 = vmatprep.subr.mxu0 %v61
    %2932 = vmatpush1.msra.mxu0 %v60
    %2933 = vmatprep.subr.mxu0 %v57
    %2934 = vmatpush1.msra.mxu0 %v56
    %2935 = vmatprep.subr.mxu0 %v53
    %2936 = vmatpush1.msra.mxu0 %v52
    %2937 = vmatprep.subr.mxu0 %v49
    %2938 = vmatpush1.msra.mxu0 %v48
    %2939 = vmatprep.subr.mxu0 %v45
    %2940 = vmatpush1.msra.mxu0 %v44
    %2941 = vmatprep.subr.mxu0 0.0
    %2942 = vmatpush2.msra.mxu0 0.0
    %2943 = vmatprep.subr.mxu0 0.0
    %2944 = vmatpush2.msra.mxu0 0.0
    %2945 = vmatprep.subr.mxu0 0.0
    %2946 = vmatpush2.msra.mxu0 0.0
    %2947 = vmatprep.subr.mxu0 0.0
    %2948 = vmatpush2.msra.mxu0 0.0
    %2949 = vmatprep.subr.mxu0 0.0
    %2950 = vmatpush2.msra.mxu0 0.0
    %2951 = vmatprep.subr.mxu0 0.0
    %2952 = vmatpush2.msra.mxu0 0.0
    %2953 = vmatprep.subr.mxu0 0.0
    %2954 = vmatpush2.msra.mxu0 0.0
    %2955 = vmatprep.subr.mxu0 0.0
    %2956 = vmatpush2.msra.mxu0 0.0
    %2957 = vmatprep.subr.mxu0 0.0
    %2958 = vmatpush2.msra.mxu0 0.0
    %2959 = vmatprep.subr.mxu0 0.0
    %2960 = vmatpush2.msra.mxu0 0.0
    %2961 = vmatprep.subr.mxu0 0.0
    %2962 = vmatpush2.msra.mxu0 0.0
    %2963 = vmatprep.subr.mxu0 0.0
    %2964 = vmatpush2.msra.mxu0 0.0
    %2965 = vmatprep.subr.mxu0 0.0
    %2966 = vmatpush2.msra.mxu0 0.0
    %2967 = vmatprep.subr.mxu0 0.0
    %2968 = vmatpush2.msra.mxu0 0.0
    %2969 = vmatprep.subr.mxu0 0.0
    %2970 = vmatpush2.msra.mxu0 0.0
    %2971 = vmatprep.subr.mxu0 0.0
    %2972 = vmatpush2.msra.mxu0 0.0
    %2973 = vmatprep.mubr.f32.mxu0 0.0
    %2974 = vmatmul.mubr.f32.gmra.mxu0 %v2908
    %v2975 = vpop.f32.mrf.mxu0
    %v2976 = vadd.f32 %v121, %v2975
    %v2977 = vpop.f32.mrf.mxu0
    %v2978 = vadd.f32 %v125, %v2977
    %2979 = vdwg.mxu0
    %2980 = vmatprep.subr.mxu0 %v107
    %2981 = vmatpush1.msra.mxu0 %v106
    %2982 = vmatprep.subr.mxu0 %v103
    %2983 = vmatpush1.msra.mxu0 %v102
    %2984 = vmatprep.subr.mxu0 %v99
    %2985 = vmatpush1.msra.mxu0 %v98
    %2986 = vmatprep.subr.mxu0 %v95
    %2987 = vmatpush1.msra.mxu0 %v94
    %2988 = vmatprep.subr.mxu0 %v91
    %2989 = vmatpush1.msra.mxu0 %v90
    %2990 = vmatprep.subr.mxu0 %v87
    %2991 = vmatpush1.msra.mxu0 %v86
    %2992 = vmatprep.subr.mxu0 %v83
    %2993 = vmatpush1.msra.mxu0 %v82
    %2994 = vmatprep.subr.mxu0 %v79
    %2995 = vmatpush1.msra.mxu0 %v78
    %2996 = vmatprep.subr.mxu0 %v75
    %2997 = vmatpush1.msra.mxu0 %v74
    %2998 = vmatprep.subr.mxu0 %v71
    %2999 = vmatpush1.msra.mxu0 %v70
    %3000 = vmatprep.subr.mxu0 %v67
    %3001 = vmatpush1.msra.mxu0 %v66
    %3002 = vmatprep.subr.mxu0 %v63
    %3003 = vmatpush1.msra.mxu0 %v62
    %3004 = vmatprep.subr.mxu0 %v59
    %3005 = vmatpush1.msra.mxu0 %v58
    %3006 = vmatprep.subr.mxu0 %v55
    %3007 = vmatpush1.msra.mxu0 %v54
    %3008 = vmatprep.subr.mxu0 %v51
    %3009 = vmatpush1.msra.mxu0 %v50
    %3010 = vmatprep.subr.mxu0 %v47
    %3011 = vmatpush1.msra.mxu0 %v46
    %3012 = vmatprep.subr.mxu0 0.0
    %3013 = vmatpush2.msra.mxu0 0.0
    %3014 = vmatprep.subr.mxu0 0.0
    %3015 = vmatpush2.msra.mxu0 0.0
    %3016 = vmatprep.subr.mxu0 0.0
    %3017 = vmatpush2.msra.mxu0 0.0
    %3018 = vmatprep.subr.mxu0 0.0
    %3019 = vmatpush2.msra.mxu0 0.0
    %3020 = vmatprep.subr.mxu0 0.0
    %3021 = vmatpush2.msra.mxu0 0.0
    %3022 = vmatprep.subr.mxu0 0.0
    %3023 = vmatpush2.msra.mxu0 0.0
    %3024 = vmatprep.subr.mxu0 0.0
    %3025 = vmatpush2.msra.mxu0 0.0
    %3026 = vmatprep.subr.mxu0 0.0
    %3027 = vmatpush2.msra.mxu0 0.0
    %3028 = vmatprep.subr.mxu0 0.0
    %3029 = vmatpush2.msra.mxu0 0.0
    %3030 = vmatprep.subr.mxu0 0.0
    %3031 = vmatpush2.msra.mxu0 0.0
    %3032 = vmatprep.subr.mxu0 0.0
    %3033 = vmatpush2.msra.mxu0 0.0
    %3034 = vmatprep.subr.mxu0 0.0
    %3035 = vmatpush2.msra.mxu0 0.0
    %3036 = vmatprep.subr.mxu0 0.0
    %3037 = vmatpush2.msra.mxu0 0.0
    %3038 = vmatprep.subr.mxu0 0.0
    %3039 = vmatpush2.msra.mxu0 0.0
    %3040 = vmatprep.subr.mxu0 0.0
    %3041 = vmatpush2.msra.mxu0 0.0
    %3042 = vmatprep.subr.mxu0 0.0
    %3043 = vmatpush2.msra.mxu0 0.0
    %3044 = vmatprep.mubr.f32.mxu0 0.0
    %3045 = vmatmul.mubr.f32.gmra.mxu0 %v2908
    %v3046 = vpop.f32.mrf.mxu0
    %v3047 = vadd.f32 %v129, %v3046
    %v3048 = vpop.f32.mrf.mxu0
    %v3049 = vadd.f32 %v133, %v3048
    %3050 = vdwg.mxu0
    %v3051 = vxor.u32 %v2976, 2147483648
    %v3052 = vmul.f32 %v3051, 1.442695
    %v3053 = vpow.pop %v3052
    %v3054 = vadd.f32 %v3053, 1.0
    %v3055 = vrcp.pop %v3054
    %v3056 = vmul.f32 1.0, %v3055
    %v3057 = vxor.u32 %v2978, 2147483648
    %v3058 = vmul.f32 %v3057, 1.442695
    %v3059 = vpow.pop %v3058
    %v3060 = vadd.f32 %v3059, 1.0
    %v3061 = vrcp.pop %v3060
    %v3062 = vmul.f32 1.0, %v3061
    %v3063 = vxor.u32 %v3047, 2147483648
    %v3064 = vmul.f32 %v3063, 1.442695
    %v3065 = vpow.pop %v3064
    %v3066 = vadd.f32 %v3065, 1.0
    %v3067 = vrcp.pop %v3066
    %v3068 = vmul.f32 1.0, %v3067
    %v3069 = vtanh.pop %v3049
    %v3070 = vmul.f32 %v3062, %v2906
    %v3071 = vmul.f32 %v3056, %v3069
    %v3072 = vadd.f32 %v3070, %v3071
    %v3073 = vtanh.pop %v3072
    %v3074 = vmul.f32 %v3068, %v3073
    %3075 = vmatprep.subr.mxu0 %v105
    %3076 = vmatpush1.msra.mxu0 %v104
    %3077 = vmatprep.subr.mxu0 %v101
    %3078 = vmatpush1.msra.mxu0 %v100
    %3079 = vmatprep.subr.mxu0 %v97
    %3080 = vmatpush1.msra.mxu0 %v96
    %3081 = vmatprep.subr.mxu0 %v93
    %3082 = vmatpush1.msra.mxu0 %v92
    %3083 = vmatprep.subr.mxu0 %v89
    %3084 = vmatpush1.msra.mxu0 %v88
    %3085 = vmatprep.subr.mxu0 %v85
    %3086 = vmatpush1.msra.mxu0 %v84
    %3087 = vmatprep.subr.mxu0 %v81
    %3088 = vmatpush1.msra.mxu0 %v80
    %3089 = vmatprep.subr.mxu0 %v77
    %3090 = vmatpush1.msra.mxu0 %v76
    %3091 = vmatprep.subr.mxu0 %v73
    %3092 = vmatpush1.msra.mxu0 %v72
    %3093 = vmatprep.subr.mxu0 %v69
    %3094 = vmatpush1.msra.mxu0 %v68
    %3095 = vmatprep.subr.mxu0 %v65
    %3096 = vmatpush1.msra.mxu0 %v64
    %3097 = vmatprep.subr.mxu0 %v61
    %3098 = vmatpush1.msra.mxu0 %v60
    %3099 = vmatprep.subr.mxu0 %v57
    %3100 = vmatpush1.msra.mxu0 %v56
    %3101 = vmatprep.subr.mxu0 %v53
    %3102 = vmatpush1.msra.mxu0 %v52
    %3103 = vmatprep.subr.mxu0 %v49
    %3104 = vmatpush1.msra.mxu0 %v48
    %3105 = vmatprep.subr.mxu0 %v45
    %3106 = vmatpush1.msra.mxu0 %v44
    %3107 = vmatprep.subr.mxu0 0.0
    %3108 = vmatpush2.msra.mxu0 0.0
    %3109 = vmatprep.subr.mxu0 0.0
    %3110 = vmatpush2.msra.mxu0 0.0
    %3111 = vmatprep.subr.mxu0 0.0
    %3112 = vmatpush2.msra.mxu0 0.0
    %3113 = vmatprep.subr.mxu0 0.0
    %3114 = vmatpush2.msra.mxu0 0.0
    %3115 = vmatprep.subr.mxu0 0.0
    %3116 = vmatpush2.msra.mxu0 0.0
    %3117 = vmatprep.subr.mxu0 0.0
    %3118 = vmatpush2.msra.mxu0 0.0
    %3119 = vmatprep.subr.mxu0 0.0
    %3120 = vmatpush2.msra.mxu0 0.0
    %3121 = vmatprep.subr.mxu0 0.0
    %3122 = vmatpush2.msra.mxu0 0.0
    %3123 = vmatprep.subr.mxu0 0.0
    %3124 = vmatpush2.msra.mxu0 0.0
    %3125 = vmatprep.subr.mxu0 0.0
    %3126 = vmatpush2.msra.mxu0 0.0
    %3127 = vmatprep.subr.mxu0 0.0
    %3128 = vmatpush2.msra.mxu0 0.0
    %3129 = vmatprep.subr.mxu0 0.0
    %3130 = vmatpush2.msra.mxu0 0.0
    %3131 = vmatprep.subr.mxu0 0.0
    %3132 = vmatpush2.msra.mxu0 0.0
    %3133 = vmatprep.subr.mxu0 0.0
    %3134 = vmatpush2.msra.mxu0 0.0
    %3135 = vmatprep.subr.mxu0 0.0
    %3136 = vmatpush2.msra.mxu0 0.0
    %3137 = vmatprep.subr.mxu0 0.0
    %3138 = vmatpush2.msra.mxu0 0.0
    %3139 = vmatprep.mubr.f32.mxu0 0.0
    %3140 = vmatmul.mubr.f32.gmra.mxu0 %v3074
    %v3141 = vpop.f32.mrf.mxu0
    %v3142 = vadd.f32 %v121, %v3141
    %v3143 = vpop.f32.mrf.mxu0
    %v3144 = vadd.f32 %v125, %v3143
    %3145 = vdwg.mxu0
    %3146 = vmatprep.subr.mxu0 %v107
    %3147 = vmatpush1.msra.mxu0 %v106
    %3148 = vmatprep.subr.mxu0 %v103
    %3149 = vmatpush1.msra.mxu0 %v102
    %3150 = vmatprep.subr.mxu0 %v99
    %3151 = vmatpush1.msra.mxu0 %v98
    %3152 = vmatprep.subr.mxu0 %v95
    %3153 = vmatpush1.msra.mxu0 %v94
    %3154 = vmatprep.subr.mxu0 %v91
    %3155 = vmatpush1.msra.mxu0 %v90
    %3156 = vmatprep.subr.mxu0 %v87
    %3157 = vmatpush1.msra.mxu0 %v86
    %3158 = vmatprep.subr.mxu0 %v83
    %3159 = vmatpush1.msra.mxu0 %v82
    %3160 = vmatprep.subr.mxu0 %v79
    %3161 = vmatpush1.msra.mxu0 %v78
    %3162 = vmatprep.subr.mxu0 %v75
    %3163 = vmatpush1.msra.mxu0 %v74
    %3164 = vmatprep.subr.mxu0 %v71
    %3165 = vmatpush1.msra.mxu0 %v70
    %3166 = vmatprep.subr.mxu0 %v67
    %3167 = vmatpush1.msra.mxu0 %v66
    %3168 = vmatprep.subr.mxu0 %v63
    %3169 = vmatpush1.msra.mxu0 %v62
    %3170 = vmatprep.subr.mxu0 %v59
    %3171 = vmatpush1.msra.mxu0 %v58
    %3172 = vmatprep.subr.mxu0 %v55
    %3173 = vmatpush1.msra.mxu0 %v54
    %3174 = vmatprep.subr.mxu0 %v51
    %3175 = vmatpush1.msra.mxu0 %v50
    %3176 = vmatprep.subr.mxu0 %v47
    %3177 = vmatpush1.msra.mxu0 %v46
    %3178 = vmatprep.subr.mxu0 0.0
    %3179 = vmatpush2.msra.mxu0 0.0
    %3180 = vmatprep.subr.mxu0 0.0
    %3181 = vmatpush2.msra.mxu0 0.0
    %3182 = vmatprep.subr.mxu0 0.0
    %3183 = vmatpush2.msra.mxu0 0.0
    %3184 = vmatprep.subr.mxu0 0.0
    %3185 = vmatpush2.msra.mxu0 0.0
    %3186 = vmatprep.subr.mxu0 0.0
    %3187 = vmatpush2.msra.mxu0 0.0
    %3188 = vmatprep.subr.mxu0 0.0
    %3189 = vmatpush2.msra.mxu0 0.0
    %3190 = vmatprep.subr.mxu0 0.0
    %3191 = vmatpush2.msra.mxu0 0.0
    %3192 = vmatprep.subr.mxu0 0.0
    %3193 = vmatpush2.msra.mxu0 0.0
    %3194 = vmatprep.subr.mxu0 0.0
    %3195 = vmatpush2.msra.mxu0 0.0
    %3196 = vmatprep.subr.mxu0 0.0
    %3197 = vmatpush2.msra.mxu0 0.0
    %3198 = vmatprep.subr.mxu0 0.0
    %3199 = vmatpush2.msra.mxu0 0.0
    %3200 = vmatprep.subr.mxu0 0.0
    %3201 = vmatpush2.msra.mxu0 0.0
    %3202 = vmatprep.subr.mxu0 0.0
    %3203 = vmatpush2.msra.mxu0 0.0
    %3204 = vmatprep.subr.mxu0 0.0
    %3205 = vmatpush2.msra.mxu0 0.0
    %3206 = vmatprep.subr.mxu0 0.0
    %3207 = vmatpush2.msra.mxu0 0.0
    %3208 = vmatprep.subr.mxu0 0.0
    %3209 = vmatpush2.msra.mxu0 0.0
    %3210 = vmatprep.mubr.f32.mxu0 0.0
    %3211 = vmatmul.mubr.f32.gmra.mxu0 %v3074
    %v3212 = vpop.f32.mrf.mxu0
    %v3213 = vadd.f32 %v129, %v3212
    %v3214 = vpop.f32.mrf.mxu0
    %v3215 = vadd.f32 %v133, %v3214
    %3216 = vdwg.mxu0
    %v3217 = vxor.u32 %v3142, 2147483648
    %v3218 = vmul.f32 %v3217, 1.442695
    %v3219 = vpow.pop %v3218
    %v3220 = vadd.f32 %v3219, 1.0
    %v3221 = vrcp.pop %v3220
    %v3222 = vmul.f32 1.0, %v3221
    %v3223 = vxor.u32 %v3144, 2147483648
    %v3224 = vmul.f32 %v3223, 1.442695
    %v3225 = vpow.pop %v3224
    %v3226 = vadd.f32 %v3225, 1.0
    %v3227 = vrcp.pop %v3226
    %v3228 = vmul.f32 1.0, %v3227
    %v3229 = vxor.u32 %v3213, 2147483648
    %v3230 = vmul.f32 %v3229, 1.442695
    %v3231 = vpow.pop %v3230
    %v3232 = vadd.f32 %v3231, 1.0
    %v3233 = vrcp.pop %v3232
    %v3234 = vmul.f32 1.0, %v3233
    %v3235 = vtanh.pop %v3215
    %v3236 = vmul.f32 %v3228, %v3072
    %v3237 = vmul.f32 %v3222, %v3235
    %v3238 = vadd.f32 %v3236, %v3237
    %v3239 = vtanh.pop %v3238
    %v3240 = vmul.f32 %v3234, %v3239
    %3241 = vmatprep.subr.mxu0 %v105
    %3242 = vmatpush1.msra.mxu0 %v104
    %3243 = vmatprep.subr.mxu0 %v101
    %3244 = vmatpush1.msra.mxu0 %v100
    %3245 = vmatprep.subr.mxu0 %v97
    %3246 = vmatpush1.msra.mxu0 %v96
    %3247 = vmatprep.subr.mxu0 %v93
    %3248 = vmatpush1.msra.mxu0 %v92
    %3249 = vmatprep.subr.mxu0 %v89
    %3250 = vmatpush1.msra.mxu0 %v88
    %3251 = vmatprep.subr.mxu0 %v85
    %3252 = vmatpush1.msra.mxu0 %v84
    %3253 = vmatprep.subr.mxu0 %v81
    %3254 = vmatpush1.msra.mxu0 %v80
    %3255 = vmatprep.subr.mxu0 %v77
    %3256 = vmatpush1.msra.mxu0 %v76
    %3257 = vmatprep.subr.mxu0 %v73
    %3258 = vmatpush1.msra.mxu0 %v72
    %3259 = vmatprep.subr.mxu0 %v69
    %3260 = vmatpush1.msra.mxu0 %v68
    %3261 = vmatprep.subr.mxu0 %v65
    %3262 = vmatpush1.msra.mxu0 %v64
    %3263 = vmatprep.subr.mxu0 %v61
    %3264 = vmatpush1.msra.mxu0 %v60
    %3265 = vmatprep.subr.mxu0 %v57
    %3266 = vmatpush1.msra.mxu0 %v56
    %3267 = vmatprep.subr.mxu0 %v53
    %3268 = vmatpush1.msra.mxu0 %v52
    %3269 = vmatprep.subr.mxu0 %v49
    %3270 = vmatpush1.msra.mxu0 %v48
    %3271 = vmatprep.subr.mxu0 %v45
    %3272 = vmatpush1.msra.mxu0 %v44
    %3273 = vmatprep.subr.mxu0 0.0
    %3274 = vmatpush2.msra.mxu0 0.0
    %3275 = vmatprep.subr.mxu0 0.0
    %3276 = vmatpush2.msra.mxu0 0.0
    %3277 = vmatprep.subr.mxu0 0.0
    %3278 = vmatpush2.msra.mxu0 0.0
    %3279 = vmatprep.subr.mxu0 0.0
    %3280 = vmatpush2.msra.mxu0 0.0
    %3281 = vmatprep.subr.mxu0 0.0
    %3282 = vmatpush2.msra.mxu0 0.0
    %3283 = vmatprep.subr.mxu0 0.0
    %3284 = vmatpush2.msra.mxu0 0.0
    %3285 = vmatprep.subr.mxu0 0.0
    %3286 = vmatpush2.msra.mxu0 0.0
    %3287 = vmatprep.subr.mxu0 0.0
    %3288 = vmatpush2.msra.mxu0 0.0
    %3289 = vmatprep.subr.mxu0 0.0
    %3290 = vmatpush2.msra.mxu0 0.0
    %3291 = vmatprep.subr.mxu0 0.0
    %3292 = vmatpush2.msra.mxu0 0.0
    %3293 = vmatprep.subr.mxu0 0.0
    %3294 = vmatpush2.msra.mxu0 0.0
    %3295 = vmatprep.subr.mxu0 0.0
    %3296 = vmatpush2.msra.mxu0 0.0
    %3297 = vmatprep.subr.mxu0 0.0
    %3298 = vmatpush2.msra.mxu0 0.0
    %3299 = vmatprep.subr.mxu0 0.0
    %3300 = vmatpush2.msra.mxu0 0.0
    %3301 = vmatprep.subr.mxu0 0.0
    %3302 = vmatpush2.msra.mxu0 0.0
    %3303 = vmatprep.subr.mxu0 0.0
    %3304 = vmatpush2.msra.mxu0 0.0
    %3305 = vmatprep.mubr.f32.mxu0 0.0
    %3306 = vmatmul.mubr.f32.gmra.mxu0 %v3240
    %v3307 = vpop.f32.mrf.mxu0
    %v3308 = vadd.f32 %v121, %v3307
    %v3309 = vpop.f32.mrf.mxu0
    %v3310 = vadd.f32 %v125, %v3309
    %3311 = vdwg.mxu0
    %3312 = vmatprep.subr.mxu0 %v107
    %3313 = vmatpush1.msra.mxu0 %v106
    %3314 = vmatprep.subr.mxu0 %v103
    %3315 = vmatpush1.msra.mxu0 %v102
    %3316 = vmatprep.subr.mxu0 %v99
    %3317 = vmatpush1.msra.mxu0 %v98
    %3318 = vmatprep.subr.mxu0 %v95
    %3319 = vmatpush1.msra.mxu0 %v94
    %3320 = vmatprep.subr.mxu0 %v91
    %3321 = vmatpush1.msra.mxu0 %v90
    %3322 = vmatprep.subr.mxu0 %v87
    %3323 = vmatpush1.msra.mxu0 %v86
    %3324 = vmatprep.subr.mxu0 %v83
    %3325 = vmatpush1.msra.mxu0 %v82
    %3326 = vmatprep.subr.mxu0 %v79
    %3327 = vmatpush1.msra.mxu0 %v78
    %3328 = vmatprep.subr.mxu0 %v75
    %3329 = vmatpush1.msra.mxu0 %v74
    %3330 = vmatprep.subr.mxu0 %v71
    %3331 = vmatpush1.msra.mxu0 %v70
    %3332 = vmatprep.subr.mxu0 %v67
    %3333 = vmatpush1.msra.mxu0 %v66
    %3334 = vmatprep.subr.mxu0 %v63
    %3335 = vmatpush1.msra.mxu0 %v62
    %3336 = vmatprep.subr.mxu0 %v59
    %3337 = vmatpush1.msra.mxu0 %v58
    %3338 = vmatprep.subr.mxu0 %v55
    %3339 = vmatpush1.msra.mxu0 %v54
    %3340 = vmatprep.subr.mxu0 %v51
    %3341 = vmatpush1.msra.mxu0 %v50
    %3342 = vmatprep.subr.mxu0 %v47
    %3343 = vmatpush1.msra.mxu0 %v46
    %3344 = vmatprep.subr.mxu0 0.0
    %3345 = vmatpush2.msra.mxu0 0.0
    %3346 = vmatprep.subr.mxu0 0.0
    %3347 = vmatpush2.msra.mxu0 0.0
    %3348 = vmatprep.subr.mxu0 0.0
    %3349 = vmatpush2.msra.mxu0 0.0
    %3350 = vmatprep.subr.mxu0 0.0
    %3351 = vmatpush2.msra.mxu0 0.0
    %3352 = vmatprep.subr.mxu0 0.0
    %3353 = vmatpush2.msra.mxu0 0.0
    %3354 = vmatprep.subr.mxu0 0.0
    %3355 = vmatpush2.msra.mxu0 0.0
    %3356 = vmatprep.subr.mxu0 0.0
    %3357 = vmatpush2.msra.mxu0 0.0
    %3358 = vmatprep.subr.mxu0 0.0
    %3359 = vmatpush2.msra.mxu0 0.0
    %3360 = vmatprep.subr.mxu0 0.0
    %3361 = vmatpush2.msra.mxu0 0.0
    %3362 = vmatprep.subr.mxu0 0.0
    %3363 = vmatpush2.msra.mxu0 0.0
    %3364 = vmatprep.subr.mxu0 0.0
    %3365 = vmatpush2.msra.mxu0 0.0
    %3366 = vmatprep.subr.mxu0 0.0
    %3367 = vmatpush2.msra.mxu0 0.0
    %3368 = vmatprep.subr.mxu0 0.0
    %3369 = vmatpush2.msra.mxu0 0.0
    %3370 = vmatprep.subr.mxu0 0.0
    %3371 = vmatpush2.msra.mxu0 0.0
    %3372 = vmatprep.subr.mxu0 0.0
    %3373 = vmatpush2.msra.mxu0 0.0
    %3374 = vmatprep.subr.mxu0 0.0
    %3375 = vmatpush2.msra.mxu0 0.0
    %3376 = vmatprep.mubr.f32.mxu0 0.0
    %3377 = vmatmul.mubr.f32.gmra.mxu0 %v3240
    %v3378 = vpop.f32.mrf.mxu0
    %v3379 = vadd.f32 %v129, %v3378
    %v3380 = vpop.f32.mrf.mxu0
    %v3381 = vadd.f32 %v133, %v3380
    %3382 = vdwg.mxu0
    %v3383 = vxor.u32 %v3308, 2147483648
    %v3384 = vmul.f32 %v3383, 1.442695
    %v3385 = vpow.pop %v3384
    %v3386 = vadd.f32 %v3385, 1.0
    %v3387 = vrcp.pop %v3386
    %v3388 = vmul.f32 1.0, %v3387
    %v3389 = vxor.u32 %v3310, 2147483648
    %v3390 = vmul.f32 %v3389, 1.442695
    %v3391 = vpow.pop %v3390
    %v3392 = vadd.f32 %v3391, 1.0
    %v3393 = vrcp.pop %v3392
    %v3394 = vmul.f32 1.0, %v3393
    %v3395 = vxor.u32 %v3379, 2147483648
    %v3396 = vmul.f32 %v3395, 1.442695
    %v3397 = vpow.pop %v3396
    %v3398 = vadd.f32 %v3397, 1.0
    %v3399 = vrcp.pop %v3398
    %v3400 = vmul.f32 1.0, %v3399
    %v3401 = vtanh.pop %v3381
    %v3402 = vmul.f32 %v3394, %v3238
    %v3403 = vmul.f32 %v3388, %v3401
    %v3404 = vadd.f32 %v3402, %v3403
    %v3405 = vtanh.pop %v3404
    %v3406 = vmul.f32 %v3400, %v3405
    %v3407 = vld [vmem:[%s4] sm:$0x1]
    %v3409 = vlaneseq
    %v3410 = vshrl.u32 %v3409, 7
    %v3411 = vsub.s32 0, %v3410
    %v3412 = vrot.slane %v3407, %v3411
    %v3414 = vmul.f32 %v3406, %v3412
    %v3415 = vld [vmem:[%s5] sm:$0x1]
    %v3417 = vlaneseq
    %v3418 = vshrl.u32 %v3417, 7
    %v3419 = vsub.s32 0, %v3418
    %v3420 = vrot.slane %v3415, %v3419
    %v3422 = vadd.f32 %v3414, %v3420
    %v3423 = vmax.f32 %v3422, 0.0
    %v3424 = vld [vmem:[%s6] sm:$0xff]
    %v3425 = vld [vmem:[%s6 + $0x8] sm:$0xff]
    %v3426 = vld [vmem:[%s6 + $0x10] sm:$0xff]
    %v3427 = vld [vmem:[%s6 + $0x18] sm:$0xff]
    %v3428 = vld [vmem:[%s6 + $0x20] sm:$0xff]
    %v3429 = vld [vmem:[%s6 + $0x28] sm:$0xff]
    %v3430 = vld [vmem:[%s6 + $0x30] sm:$0xff]
    %v3431 = vld [vmem:[%s6 + $0x38] sm:$0xff]
    %v3432 = vld [vmem:[%s6 + $0x40] sm:$0xff]
    %v3433 = vld [vmem:[%s6 + $0x48] sm:$0xff]
    %v3434 = vld [vmem:[%s6 + $0x50] sm:$0xff]
    %v3435 = vld [vmem:[%s6 + $0x58] sm:$0xff]
    %v3436 = vld [vmem:[%s6 + $0x60] sm:$0xff]
    %v3437 = vld [vmem:[%s6 + $0x68] sm:$0xff]
    %v3438 = vld [vmem:[%s6 + $0x70] sm:$0xff]
    %v3439 = vld [vmem:[%s6 + $0x78] sm:$0xff]
    %v3440 = vld [vmem:[%s7] sm:$0x1]
    %v3442 = vlaneseq
    %v3443 = vshrl.u32 %v3442, 7
    %v3444 = vsub.s32 0, %v3443
    %v3445 = vrot.slane %v3440, %v3444
    %3447 = vmatprep.subr.mxu0 0.0
    %3448 = vmatpush1.msra.mxu0 %v3439
    %3449 = vmatprep.subr.mxu0 0.0
    %3450 = vmatpush1.msra.mxu0 %v3438
    %3451 = vmatprep.subr.mxu0 0.0
    %3452 = vmatpush1.msra.mxu0 %v3437
    %3453 = vmatprep.subr.mxu0 0.0
    %3454 = vmatpush1.msra.mxu0 %v3436
    %3455 = vmatprep.subr.mxu0 0.0
    %3456 = vmatpush1.msra.mxu0 %v3435
    %3457 = vmatprep.subr.mxu0 0.0
    %3458 = vmatpush1.msra.mxu0 %v3434
    %3459 = vmatprep.subr.mxu0 0.0
    %3460 = vmatpush1.msra.mxu0 %v3433
    %3461 = vmatprep.subr.mxu0 0.0
    %3462 = vmatpush1.msra.mxu0 %v3432
    %3463 = vmatprep.subr.mxu0 0.0
    %3464 = vmatpush1.msra.mxu0 %v3431
    %3465 = vmatprep.subr.mxu0 0.0
    %3466 = vmatpush1.msra.mxu0 %v3430
    %3467 = vmatprep.subr.mxu0 0.0
    %3468 = vmatpush1.msra.mxu0 %v3429
    %3469 = vmatprep.subr.mxu0 0.0
    %3470 = vmatpush1.msra.mxu0 %v3428
    %3471 = vmatprep.subr.mxu0 0.0
    %3472 = vmatpush1.msra.mxu0 %v3427
    %3473 = vmatprep.subr.mxu0 0.0
    %3474 = vmatpush1.msra.mxu0 %v3426
    %3475 = vmatprep.subr.mxu0 0.0
    %3476 = vmatpush1.msra.mxu0 %v3425
    %3477 = vmatprep.subr.mxu0 0.0
    %3478 = vmatpush1.msra.mxu0 %v3424
    %3479 = vmatprep.subr.mxu0 0.0
    %3480 = vmatpush2.msra.mxu0 0.0
    %3481 = vmatprep.subr.mxu0 0.0
    %3482 = vmatpush2.msra.mxu0 0.0
    %3483 = vmatprep.subr.mxu0 0.0
    %3484 = vmatpush2.msra.mxu0 0.0
    %3485 = vmatprep.subr.mxu0 0.0
    %3486 = vmatpush2.msra.mxu0 0.0
    %3487 = vmatprep.subr.mxu0 0.0
    %3488 = vmatpush2.msra.mxu0 0.0
    %3489 = vmatprep.subr.mxu0 0.0
    %3490 = vmatpush2.msra.mxu0 0.0
    %3491 = vmatprep.subr.mxu0 0.0
    %3492 = vmatpush2.msra.mxu0 0.0
    %3493 = vmatprep.subr.mxu0 0.0
    %3494 = vmatpush2.msra.mxu0 0.0
    %3495 = vmatprep.subr.mxu0 0.0
    %3496 = vmatpush2.msra.mxu0 0.0
    %3497 = vmatprep.subr.mxu0 0.0
    %3498 = vmatpush2.msra.mxu0 0.0
    %3499 = vmatprep.subr.mxu0 0.0
    %3500 = vmatpush2.msra.mxu0 0.0
    %3501 = vmatprep.subr.mxu0 0.0
    %3502 = vmatpush2.msra.mxu0 0.0
    %3503 = vmatprep.subr.mxu0 0.0
    %3504 = vmatpush2.msra.mxu0 0.0
    %3505 = vmatprep.subr.mxu0 0.0
    %3506 = vmatpush2.msra.mxu0 0.0
    %3507 = vmatprep.subr.mxu0 0.0
    %3508 = vmatpush2.msra.mxu0 0.0
    %3509 = vmatprep.subr.mxu0 0.0
    %3510 = vmatpush2.msra.mxu0 0.0
    %3511 = vmatprep.mubr.f32.mxu0 0.0
    %3512 = vmatmul.mubr.f32.gmra.mxu0 %v3423
    %v3513 = vpop.f32.mrf.mxu0
    %v3514 = vadd.f32 %v3445, %v3513
    %v3515 = vpop.f32.mrf.mxu0
    %3516 = vdwg.mxu0
    %vm3517 = vcmask 64512
    %3518 = vst.msk [vmem:[#allocation5] sm:$0xff] %vm3517, %v3514
    // Predicated region
    $region38: #{tpu_custom_call.1} parent=1 // pred_check
      _
    $region39: #{tpu_custom_call.1} parent=1 // pred_check_branch
      %3520 = sbr.rel (0) target = $region41
    $region40: #{tpu_custom_call.1} parent=1 // pred_region
      %s3522 = ssub.s32 128, 128
      %3523 = vsyncadd [#allocation4], %s3522
      %s3525 = sshll.u32 [#allocation5], 4
      %s3526 = int_to_ptr.vmem [resolvable:$true] %s3525
      %3528 = dma.vmem_to_hbm [thread:$0]  %s3526, 128, %s8, [#allocation4]
    $region41: #{tpu_custom_call.1} parent=1 // pred_fallthru
      _
    // Predicated region
    $region42: #{tpu_custom_call.1} parent=1 // pred_check
      _
    $region43: #{tpu_custom_call.1} parent=1 // pred_check_branch
      %3530 = sbr.rel (0) target = $region45
    $region44: #{tpu_custom_call.1} parent=1 // pred_region
      %3531 = dma.done [#allocation4], 128
    $region45: #{tpu_custom_call.1} parent=1 // pred_fallthru
      _
    %3532 = vsyncpa [#allocation3], 1
    %3533 = vsyncpa [#allocation4], 1

</llo_original>
